<compile_context>
chip_gen: v7x
topology: tpu7x:2x2x1
jax: 0.10.0
libtpu: 0.0.40
codegen_flags: <defaults>
</compile_context>

<pallas_src>
import functools
import math

import jax
import jax.numpy as jnp
from jax.experimental import pallas as pl
from jax.experimental.pallas import tpu as pltpu


# ---------------------------------------------------------------------------
# Fused kernel: per-batch Q/K/V projection + causal softmax attention
# ---------------------------------------------------------------------------
def head_kernel(x_ref, wq_ref, wk_ref, wv_ref, o_ref, *, scale):
    # x_ref: (T, C)   wq/wk/wv_ref: (C, H)   o_ref: (T, H)
    x = x_ref[...]

    # Projections stay entirely in VMEM/vregs — no HBM intermediates.
    q = jnp.dot(x, wq_ref[...], preferred_element_type=jnp.float32) * scale
    k = jnp.dot(x, wk_ref[...], preferred_element_type=jnp.float32)
    v = jnp.dot(x, wv_ref[...], preferred_element_type=jnp.float32)

    # Scores: q @ k^T via dot_general contracting the feature axis
    # (no explicit transpose copy of k).
    s = jax.lax.dot_general(
        q, k, (((1,), (1,)), ((), ())), preferred_element_type=jnp.float32
    )  # (T, T)

    T = s.shape[0]
    row = jax.lax.broadcasted_iota(jnp.int32, (T, T), 0)
    col = jax.lax.broadcasted_iota(jnp.int32, (T, T), 1)
    s = jnp.where(col <= row, s, -jnp.inf)

    # Softmax: every row has its diagonal unmasked, so the row max is finite
    # and exp(-inf - m) underflows cleanly to 0.
    m = jnp.max(s, axis=-1, keepdims=True)
    p = jnp.exp(s - m)
    l = jnp.sum(p, axis=-1, keepdims=True)

    o = jnp.dot(p, v, preferred_element_type=jnp.float32)  # (T, H)

    inv_l = pl.reciprocal(l, approx=True)   # EUP slot (nearly free)
    inv_l = inv_l * (2.0 - l * inv_l)       # one Newton step on (T,1): f32-accurate
    o_ref[...] = (o * inv_l).astype(o_ref.dtype)


# ---------------------------------------------------------------------------
# Wrapper
# ---------------------------------------------------------------------------
def head_forward(x, wk, wq, wv):
    """Single-head causal self-attention (eval mode).

    x: (B, T, C); wk/wq/wv: (C, H) — the transpose of nn.Linear(C, H).weight.
    Returns (B, T, H).
    """
    B, T, C = x.shape
    H = wk.shape[1]
    assert T % 8 == 0 and C % 128 == 0, "T must be a multiple of 8, C of 128"

    scale = float(H) ** -0.5
    kernel = functools.partial(head_kernel, scale=scale)

    return pl.pallas_call(
        kernel,
        out_shape=jax.ShapeDtypeStruct((B, T, H), x.dtype),
        grid=(B,),
        in_specs=[
            # One batch row of x per grid step.
            pl.BlockSpec((pl.Squeezed(), T, C), lambda b: (b, 0, 0)),
            # Weights: same block every step -> DMA'd once, stays VMEM-resident.
            pl.BlockSpec((C, H), lambda b: (0, 0)),
            pl.BlockSpec((C, H), lambda b: (0, 0)),
            pl.BlockSpec((C, H), lambda b: (0, 0)),
        ],
        out_specs=pl.BlockSpec((pl.Squeezed(), T, H), lambda b: (b, 0, 0)),
        compiler_params=pltpu.CompilerParams(
            dimension_semantics=("parallel",),
        ),
    )(x, wq, wk, wv)


def head_reference(x, wk, wq, wv):
    """Pure-JAX reference matching the PyTorch forward (eval mode)."""
    k = x @ wk
    q = x @ wq
    v = x @ wv
    H = k.shape[-1]
    wei = (q @ jnp.swapaxes(k, -2, -1)) * (H ** -0.5)
    T = x.shape[1]
    mask = jnp.tril(jnp.ones((T, T), dtype=bool))
    wei = jnp.where(mask[None, :, :], wei, -jnp.inf)
    wei = jax.nn.softmax(wei, axis=-1)
    return wei @ v


if __name__ == "__main__":
    # Module-consistent shapes: n_embd=384, block_size=256, head_size=384//6=64.
    B, T, C, H = 2, 256, 384, 64

    key = jax.random.PRNGKey(0)
    kx, kk, kq, kv = jax.random.split(key, 4)

    x = jax.random.normal(kx, (B, T, C), dtype=jnp.float32)
    # nn.Linear(C, H, bias=False) default init is U(-1/sqrt(C), 1/sqrt(C));
    # stored here already transposed to (C, H).
    bound = 1.0 / math.sqrt(C)
    wk = jax.random.uniform(kk, (C, H), jnp.float32, -bound, bound)
    wq = jax.random.uniform(kq, (C, H), jnp.float32, -bound, bound)
    wv = jax.random.uniform(kv, (C, H), jnp.float32, -bound, bound)

    out = head_forward(x, wk, wq, wv)
    out = jax.block_until_ready(out)

    ref = head_reference(x, wk, wq, wv)
    assert out.shape == (B, T, H)
    max_err = float(jnp.max(jnp.abs(out - ref)))
    assert jnp.allclose(out, ref, atol=1e-3, rtol=1e-3), (
        f"mismatch vs reference (max abs err={max_err})"
    )

    print("KERNEL_OK")
</pallas_src>

<mosaic_0001>
module attributes {stable_mosaic.version = 11 : i64} {
  func.func @head_kernel(%arg0: i32, %arg1: memref<1x256x384xf32, #tpu.memory_space<vmem>>, %arg2: memref<384x64xf32, #tpu.memory_space<vmem>>, %arg3: memref<384x64xf32, #tpu.memory_space<vmem>>, %arg4: memref<384x64xf32, #tpu.memory_space<vmem>>, %arg5: memref<1x256x64xf32, #tpu.memory_space<vmem>>) attributes {dimension_semantics = [#tpu.dimension_semantics<parallel>], iteration_bounds = array<i64: 2>, scalar_prefetch = 0 : i64, scratch_operands = 0 : i64, tpu.core_type = #tpu.core_type<tc>, window_params = [{transform_indices = @transform_0, window_bounds = array<i64: 1, 256, 384>}, {pipeline_mode = #tpu.pipeline_mode<synchronous>, transform_indices = @transform_1, window_bounds = array<i64: 384, 64>}, {pipeline_mode = #tpu.pipeline_mode<synchronous>, transform_indices = @transform_2, window_bounds = array<i64: 384, 64>}, {pipeline_mode = #tpu.pipeline_mode<synchronous>, transform_indices = @transform_3, window_bounds = array<i64: 384, 64>}, {transform_indices = @transform_4, window_bounds = array<i64: 1, 256, 64>}]} {
    %c0 = arith.constant 0 : index
    %c0_0 = arith.constant 0 : index
    %c0_1 = arith.constant 0 : index
    %0 = vector.load %arg1[%c0, %c0_0, %c0_1] : memref<1x256x384xf32, #tpu.memory_space<vmem>>, vector<1x256x384xf32>
    %1 = vector.shape_cast %0 : vector<1x256x384xf32> to vector<256x384xf32>
    %c0_2 = arith.constant 0 : index
    %c0_3 = arith.constant 0 : index
    %2 = vector.load %arg2[%c0_2, %c0_3] : memref<384x64xf32, #tpu.memory_space<vmem>>, vector<384x64xf32>
    %cst = arith.constant dense<0.000000e+00> : vector<256x64xf32>
    %3 = tpu.matmul %1, %2, %cst {dimension_numbers = #tpu.dot_dimension_numbers<[1], [0], [0], [1], [0, 0, 1, 1], [], []>} : vector<256x384xf32>, vector<384x64xf32>, vector<256x64xf32> -> vector<256x64xf32>
    %cst_4 = arith.constant 1.250000e-01 : f32
    %4 = vector.broadcast %cst_4 : f32 to vector<256x64xf32>
    %5 = arith.mulf %3, %4 : vector<256x64xf32>
    %c0_5 = arith.constant 0 : index
    %c0_6 = arith.constant 0 : index
    %6 = vector.load %arg3[%c0_5, %c0_6] : memref<384x64xf32, #tpu.memory_space<vmem>>, vector<384x64xf32>
    %cst_7 = arith.constant dense<0.000000e+00> : vector<256x64xf32>
    %7 = tpu.matmul %1, %6, %cst_7 {dimension_numbers = #tpu.dot_dimension_numbers<[1], [0], [0], [1], [0, 0, 1, 1], [], []>} : vector<256x384xf32>, vector<384x64xf32>, vector<256x64xf32> -> vector<256x64xf32>
    %c0_8 = arith.constant 0 : index
    %c0_9 = arith.constant 0 : index
    %8 = vector.load %arg4[%c0_8, %c0_9] : memref<384x64xf32, #tpu.memory_space<vmem>>, vector<384x64xf32>
    %cst_10 = arith.constant dense<0.000000e+00> : vector<256x64xf32>
    %9 = tpu.matmul %1, %8, %cst_10 {dimension_numbers = #tpu.dot_dimension_numbers<[1], [0], [0], [1], [0, 0, 1, 1], [], []>} : vector<256x384xf32>, vector<384x64xf32>, vector<256x64xf32> -> vector<256x64xf32>
    %cst_11 = arith.constant dense<0.000000e+00> : vector<256x256xf32>
    %10 = tpu.matmul %5, %7, %cst_11 {dimension_numbers = #tpu.dot_dimension_numbers<[1], [1], [0], [0], [0, 0, 1, 0], [], []>} : vector<256x64xf32>, vector<256x64xf32>, vector<256x256xf32> -> vector<256x256xf32>
    %11 = tpu.iota {dimensions = array<i32: 0>} : vector<256x256xi32>
    %12 = tpu.iota {dimensions = array<i32: 1>} : vector<256x256xi32>
    %13 = arith.cmpi sle, %12, %11 : vector<256x256xi32>
    %cst_12 = arith.constant 0xFF800000 : f32
    %14 = vector.broadcast %cst_12 : f32 to vector<256x256xf32>
    %15 = arith.select %13, %10, %14 : vector<256x256xi1>, vector<256x256xf32>
    %cst_13 = arith.constant dense<0xFF800000> : vector<256xf32>
    %16 = vector.multi_reduction <maximumf>, %15, %cst_13 [1] : vector<256x256xf32> to vector<256xf32>
    %17 = vector.shape_cast %16 : vector<256xf32> to vector<256x1xf32>
    %18 = vector.broadcast %17 : vector<256x1xf32> to vector<256x256xf32>
    %19 = arith.subf %15, %18 : vector<256x256xf32>
    %20 = math.exp %19 : vector<256x256xf32>
    %cst_14 = arith.constant dense<0.000000e+00> : vector<256xf32>
    %21 = vector.multi_reduction <add>, %20, %cst_14 [1] : vector<256x256xf32> to vector<256xf32>
    %22 = vector.shape_cast %21 : vector<256xf32> to vector<256x1xf32>
    %cst_15 = arith.constant dense<0.000000e+00> : vector<256x64xf32>
    %23 = tpu.matmul %20, %9, %cst_15 {dimension_numbers = #tpu.dot_dimension_numbers<[1], [0], [0], [1], [0, 0, 1, 1], [], []>} : vector<256x256xf32>, vector<256x64xf32>, vector<256x64xf32> -> vector<256x64xf32>
    %24 = tpu.reciprocal %22 {approx = true} : vector<256x1xf32> -> vector<256x1xf32>
    %25 = arith.mulf %22, %24 : vector<256x1xf32>
    %cst_16 = arith.constant 2.000000e+00 : f32
    %26 = vector.broadcast %cst_16 : f32 to vector<256x1xf32>
    %27 = arith.subf %26, %25 : vector<256x1xf32>
    %28 = arith.mulf %24, %27 : vector<256x1xf32>
    %29 = vector.broadcast %28 : vector<256x1xf32> to vector<256x64xf32>
    %30 = arith.mulf %23, %29 : vector<256x64xf32>
    %c0_17 = arith.constant 0 : index
    %c0_18 = arith.constant 0 : index
    %c0_19 = arith.constant 0 : index
    %31 = vector.load %arg5[%c0_17, %c0_18, %c0_19] : memref<1x256x64xf32, #tpu.memory_space<vmem>>, vector<1x256x64xf32>
    %32 = vector.shape_cast %31 : vector<1x256x64xf32> to vector<256x64xf32>
    %33 = vector.shape_cast %30 : vector<256x64xf32> to vector<1x256x64xf32>
    tpu.vector_store %arg5[%c0_17, %c0_18, %c0_19], %33 {strides = array<i32>} : memref<1x256x64xf32, #tpu.memory_space<vmem>>, vector<1x256x64xf32>,
    return
  }
  func.func @transform_0(%arg0: i32) -> (i32, i32, i32) {
    %c0_i32 = arith.constant 0 : i32
    %c0_i32_0 = arith.constant 0 : i32
    %c0_i32_1 = arith.constant 0 : i32
    return %arg0, %c0_i32, %c0_i32_0 : i32, i32, i32
  }
  func.func @transform_1(%arg0: i32) -> (i32, i32) {
    %c0_i32 = arith.constant 0 : i32
    %c0_i32_0 = arith.constant 0 : i32
    %c0_i32_1 = arith.constant 0 : i32
    return %c0_i32, %c0_i32_0 : i32, i32
  }
  func.func @transform_2(%arg0: i32) -> (i32, i32) {
    %c0_i32 = arith.constant 0 : i32
    %c0_i32_0 = arith.constant 0 : i32
    %c0_i32_1 = arith.constant 0 : i32
    return %c0_i32, %c0_i32_0 : i32, i32
  }
  func.func @transform_3(%arg0: i32) -> (i32, i32) {
    %c0_i32 = arith.constant 0 : i32
    %c0_i32_0 = arith.constant 0 : i32
    %c0_i32_1 = arith.constant 0 : i32
    return %c0_i32, %c0_i32_0 : i32, i32
  }
  func.func @transform_4(%arg0: i32) -> (i32, i32, i32) {
    %c0_i32 = arith.constant 0 : i32
    %c0_i32_0 = arith.constant 0 : i32
    %c0_i32_1 = arith.constant 0 : i32
    return %arg0, %c0_i32, %c0_i32_0 : i32, i32, i32
  }
}

</mosaic_0001>

<llo_original>
// kernel: tpu_custom_call.1
$region0: #{tpu_custom_call.1}
  #allocation0 [shape = 'u32[]', space=smem, size = 0x4, offset = 0x4, fixed_abs, tag = 'smem constant byte address 0x4 - core index']
  #allocation1 [shape = 'u32[144,128]{1,0:T(1,128)}', space=vmem, size = 0x12000, scoped, tag = 'internal scratch']
  %s0 = inlined_call_operand.vmem [shape: f32[2,256,384], index: 0, kind: input, shape index: {}]
  %s1 = inlined_call_operand.vmem [shape: f32[384,64], index: 1, kind: input, shape index: {}]
  %s2 = inlined_call_operand.vmem [shape: f32[384,64], index: 2, kind: input, shape index: {}]
  %s3 = inlined_call_operand.vmem [shape: f32[384,64], index: 3, kind: input, shape index: {}]
  %s4 = inlined_call_operand.vmem [shape: f32[2,256,64], index: 4, kind: output, shape index: {}]
  %s5 = sld [smem:[#allocation0]]
  $region49: #{tpu_custom_call.1} parent=0
    _
  %s7 = ssub.s32 1, %s5
  %s8 = scalar_select 0, %s7, %s5
  loop: start=0, step=1, limit=4
  $region2: #{tpu_custom_call.1} parent=0 // loop_pre_header
    _
  $region3: #{tpu_custom_call.1} parent=0 // loop_header
    %s10 = sphi 0, %s14
    %p11 = scmp.ge.s32.totalorder %s10, 4
    %s20 = sphi 0, %s22
    %s23 = sphi 0, %s20
    %s24 = sphi 0, %s23
    %s40 = sphi 0, %s24
    %s44 = sphi 0, %s44
    %s46 = sphi 0, %s44
    %s47 = sphi 0, %s46
    %s61 = sphi 0, %s47
    %s65 = sphi 0, %s65
    %s67 = sphi 0, %s65
    %s68 = sphi 0, %s67
    %s82 = sphi 0, %s68
    %s86 = sphi 0, %s86
    %s88 = sphi 0, %s86
    %s89 = sphi 0, %s88
    %s103 = sphi 0, %s89
    %s109 = sphi 0, %s111
    %s112 = sphi 0, %s109
    %s113 = sphi 0, %s112
    %s129 = sphi 0, %s113
  $region4: #{tpu_custom_call.1} parent=0 // loop_header_branch
    %13 = sbr.rel (%p11) target = $region8
  $region5: #{tpu_custom_call.1} parent=0 // loop_body
    %s15 = ssub.s32 %s10, 1
    %s16 = ssub.s32 %s10, 2
    %s17 = sadd.s32 %s10, 1
    %s18 = ssub.s32 %s10, %s17
    %p19 = scmp.eq.s32.totalorder %s18, 0
    %s21 = sadd.s32 %s20, 1
    %s22 = scalar_select %p19, %s20, %s21
    %p25 = pneg %p19
    %p26 = scmp.eq.s32.totalorder %s10, 1
    %p27 = por %p25, %p26
    %p28 = scmp.ne.s32.totalorder %s20, %s23
    %p29 = scmp.eq.s32.totalorder %s10, 0
    %p30 = por %p28, %p29
    %p31 = scmp.ne.s32.totalorder %s20, %s23
    %p32 = scmp.eq.s32.totalorder %s15, 1
    %p33 = por %p31, %p32
    %p34 = scmp.ne.s32.totalorder %s23, %s24
    %p35 = scmp.eq.s32.totalorder %s15, 0
    %p36 = por %p34, %p35
    %p37 = scmp.ne.s32.totalorder %s23, %s24
    %p38 = scmp.eq.s32.totalorder %s16, 1
    %p39 = por %p37, %p38
    %p41 = scmp.ne.s32.totalorder %s24, %s40
    %p42 = scmp.eq.s32.totalorder %s16, 0
    %p43 = por %p41, %p42
    %s45 = sadd.s32 %s44, 1
    %p48 = scmp.eq.s32.totalorder %s10, 1
    %p49 = scmp.ne.s32.totalorder %s44, %s46
    %p50 = scmp.eq.s32.totalorder %s10, 0
    %p51 = por %p49, %p50
    %p52 = scmp.ne.s32.totalorder %s44, %s46
    %p53 = scmp.eq.s32.totalorder %s15, 1
    %p54 = por %p52, %p53
    %p55 = scmp.ne.s32.totalorder %s46, %s47
    %p56 = scmp.eq.s32.totalorder %s15, 0
    %p57 = por %p55, %p56
    %p58 = scmp.ne.s32.totalorder %s46, %s47
    %p59 = scmp.eq.s32.totalorder %s16, 1
    %p60 = por %p58, %p59
    %p62 = scmp.ne.s32.totalorder %s47, %s61
    %p63 = scmp.eq.s32.totalorder %s16, 0
    %p64 = por %p62, %p63
    %s66 = sadd.s32 %s65, 1
    %p69 = scmp.eq.s32.totalorder %s10, 1
    %p70 = scmp.ne.s32.totalorder %s65, %s67
    %p71 = scmp.eq.s32.totalorder %s10, 0
    %p72 = por %p70, %p71
    %p73 = scmp.ne.s32.totalorder %s65, %s67
    %p74 = scmp.eq.s32.totalorder %s15, 1
    %p75 = por %p73, %p74
    %p76 = scmp.ne.s32.totalorder %s67, %s68
    %p77 = scmp.eq.s32.totalorder %s15, 0
    %p78 = por %p76, %p77
    %p79 = scmp.ne.s32.totalorder %s67, %s68
    %p80 = scmp.eq.s32.totalorder %s16, 1
    %p81 = por %p79, %p80
    %p83 = scmp.ne.s32.totalorder %s68, %s82
    %p84 = scmp.eq.s32.totalorder %s16, 0
    %p85 = por %p83, %p84
    %s87 = sadd.s32 %s86, 1
    %p90 = scmp.eq.s32.totalorder %s10, 1
    %p91 = scmp.ne.s32.totalorder %s86, %s88
    %p92 = scmp.eq.s32.totalorder %s10, 0
    %p93 = por %p91, %p92
    %p94 = scmp.ne.s32.totalorder %s86, %s88
    %p95 = scmp.eq.s32.totalorder %s15, 1
    %p96 = por %p94, %p95
    %p97 = scmp.ne.s32.totalorder %s88, %s89
    %p98 = scmp.eq.s32.totalorder %s15, 0
    %p99 = por %p97, %p98
    %p100 = scmp.ne.s32.totalorder %s88, %s89
    %p101 = scmp.eq.s32.totalorder %s16, 1
    %p102 = por %p100, %p101
    %p104 = scmp.ne.s32.totalorder %s89, %s103
    %p105 = scmp.eq.s32.totalorder %s16, 0
    %p106 = por %p104, %p105
    %s107 = ssub.s32 %s10, %s17
    %p108 = scmp.eq.s32.totalorder %s107, 0
    %s110 = sadd.s32 %s109, 1
    %s111 = scalar_select %p108, %s109, %s110
    %p114 = pneg %p108
    %p115 = scmp.eq.s32.totalorder %s10, 1
    %p116 = por %p114, %p115
    %p117 = scmp.ne.s32.totalorder %s109, %s112
    %p118 = scmp.eq.s32.totalorder %s10, 0
    %p119 = por %p117, %p118
    %p120 = scmp.ne.s32.totalorder %s109, %s112
    %p121 = scmp.eq.s32.totalorder %s15, 1
    %p122 = por %p120, %p121
    %p123 = scmp.ne.s32.totalorder %s112, %s113
    %p124 = scmp.eq.s32.totalorder %s15, 0
    %p125 = por %p123, %p124
    %p126 = scmp.ne.s32.totalorder %s112, %s113
    %p127 = scmp.eq.s32.totalorder %s16, 1
    %p128 = por %p126, %p127
    %p130 = scmp.ne.s32.totalorder %s113, %s129
    %p131 = scmp.eq.s32.totalorder %s16, 0
    %p132 = por %p130, %p131
    %p133 = scmp.le.s32.totalorder 1, %s10
    %p134 = scmp.lt.s32.totalorder %s10, 3
    %p135 = pnand %p133, %p134
    %p136 = pneg %p135
    // Predicated region
    $region9: #{tpu_custom_call.1} parent=5 // pred_check
      _
    $region10: #{tpu_custom_call.1} parent=5 // pred_check_branch
      %138 = sbr.rel (%p135) target = $region12
    $region11: #{tpu_custom_call.1} parent=5 // pred_region
      %s139 = ssub.s32 %s10, 1
      // Predicated region
      $region13: #{tpu_custom_call.1} parent=11 // pred_check
        %p140 = pneg %p57
      $region14: #{tpu_custom_call.1} parent=11 // pred_check_branch
        %142 = sbr.rel (%p140) target = $region16
      $region15: #{tpu_custom_call.1} parent=11 // pred_region
        _
      $region16: #{tpu_custom_call.1} parent=11 // pred_fallthru
        _
      // Predicated region
      $region17: #{tpu_custom_call.1} parent=11 // pred_check
        %p143 = pneg %p78
      $region18: #{tpu_custom_call.1} parent=11 // pred_check_branch
        %145 = sbr.rel (%p143) target = $region20
      $region19: #{tpu_custom_call.1} parent=11 // pred_region
        _
      $region20: #{tpu_custom_call.1} parent=11 // pred_fallthru
        _
      // Predicated region
      $region21: #{tpu_custom_call.1} parent=11 // pred_check
        %p146 = pneg %p99
      $region22: #{tpu_custom_call.1} parent=11 // pred_check_branch
        %148 = sbr.rel (%p146) target = $region24
      $region23: #{tpu_custom_call.1} parent=11 // pred_region
        _
      $region24: #{tpu_custom_call.1} parent=11 // pred_fallthru
        _
    $region12: #{tpu_custom_call.1} parent=5 // pred_fallthru
      _
    %p149 = scmp.lt.s32.totalorder %s10, 2
    // Predicated region
    $region25: #{tpu_custom_call.1} parent=5 // pred_check
      %p150 = pneg %p149
    $region26: #{tpu_custom_call.1} parent=5 // pred_check_branch
      %152 = sbr.rel (%p150) target = $region28
    $region27: #{tpu_custom_call.1} parent=5 // pred_region
      // Predicated region
      $region29: #{tpu_custom_call.1} parent=27 // pred_check
        %p153 = pneg %p30
      $region30: #{tpu_custom_call.1} parent=27 // pred_check_branch
        %155 = sbr.rel (%p153) target = $region32
      $region31: #{tpu_custom_call.1} parent=27 // pred_region
        %p156 = scmp.lt.s32.totalorder %s10, 1
        %s157 = scalar_select %p156, %s10, 1
        %s158 = smul.addr %s157, 96
        %s159 = smul.addr %s158, 8
        %s160 = scalar_lea.vmem %s0, %s159
      $region32: #{tpu_custom_call.1} parent=27 // pred_fallthru
        _
    $region28: #{tpu_custom_call.1} parent=5 // pred_fallthru
      _
    %p161 = scmp.le.s32.totalorder 1, %s10
    %p162 = scmp.lt.s32.totalorder %s10, 3
    %p163 = pnand %p161, %p162
    %p164 = pneg %p163
    // Predicated region
    $region33: #{tpu_custom_call.1} parent=5 // pred_check
      _
    $region34: #{tpu_custom_call.1} parent=5 // pred_check_branch
      %166 = sbr.rel (%p163) target = $region36
    $region35: #{tpu_custom_call.1} parent=5 // pred_region
      %s167 = ssub.s32 %s10, 1
      %p168 = scmp.lt.s32.totalorder %s15, 1
      %s169 = scalar_select %p168, %s15, 1
      %s170 = smul.addr %s169, 96
      %s171 = smul.addr %s170, 8
      %s172 = scalar_lea.vmem %s0, %s171
      %p173 = pneg %p36
      %p174 = pneg %p33
      %p175 = pneg %p57
      %p176 = pneg %p54
      %p177 = pneg %p78
      %p178 = pneg %p75
      %p179 = pneg %p99
      %p180 = pneg %p96
      %p181 = pneg %p125
      %p182 = pneg %p122
      %p183 = scmp.lt.s32.totalorder %s15, 1
      %s184 = scalar_select %p183, %s15, 1
      %s185 = smul.addr %s184, 32
      %s186 = smul.addr %s185, 8
      %s187 = scalar_lea.vmem %s4, %s186
      %p188 = scmp.lt.s32.totalorder %s15, 1
      %s189 = scalar_select %p188, %s15, 1
      %s190 = smul.addr %s189, 96
      %s191 = smul.addr %s190, 8
      %s192 = scalar_lea.vmem %s0, %s191
      %p193 = scmp.lt.s32.totalorder %s15, 1
      %s194 = scalar_select %p193, %s15, 1
      %s195 = smul.addr %s194, 32
      %s196 = smul.addr %s195, 8
      %s197 = scalar_lea.vmem %s4, %s196
      %v198 = vld [vmem:[%s192] sm:$0xff]
      %v199 = vld [vmem:[%s192 + $0x8] sm:$0xff]
      %v200 = vld [vmem:[%s192 + $0x10] sm:$0xff]
      %v201 = vld [vmem:[%s192 + $0x18] sm:$0xff]
      %v202 = vld [vmem:[%s192 + $0x20] sm:$0xff]
      %v203 = vld [vmem:[%s192 + $0x28] sm:$0xff]
      %v204 = vld [vmem:[%s192 + $0x30] sm:$0xff]
      %v205 = vld [vmem:[%s192 + $0x38] sm:$0xff]
      %v206 = vld [vmem:[%s192 + $0x40] sm:$0xff]
      %v207 = vld [vmem:[%s192 + $0x48] sm:$0xff]
      %v208 = vld [vmem:[%s192 + $0x50] sm:$0xff]
      %v209 = vld [vmem:[%s192 + $0x58] sm:$0xff]
      %v210 = vld [vmem:[%s192 + $0x60] sm:$0xff]
      %v211 = vld [vmem:[%s192 + $0x68] sm:$0xff]
      %v212 = vld [vmem:[%s192 + $0x70] sm:$0xff]
      %v213 = vld [vmem:[%s192 + $0x78] sm:$0xff]
      %v214 = vld [vmem:[%s192 + $0x80] sm:$0xff]
      %v215 = vld [vmem:[%s192 + $0x88] sm:$0xff]
      %v216 = vld [vmem:[%s192 + $0x90] sm:$0xff]
      %v217 = vld [vmem:[%s192 + $0x98] sm:$0xff]
      %v218 = vld [vmem:[%s192 + $0xa0] sm:$0xff]
      %v219 = vld [vmem:[%s192 + $0xa8] sm:$0xff]
      %v220 = vld [vmem:[%s192 + $0xb0] sm:$0xff]
      %v221 = vld [vmem:[%s192 + $0xb8] sm:$0xff]
      %v222 = vld [vmem:[%s192 + $0xc0] sm:$0xff]
      %v223 = vld [vmem:[%s192 + $0xc8] sm:$0xff]
      %v224 = vld [vmem:[%s192 + $0xd0] sm:$0xff]
      %v225 = vld [vmem:[%s192 + $0xd8] sm:$0xff]
      %v226 = vld [vmem:[%s192 + $0xe0] sm:$0xff]
      %v227 = vld [vmem:[%s192 + $0xe8] sm:$0xff]
      %v228 = vld [vmem:[%s192 + $0xf0] sm:$0xff]
      %v229 = vld [vmem:[%s192 + $0xf8] sm:$0xff]
      %v230 = vld [vmem:[%s192 + $0x100] sm:$0xff]
      %v231 = vld [vmem:[%s192 + $0x108] sm:$0xff]
      %v232 = vld [vmem:[%s192 + $0x110] sm:$0xff]
      %v233 = vld [vmem:[%s192 + $0x118] sm:$0xff]
      %v234 = vld [vmem:[%s192 + $0x120] sm:$0xff]
      %v235 = vld [vmem:[%s192 + $0x128] sm:$0xff]
      %v236 = vld [vmem:[%s192 + $0x130] sm:$0xff]
      %v237 = vld [vmem:[%s192 + $0x138] sm:$0xff]
      %v238 = vld [vmem:[%s192 + $0x140] sm:$0xff]
      %v239 = vld [vmem:[%s192 + $0x148] sm:$0xff]
      %v240 = vld [vmem:[%s192 + $0x150] sm:$0xff]
      %v241 = vld [vmem:[%s192 + $0x158] sm:$0xff]
      %v242 = vld [vmem:[%s192 + $0x160] sm:$0xff]
      %v243 = vld [vmem:[%s192 + $0x168] sm:$0xff]
      %v244 = vld [vmem:[%s192 + $0x170] sm:$0xff]
      %v245 = vld [vmem:[%s192 + $0x178] sm:$0xff]
      %v246 = vld [vmem:[%s192 + $0x180] sm:$0xff]
      %v247 = vld [vmem:[%s192 + $0x188] sm:$0xff]
      %v248 = vld [vmem:[%s192 + $0x190] sm:$0xff]
      %v249 = vld [vmem:[%s192 + $0x198] sm:$0xff]
      %v250 = vld [vmem:[%s192 + $0x1a0] sm:$0xff]
      %v251 = vld [vmem:[%s192 + $0x1a8] sm:$0xff]
      %v252 = vld [vmem:[%s192 + $0x1b0] sm:$0xff]
      %v253 = vld [vmem:[%s192 + $0x1b8] sm:$0xff]
      %v254 = vld [vmem:[%s192 + $0x1c0] sm:$0xff]
      %v255 = vld [vmem:[%s192 + $0x1c8] sm:$0xff]
      %v256 = vld [vmem:[%s192 + $0x1d0] sm:$0xff]
      %v257 = vld [vmem:[%s192 + $0x1d8] sm:$0xff]
      %v258 = vld [vmem:[%s192 + $0x1e0] sm:$0xff]
      %v259 = vld [vmem:[%s192 + $0x1e8] sm:$0xff]
      %v260 = vld [vmem:[%s192 + $0x1f0] sm:$0xff]
      %v261 = vld [vmem:[%s192 + $0x1f8] sm:$0xff]
      %v262 = vld [vmem:[%s192 + $0x200] sm:$0xff]
      %v263 = vld [vmem:[%s192 + $0x208] sm:$0xff]
      %v264 = vld [vmem:[%s192 + $0x210] sm:$0xff]
      %v265 = vld [vmem:[%s192 + $0x218] sm:$0xff]
      %v266 = vld [vmem:[%s192 + $0x220] sm:$0xff]
      %v267 = vld [vmem:[%s192 + $0x228] sm:$0xff]
      %v268 = vld [vmem:[%s192 + $0x230] sm:$0xff]
      %v269 = vld [vmem:[%s192 + $0x238] sm:$0xff]
      %v270 = vld [vmem:[%s192 + $0x240] sm:$0xff]
      %v271 = vld [vmem:[%s192 + $0x248] sm:$0xff]
      %v272 = vld [vmem:[%s192 + $0x250] sm:$0xff]
      %v273 = vld [vmem:[%s192 + $0x258] sm:$0xff]
      %v274 = vld [vmem:[%s192 + $0x260] sm:$0xff]
      %v275 = vld [vmem:[%s192 + $0x268] sm:$0xff]
      %v276 = vld [vmem:[%s192 + $0x270] sm:$0xff]
      %v277 = vld [vmem:[%s192 + $0x278] sm:$0xff]
      %v278 = vld [vmem:[%s192 + $0x280] sm:$0xff]
      %v279 = vld [vmem:[%s192 + $0x288] sm:$0xff]
      %v280 = vld [vmem:[%s192 + $0x290] sm:$0xff]
      %v281 = vld [vmem:[%s192 + $0x298] sm:$0xff]
      %v282 = vld [vmem:[%s192 + $0x2a0] sm:$0xff]
      %v283 = vld [vmem:[%s192 + $0x2a8] sm:$0xff]
      %v284 = vld [vmem:[%s192 + $0x2b0] sm:$0xff]
      %v285 = vld [vmem:[%s192 + $0x2b8] sm:$0xff]
      %v286 = vld [vmem:[%s192 + $0x2c0] sm:$0xff]
      %v287 = vld [vmem:[%s192 + $0x2c8] sm:$0xff]
      %v288 = vld [vmem:[%s192 + $0x2d0] sm:$0xff]
      %v289 = vld [vmem:[%s192 + $0x2d8] sm:$0xff]
      %v290 = vld [vmem:[%s192 + $0x2e0] sm:$0xff]
      %v291 = vld [vmem:[%s192 + $0x2e8] sm:$0xff]
      %v292 = vld [vmem:[%s192 + $0x2f0] sm:$0xff]
      %v293 = vld [vmem:[%s192 + $0x2f8] sm:$0xff]
      %v294 = vld [vmem:[%s1] sm:$0xff]
      %v295 = vld [vmem:[%s1 + $0x8] sm:$0xff]
      %v296 = vld [vmem:[%s1 + $0x10] sm:$0xff]
      %v297 = vld [vmem:[%s1 + $0x18] sm:$0xff]
      %v298 = vld [vmem:[%s1 + $0x20] sm:$0xff]
      %v299 = vld [vmem:[%s1 + $0x28] sm:$0xff]
      %v300 = vld [vmem:[%s1 + $0x30] sm:$0xff]
      %v301 = vld [vmem:[%s1 + $0x38] sm:$0xff]
      %v302 = vld [vmem:[%s1 + $0x40] sm:$0xff]
      %v303 = vld [vmem:[%s1 + $0x48] sm:$0xff]
      %v304 = vld [vmem:[%s1 + $0x50] sm:$0xff]
      %v305 = vld [vmem:[%s1 + $0x58] sm:$0xff]
      %v306 = vld [vmem:[%s1 + $0x60] sm:$0xff]
      %v307 = vld [vmem:[%s1 + $0x68] sm:$0xff]
      %v308 = vld [vmem:[%s1 + $0x70] sm:$0xff]
      %v309 = vld [vmem:[%s1 + $0x78] sm:$0xff]
      %v310 = vld [vmem:[%s1 + $0x80] sm:$0xff]
      %v311 = vld [vmem:[%s1 + $0x88] sm:$0xff]
      %v312 = vld [vmem:[%s1 + $0x90] sm:$0xff]
      %v313 = vld [vmem:[%s1 + $0x98] sm:$0xff]
      %v314 = vld [vmem:[%s1 + $0xa0] sm:$0xff]
      %v315 = vld [vmem:[%s1 + $0xa8] sm:$0xff]
      %v316 = vld [vmem:[%s1 + $0xb0] sm:$0xff]
      %v317 = vld [vmem:[%s1 + $0xb8] sm:$0xff]
      %v318 = vld [vmem:[%s1 + $0xc0] sm:$0xff]
      %v319 = vld [vmem:[%s1 + $0xc8] sm:$0xff]
      %v320 = vld [vmem:[%s1 + $0xd0] sm:$0xff]
      %v321 = vld [vmem:[%s1 + $0xd8] sm:$0xff]
      %v322 = vld [vmem:[%s1 + $0xe0] sm:$0xff]
      %v323 = vld [vmem:[%s1 + $0xe8] sm:$0xff]
      %v324 = vld [vmem:[%s1 + $0xf0] sm:$0xff]
      %v325 = vld [vmem:[%s1 + $0xf8] sm:$0xff]
      %v326 = vld [vmem:[%s1 + $0x100] sm:$0xff]
      %v327 = vld [vmem:[%s1 + $0x108] sm:$0xff]
      %v328 = vld [vmem:[%s1 + $0x110] sm:$0xff]
      %v329 = vld [vmem:[%s1 + $0x118] sm:$0xff]
      %v330 = vld [vmem:[%s1 + $0x120] sm:$0xff]
      %v331 = vld [vmem:[%s1 + $0x128] sm:$0xff]
      %v332 = vld [vmem:[%s1 + $0x130] sm:$0xff]
      %v333 = vld [vmem:[%s1 + $0x138] sm:$0xff]
      %v334 = vld [vmem:[%s1 + $0x140] sm:$0xff]
      %v335 = vld [vmem:[%s1 + $0x148] sm:$0xff]
      %v336 = vld [vmem:[%s1 + $0x150] sm:$0xff]
      %v337 = vld [vmem:[%s1 + $0x158] sm:$0xff]
      %v338 = vld [vmem:[%s1 + $0x160] sm:$0xff]
      %v339 = vld [vmem:[%s1 + $0x168] sm:$0xff]
      %v340 = vld [vmem:[%s1 + $0x170] sm:$0xff]
      %v341 = vld [vmem:[%s1 + $0x178] sm:$0xff]
      %342 = vmatprep.subr.mxu0 0.0
      %343 = vmatpush1.msra.mxu0 %v294
      %344 = vmatprep.subr.mxu0 0.0
      %345 = vmatpush1.msra.mxu0 %v295
      %346 = vmatprep.subr.mxu0 0.0
      %347 = vmatpush1.msra.mxu0 %v296
      %348 = vmatprep.subr.mxu0 0.0
      %349 = vmatpush1.msra.mxu0 %v297
      %350 = vmatprep.subr.mxu0 0.0
      %351 = vmatpush1.msra.mxu0 %v298
      %352 = vmatprep.subr.mxu0 0.0
      %353 = vmatpush1.msra.mxu0 %v299
      %354 = vmatprep.subr.mxu0 0.0
      %355 = vmatpush1.msra.mxu0 %v300
      %356 = vmatprep.subr.mxu0 0.0
      %357 = vmatpush1.msra.mxu0 %v301
      %358 = vmatprep.subr.mxu0 0.0
      %359 = vmatpush1.msra.mxu0 %v302
      %360 = vmatprep.subr.mxu0 0.0
      %361 = vmatpush1.msra.mxu0 %v303
      %362 = vmatprep.subr.mxu0 0.0
      %363 = vmatpush1.msra.mxu0 %v304
      %364 = vmatprep.subr.mxu0 0.0
      %365 = vmatpush1.msra.mxu0 %v305
      %366 = vmatprep.subr.mxu0 0.0
      %367 = vmatpush1.msra.mxu0 %v306
      %368 = vmatprep.subr.mxu0 0.0
      %369 = vmatpush1.msra.mxu0 %v307
      %370 = vmatprep.subr.mxu0 0.0
      %371 = vmatpush1.msra.mxu0 %v308
      %372 = vmatprep.subr.mxu0 0.0
      %373 = vmatpush1.msra.mxu0 %v309
      %374 = vmatprep.subr.mxu0 0.0
      %375 = vmatpush1.msra.mxu0 %v310
      %376 = vmatprep.subr.mxu0 0.0
      %377 = vmatpush1.msra.mxu0 %v311
      %378 = vmatprep.subr.mxu0 0.0
      %379 = vmatpush1.msra.mxu0 %v312
      %380 = vmatprep.subr.mxu0 0.0
      %381 = vmatpush1.msra.mxu0 %v313
      %382 = vmatprep.subr.mxu0 0.0
      %383 = vmatpush1.msra.mxu0 %v314
      %384 = vmatprep.subr.mxu0 0.0
      %385 = vmatpush1.msra.mxu0 %v315
      %386 = vmatprep.subr.mxu0 0.0
      %387 = vmatpush1.msra.mxu0 %v316
      %388 = vmatprep.subr.mxu0 0.0
      %389 = vmatpush1.msra.mxu0 %v317
      %390 = vmatprep.subr.mxu0 0.0
      %391 = vmatpush1.msra.mxu0 %v318
      %392 = vmatprep.subr.mxu0 0.0
      %393 = vmatpush1.msra.mxu0 %v319
      %394 = vmatprep.subr.mxu0 0.0
      %395 = vmatpush1.msra.mxu0 %v320
      %396 = vmatprep.subr.mxu0 0.0
      %397 = vmatpush1.msra.mxu0 %v321
      %398 = vmatprep.subr.mxu0 0.0
      %399 = vmatpush1.msra.mxu0 %v322
      %400 = vmatprep.subr.mxu0 0.0
      %401 = vmatpush1.msra.mxu0 %v323
      %402 = vmatprep.subr.mxu0 0.0
      %403 = vmatpush1.msra.mxu0 %v324
      %404 = vmatprep.subr.mxu0 0.0
      %405 = vmatpush1.msra.mxu0 %v325
      %406 = vmatprep.mubr.f32.mxu0 %v199
      %407 = vmatmul.mubr.f32.gmra.mrb[0].mxu0 %v198
      %v408 = vpop.f32.mrb[0].mxu0
      %v409 = vadd.f32 0.0, %v408
      %v410 = vpop.f32.mrb[0].mxu0
      %411 = vmatprep.mubr.f32.mxu0 %v202
      %412 = vmatmul.mubr.f32.gmra.mrb[0].mxu0 %v201
      %v413 = vpop.f32.mrb[0].mxu0
      %v414 = vadd.f32 0.0, %v413
      %v415 = vpop.f32.mrb[0].mxu0
      %416 = vmatprep.mubr.f32.mxu0 %v205
      %417 = vmatmul.mubr.f32.gmra.mrb[0].mxu0 %v204
      %v418 = vpop.f32.mrb[0].mxu0
      %v419 = vadd.f32 0.0, %v418
      %v420 = vpop.f32.mrb[0].mxu0
      %421 = vmatprep.mubr.f32.mxu0 %v208
      %422 = vmatmul.mubr.f32.gmra.mrb[0].mxu0 %v207
      %v423 = vpop.f32.mrb[0].mxu0
      %v424 = vadd.f32 0.0, %v423
      %v425 = vpop.f32.mrb[0].mxu0
      %426 = vmatprep.mubr.f32.mxu0 %v211
      %427 = vmatmul.mubr.f32.gmra.mrb[0].mxu0 %v210
      %v428 = vpop.f32.mrb[0].mxu0
      %v429 = vadd.f32 0.0, %v428
      %v430 = vpop.f32.mrb[0].mxu0
      %431 = vmatprep.mubr.f32.mxu0 %v214
      %432 = vmatmul.mubr.f32.gmra.mrb[0].mxu0 %v213
      %v433 = vpop.f32.mrb[0].mxu0
      %v434 = vadd.f32 0.0, %v433
      %v435 = vpop.f32.mrb[0].mxu0
      %436 = vmatprep.mubr.f32.mxu0 %v217
      %437 = vmatmul.mubr.f32.gmra.mrb[0].mxu0 %v216
      %v438 = vpop.f32.mrb[0].mxu0
      %v439 = vadd.f32 0.0, %v438
      %v440 = vpop.f32.mrb[0].mxu0
      %441 = vmatprep.mubr.f32.mxu0 %v220
      %442 = vmatmul.mubr.f32.gmra.mrb[0].mxu0 %v219
      %v443 = vpop.f32.mrb[0].mxu0
      %v444 = vadd.f32 0.0, %v443
      %v445 = vpop.f32.mrb[0].mxu0
      %446 = vmatprep.mubr.f32.mxu0 %v223
      %447 = vmatmul.mubr.f32.gmra.mrb[0].mxu0 %v222
      %v448 = vpop.f32.mrb[0].mxu0
      %v449 = vadd.f32 0.0, %v448
      %v450 = vpop.f32.mrb[0].mxu0
      %451 = vmatprep.mubr.f32.mxu0 %v226
      %452 = vmatmul.mubr.f32.gmra.mrb[0].mxu0 %v225
      %v453 = vpop.f32.mrb[0].mxu0
      %v454 = vadd.f32 0.0, %v453
      %v455 = vpop.f32.mrb[0].mxu0
      %456 = vmatprep.mubr.f32.mxu0 %v229
      %457 = vmatmul.mubr.f32.gmra.mrb[0].mxu0 %v228
      %v458 = vpop.f32.mrb[0].mxu0
      %v459 = vadd.f32 0.0, %v458
      %v460 = vpop.f32.mrb[0].mxu0
      %461 = vmatprep.mubr.f32.mxu0 %v232
      %462 = vmatmul.mubr.f32.gmra.mrb[0].mxu0 %v231
      %v463 = vpop.f32.mrb[0].mxu0
      %v464 = vadd.f32 0.0, %v463
      %v465 = vpop.f32.mrb[0].mxu0
      %466 = vmatprep.mubr.f32.mxu0 %v235
      %467 = vmatmul.mubr.f32.gmra.mrb[0].mxu0 %v234
      %v468 = vpop.f32.mrb[0].mxu0
      %v469 = vadd.f32 0.0, %v468
      %v470 = vpop.f32.mrb[0].mxu0
      %471 = vmatprep.mubr.f32.mxu0 %v238
      %472 = vmatmul.mubr.f32.gmra.mrb[0].mxu0 %v237
      %v473 = vpop.f32.mrb[0].mxu0
      %v474 = vadd.f32 0.0, %v473
      %v475 = vpop.f32.mrb[0].mxu0
      %476 = vmatprep.mubr.f32.mxu0 %v241
      %477 = vmatmul.mubr.f32.gmra.mrb[0].mxu0 %v240
      %v478 = vpop.f32.mrb[0].mxu0
      %v479 = vadd.f32 0.0, %v478
      %v480 = vpop.f32.mrb[0].mxu0
      %481 = vmatprep.mubr.f32.mxu0 %v244
      %482 = vmatmul.mubr.f32.gmra.mrb[0].mxu0 %v243
      %v483 = vpop.f32.mrb[0].mxu0
      %v484 = vadd.f32 0.0, %v483
      %v485 = vpop.f32.mrb[0].mxu0
      %486 = vmatprep.mubr.f32.mxu0 %v247
      %487 = vmatmul.mubr.f32.gmra.mrb[0].mxu0 %v246
      %v488 = vpop.f32.mrb[0].mxu0
      %v489 = vadd.f32 0.0, %v488
      %v490 = vpop.f32.mrb[0].mxu0
      %491 = vmatprep.mubr.f32.mxu0 %v250
      %492 = vmatmul.mubr.f32.gmra.mrb[0].mxu0 %v249
      %v493 = vpop.f32.mrb[0].mxu0
      %v494 = vadd.f32 0.0, %v493
      %v495 = vpop.f32.mrb[0].mxu0
      %496 = vmatprep.mubr.f32.mxu0 %v253
      %497 = vmatmul.mubr.f32.gmra.mrb[0].mxu0 %v252
      %v498 = vpop.f32.mrb[0].mxu0
      %v499 = vadd.f32 0.0, %v498
      %v500 = vpop.f32.mrb[0].mxu0
      %501 = vmatprep.mubr.f32.mxu0 %v256
      %502 = vmatmul.mubr.f32.gmra.mrb[0].mxu0 %v255
      %v503 = vpop.f32.mrb[0].mxu0
      %v504 = vadd.f32 0.0, %v503
      %v505 = vpop.f32.mrb[0].mxu0
      %506 = vmatprep.mubr.f32.mxu0 %v259
      %507 = vmatmul.mubr.f32.gmra.mrb[0].mxu0 %v258
      %v508 = vpop.f32.mrb[0].mxu0
      %v509 = vadd.f32 0.0, %v508
      %v510 = vpop.f32.mrb[0].mxu0
      %511 = vmatprep.mubr.f32.mxu0 %v262
      %512 = vmatmul.mubr.f32.gmra.mrb[0].mxu0 %v261
      %v513 = vpop.f32.mrb[0].mxu0
      %v514 = vadd.f32 0.0, %v513
      %v515 = vpop.f32.mrb[0].mxu0
      %516 = vmatprep.mubr.f32.mxu0 %v265
      %517 = vmatmul.mubr.f32.gmra.mrb[0].mxu0 %v264
      %v518 = vpop.f32.mrb[0].mxu0
      %v519 = vadd.f32 0.0, %v518
      %v520 = vpop.f32.mrb[0].mxu0
      %521 = vmatprep.mubr.f32.mxu0 %v268
      %522 = vmatmul.mubr.f32.gmra.mrb[0].mxu0 %v267
      %v523 = vpop.f32.mrb[0].mxu0
      %v524 = vadd.f32 0.0, %v523
      %v525 = vpop.f32.mrb[0].mxu0
      %526 = vmatprep.mubr.f32.mxu0 %v271
      %527 = vmatmul.mubr.f32.gmra.mrb[0].mxu0 %v270
      %v528 = vpop.f32.mrb[0].mxu0
      %v529 = vadd.f32 0.0, %v528
      %v530 = vpop.f32.mrb[0].mxu0
      %531 = vmatprep.mubr.f32.mxu0 %v274
      %532 = vmatmul.mubr.f32.gmra.mrb[0].mxu0 %v273
      %v533 = vpop.f32.mrb[0].mxu0
      %v534 = vadd.f32 0.0, %v533
      %v535 = vpop.f32.mrb[0].mxu0
      %536 = vmatprep.mubr.f32.mxu0 %v277
      %537 = vmatmul.mubr.f32.gmra.mrb[0].mxu0 %v276
      %v538 = vpop.f32.mrb[0].mxu0
      %v539 = vadd.f32 0.0, %v538
      %v540 = vpop.f32.mrb[0].mxu0
      %541 = vmatprep.mubr.f32.mxu0 %v280
      %542 = vmatmul.mubr.f32.gmra.mrb[0].mxu0 %v279
      %v543 = vpop.f32.mrb[0].mxu0
      %v544 = vadd.f32 0.0, %v543
      %v545 = vpop.f32.mrb[0].mxu0
      %546 = vmatprep.mubr.f32.mxu0 %v283
      %547 = vmatmul.mubr.f32.gmra.mrb[0].mxu0 %v282
      %v548 = vpop.f32.mrb[0].mxu0
      %v549 = vadd.f32 0.0, %v548
      %v550 = vpop.f32.mrb[0].mxu0
      %551 = vmatprep.mubr.f32.mxu0 %v286
      %552 = vmatmul.mubr.f32.gmra.mrb[0].mxu0 %v285
      %v553 = vpop.f32.mrb[0].mxu0
      %v554 = vadd.f32 0.0, %v553
      %v555 = vpop.f32.mrb[0].mxu0
      %556 = vmatprep.mubr.f32.mxu0 %v289
      %557 = vmatmul.mubr.f32.gmra.mrb[0].mxu0 %v288
      %v558 = vpop.f32.mrb[0].mxu0
      %v559 = vadd.f32 0.0, %v558
      %v560 = vpop.f32.mrb[0].mxu0
      %561 = vmatprep.mubr.f32.mxu0 %v292
      %562 = vmatmul.mubr.f32.gmra.mrb[0].mxu0 %v291
      %v563 = vpop.f32.mrb[0].mxu0
      %v564 = vadd.f32 0.0, %v563
      %v565 = vpop.f32.mrb[0].mxu0
      %566 = vdwg.mxu0
      %567 = vmatprep.subr.mxu0 0.0
      %568 = vmatpush1.msra.mxu0 %v326
      %569 = vmatprep.subr.mxu0 0.0
      %570 = vmatpush1.msra.mxu0 %v327
      %571 = vmatprep.subr.mxu0 0.0
      %572 = vmatpush1.msra.mxu0 %v328
      %573 = vmatprep.subr.mxu0 0.0
      %574 = vmatpush1.msra.mxu0 %v329
      %575 = vmatprep.subr.mxu0 0.0
      %576 = vmatpush1.msra.mxu0 %v330
      %577 = vmatprep.subr.mxu0 0.0
      %578 = vmatpush1.msra.mxu0 %v331
      %579 = vmatprep.subr.mxu0 0.0
      %580 = vmatpush1.msra.mxu0 %v332
      %581 = vmatprep.subr.mxu0 0.0
      %582 = vmatpush1.msra.mxu0 %v333
      %583 = vmatprep.subr.mxu0 0.0
      %584 = vmatpush1.msra.mxu0 %v334
      %585 = vmatprep.subr.mxu0 0.0
      %586 = vmatpush1.msra.mxu0 %v335
      %587 = vmatprep.subr.mxu0 0.0
      %588 = vmatpush1.msra.mxu0 %v336
      %589 = vmatprep.subr.mxu0 0.0
      %590 = vmatpush1.msra.mxu0 %v337
      %591 = vmatprep.subr.mxu0 0.0
      %592 = vmatpush1.msra.mxu0 %v338
      %593 = vmatprep.subr.mxu0 0.0
      %594 = vmatpush1.msra.mxu0 %v339
      %595 = vmatprep.subr.mxu0 0.0
      %596 = vmatpush1.msra.mxu0 %v340
      %597 = vmatprep.subr.mxu0 0.0
      %598 = vmatpush1.msra.mxu0 %v341
      %599 = vmatprep.subr.mxu0 0.0
      %600 = vmatpush1.msra.mxu0 0.0
      %601 = vmatprep.subr.mxu0 0.0
      %602 = vmatpush1.msra.mxu0 0.0
      %603 = vmatprep.subr.mxu0 0.0
      %604 = vmatpush1.msra.mxu0 0.0
      %605 = vmatprep.subr.mxu0 0.0
      %606 = vmatpush1.msra.mxu0 0.0
      %607 = vmatprep.subr.mxu0 0.0
      %608 = vmatpush1.msra.mxu0 0.0
      %609 = vmatprep.subr.mxu0 0.0
      %610 = vmatpush1.msra.mxu0 0.0
      %611 = vmatprep.subr.mxu0 0.0
      %612 = vmatpush1.msra.mxu0 0.0
      %613 = vmatprep.subr.mxu0 0.0
      %614 = vmatpush1.msra.mxu0 0.0
      %615 = vmatprep.subr.mxu0 0.0
      %616 = vmatpush1.msra.mxu0 0.0
      %617 = vmatprep.subr.mxu0 0.0
      %618 = vmatpush1.msra.mxu0 0.0
      %619 = vmatprep.subr.mxu0 0.0
      %620 = vmatpush1.msra.mxu0 0.0
      %621 = vmatprep.subr.mxu0 0.0
      %622 = vmatpush1.msra.mxu0 0.0
      %623 = vmatprep.subr.mxu0 0.0
      %624 = vmatpush1.msra.mxu0 0.0
      %625 = vmatprep.subr.mxu0 0.0
      %626 = vmatpush1.msra.mxu0 0.0
      %627 = vmatprep.subr.mxu0 0.0
      %628 = vmatpush1.msra.mxu0 0.0
      %629 = vmatprep.subr.mxu0 0.0
      %630 = vmatpush1.msra.mxu0 0.0
      %631 = vmatprep.mubr.f32.mxu0 0.0
      %632 = vmatmul.mubr.f32.gmra.mrb[0].mxu0 %v200
      %v633 = vpop.f32.mrb[0].mxu0
      %v634 = vadd.f32 %v409, %v633
      %v635 = vpop.f32.mrb[0].mxu0
      %636 = vmatprep.mubr.f32.mxu0 0.0
      %637 = vmatmul.mubr.f32.gmra.mrb[0].mxu0 %v203
      %v638 = vpop.f32.mrb[0].mxu0
      %v639 = vadd.f32 %v414, %v638
      %v640 = vpop.f32.mrb[0].mxu0
      %641 = vmatprep.mubr.f32.mxu0 0.0
      %642 = vmatmul.mubr.f32.gmra.mrb[0].mxu0 %v206
      %v643 = vpop.f32.mrb[0].mxu0
      %v644 = vadd.f32 %v419, %v643
      %v645 = vpop.f32.mrb[0].mxu0
      %646 = vmatprep.mubr.f32.mxu0 0.0
      %647 = vmatmul.mubr.f32.gmra.mrb[0].mxu0 %v209
      %v648 = vpop.f32.mrb[0].mxu0
      %v649 = vadd.f32 %v424, %v648
      %v650 = vpop.f32.mrb[0].mxu0
      %651 = vmatprep.mubr.f32.mxu0 0.0
      %652 = vmatmul.mubr.f32.gmra.mrb[0].mxu0 %v212
      %v653 = vpop.f32.mrb[0].mxu0
      %v654 = vadd.f32 %v429, %v653
      %v655 = vpop.f32.mrb[0].mxu0
      %656 = vmatprep.mubr.f32.mxu0 0.0
      %657 = vmatmul.mubr.f32.gmra.mrb[0].mxu0 %v215
      %v658 = vpop.f32.mrb[0].mxu0
      %v659 = vadd.f32 %v434, %v658
      %v660 = vpop.f32.mrb[0].mxu0
      %661 = vmatprep.mubr.f32.mxu0 0.0
      %662 = vmatmul.mubr.f32.gmra.mrb[0].mxu0 %v218
      %v663 = vpop.f32.mrb[0].mxu0
      %v664 = vadd.f32 %v439, %v663
      %v665 = vpop.f32.mrb[0].mxu0
      %666 = vmatprep.mubr.f32.mxu0 0.0
      %667 = vmatmul.mubr.f32.gmra.mrb[0].mxu0 %v221
      %v668 = vpop.f32.mrb[0].mxu0
      %v669 = vadd.f32 %v444, %v668
      %v670 = vpop.f32.mrb[0].mxu0
      %671 = vmatprep.mubr.f32.mxu0 0.0
      %672 = vmatmul.mubr.f32.gmra.mrb[0].mxu0 %v224
      %v673 = vpop.f32.mrb[0].mxu0
      %v674 = vadd.f32 %v449, %v673
      %v675 = vpop.f32.mrb[0].mxu0
      %676 = vmatprep.mubr.f32.mxu0 0.0
      %677 = vmatmul.mubr.f32.gmra.mrb[0].mxu0 %v227
      %v678 = vpop.f32.mrb[0].mxu0
      %v679 = vadd.f32 %v454, %v678
      %v680 = vpop.f32.mrb[0].mxu0
      %681 = vmatprep.mubr.f32.mxu0 0.0
      %682 = vmatmul.mubr.f32.gmra.mrb[0].mxu0 %v230
      %v683 = vpop.f32.mrb[0].mxu0
      %v684 = vadd.f32 %v459, %v683
      %v685 = vpop.f32.mrb[0].mxu0
      %686 = vmatprep.mubr.f32.mxu0 0.0
      %687 = vmatmul.mubr.f32.gmra.mrb[0].mxu0 %v233
      %v688 = vpop.f32.mrb[0].mxu0
      %v689 = vadd.f32 %v464, %v688
      %v690 = vpop.f32.mrb[0].mxu0
      %691 = vmatprep.mubr.f32.mxu0 0.0
      %692 = vmatmul.mubr.f32.gmra.mrb[0].mxu0 %v236
      %v693 = vpop.f32.mrb[0].mxu0
      %v694 = vadd.f32 %v469, %v693
      %v695 = vpop.f32.mrb[0].mxu0
      %696 = vmatprep.mubr.f32.mxu0 0.0
      %697 = vmatmul.mubr.f32.gmra.mrb[0].mxu0 %v239
      %v698 = vpop.f32.mrb[0].mxu0
      %v699 = vadd.f32 %v474, %v698
      %v700 = vpop.f32.mrb[0].mxu0
      %701 = vmatprep.mubr.f32.mxu0 0.0
      %702 = vmatmul.mubr.f32.gmra.mrb[0].mxu0 %v242
      %v703 = vpop.f32.mrb[0].mxu0
      %v704 = vadd.f32 %v479, %v703
      %v705 = vpop.f32.mrb[0].mxu0
      %706 = vmatprep.mubr.f32.mxu0 0.0
      %707 = vmatmul.mubr.f32.gmra.mrb[0].mxu0 %v245
      %v708 = vpop.f32.mrb[0].mxu0
      %v709 = vadd.f32 %v484, %v708
      %v710 = vpop.f32.mrb[0].mxu0
      %711 = vmatprep.mubr.f32.mxu0 0.0
      %712 = vmatmul.mubr.f32.gmra.mrb[0].mxu0 %v248
      %v713 = vpop.f32.mrb[0].mxu0
      %v714 = vadd.f32 %v489, %v713
      %v715 = vpop.f32.mrb[0].mxu0
      %716 = vmatprep.mubr.f32.mxu0 0.0
      %717 = vmatmul.mubr.f32.gmra.mrb[0].mxu0 %v251
      %v718 = vpop.f32.mrb[0].mxu0
      %v719 = vadd.f32 %v494, %v718
      %v720 = vpop.f32.mrb[0].mxu0
      %721 = vmatprep.mubr.f32.mxu0 0.0
      %722 = vmatmul.mubr.f32.gmra.mrb[0].mxu0 %v254
      %v723 = vpop.f32.mrb[0].mxu0
      %v724 = vadd.f32 %v499, %v723
      %v725 = vpop.f32.mrb[0].mxu0
      %726 = vmatprep.mubr.f32.mxu0 0.0
      %727 = vmatmul.mubr.f32.gmra.mrb[0].mxu0 %v257
      %v728 = vpop.f32.mrb[0].mxu0
      %v729 = vadd.f32 %v504, %v728
      %v730 = vpop.f32.mrb[0].mxu0
      %731 = vmatprep.mubr.f32.mxu0 0.0
      %732 = vmatmul.mubr.f32.gmra.mrb[0].mxu0 %v260
      %v733 = vpop.f32.mrb[0].mxu0
      %v734 = vadd.f32 %v509, %v733
      %v735 = vpop.f32.mrb[0].mxu0
      %736 = vmatprep.mubr.f32.mxu0 0.0
      %737 = vmatmul.mubr.f32.gmra.mrb[0].mxu0 %v263
      %v738 = vpop.f32.mrb[0].mxu0
      %v739 = vadd.f32 %v514, %v738
      %v740 = vpop.f32.mrb[0].mxu0
      %741 = vmatprep.mubr.f32.mxu0 0.0
      %742 = vmatmul.mubr.f32.gmra.mrb[0].mxu0 %v266
      %v743 = vpop.f32.mrb[0].mxu0
      %v744 = vadd.f32 %v519, %v743
      %v745 = vpop.f32.mrb[0].mxu0
      %746 = vmatprep.mubr.f32.mxu0 0.0
      %747 = vmatmul.mubr.f32.gmra.mrb[0].mxu0 %v269
      %v748 = vpop.f32.mrb[0].mxu0
      %v749 = vadd.f32 %v524, %v748
      %v750 = vpop.f32.mrb[0].mxu0
      %751 = vmatprep.mubr.f32.mxu0 0.0
      %752 = vmatmul.mubr.f32.gmra.mrb[0].mxu0 %v272
      %v753 = vpop.f32.mrb[0].mxu0
      %v754 = vadd.f32 %v529, %v753
      %v755 = vpop.f32.mrb[0].mxu0
      %756 = vmatprep.mubr.f32.mxu0 0.0
      %757 = vmatmul.mubr.f32.gmra.mrb[0].mxu0 %v275
      %v758 = vpop.f32.mrb[0].mxu0
      %v759 = vadd.f32 %v534, %v758
      %v760 = vpop.f32.mrb[0].mxu0
      %761 = vmatprep.mubr.f32.mxu0 0.0
      %762 = vmatmul.mubr.f32.gmra.mrb[0].mxu0 %v278
      %v763 = vpop.f32.mrb[0].mxu0
      %v764 = vadd.f32 %v539, %v763
      %v765 = vpop.f32.mrb[0].mxu0
      %766 = vmatprep.mubr.f32.mxu0 0.0
      %767 = vmatmul.mubr.f32.gmra.mrb[0].mxu0 %v281
      %v768 = vpop.f32.mrb[0].mxu0
      %v769 = vadd.f32 %v544, %v768
      %v770 = vpop.f32.mrb[0].mxu0
      %771 = vmatprep.mubr.f32.mxu0 0.0
      %772 = vmatmul.mubr.f32.gmra.mrb[0].mxu0 %v284
      %v773 = vpop.f32.mrb[0].mxu0
      %v774 = vadd.f32 %v549, %v773
      %v775 = vpop.f32.mrb[0].mxu0
      %776 = vmatprep.mubr.f32.mxu0 0.0
      %777 = vmatmul.mubr.f32.gmra.mrb[0].mxu0 %v287
      %v778 = vpop.f32.mrb[0].mxu0
      %v779 = vadd.f32 %v554, %v778
      %v780 = vpop.f32.mrb[0].mxu0
      %781 = vmatprep.mubr.f32.mxu0 0.0
      %782 = vmatmul.mubr.f32.gmra.mrb[0].mxu0 %v290
      %v783 = vpop.f32.mrb[0].mxu0
      %v784 = vadd.f32 %v559, %v783
      %v785 = vpop.f32.mrb[0].mxu0
      %786 = vmatprep.mubr.f32.mxu0 0.0
      %787 = vmatmul.mubr.f32.gmra.mrb[0].mxu0 %v293
      %v788 = vpop.f32.mrb[0].mxu0
      %v789 = vadd.f32 %v564, %v788
      %v790 = vpop.f32.mrb[0].mxu0
      %791 = vdwg.mxu0
      %v792 = vmul.f32 %v634, 0.125
      %v793 = vmul.f32 %v639, 0.125
      %v794 = vmul.f32 %v644, 0.125
      %v795 = vmul.f32 %v649, 0.125
      %v796 = vmul.f32 %v654, 0.125
      %v797 = vmul.f32 %v659, 0.125
      %v798 = vmul.f32 %v664, 0.125
      %v799 = vmul.f32 %v669, 0.125
      %v800 = vmul.f32 %v674, 0.125
      %v801 = vmul.f32 %v679, 0.125
      %v802 = vmul.f32 %v684, 0.125
      %v803 = vmul.f32 %v689, 0.125
      %v804 = vmul.f32 %v694, 0.125
      %v805 = vmul.f32 %v699, 0.125
      %v806 = vmul.f32 %v704, 0.125
      %v807 = vmul.f32 %v709, 0.125
      %v808 = vmul.f32 %v714, 0.125
      %v809 = vmul.f32 %v719, 0.125
      %v810 = vmul.f32 %v724, 0.125
      %v811 = vmul.f32 %v729, 0.125
      %v812 = vmul.f32 %v734, 0.125
      %v813 = vmul.f32 %v739, 0.125
      %v814 = vmul.f32 %v744, 0.125
      %v815 = vmul.f32 %v749, 0.125
      %v816 = vmul.f32 %v754, 0.125
      %v817 = vmul.f32 %v759, 0.125
      %v818 = vmul.f32 %v764, 0.125
      %v819 = vmul.f32 %v769, 0.125
      %v820 = vmul.f32 %v774, 0.125
      %v821 = vmul.f32 %v779, 0.125
      %v822 = vmul.f32 %v784, 0.125
      %v823 = vmul.f32 %v789, 0.125
      %v824 = vld [vmem:[%s2] sm:$0xff]
      %v825 = vld [vmem:[%s2 + $0x8] sm:$0xff]
      %v826 = vld [vmem:[%s2 + $0x10] sm:$0xff]
      %v827 = vld [vmem:[%s2 + $0x18] sm:$0xff]
      %v828 = vld [vmem:[%s2 + $0x20] sm:$0xff]
      %v829 = vld [vmem:[%s2 + $0x28] sm:$0xff]
      %v830 = vld [vmem:[%s2 + $0x30] sm:$0xff]
      %v831 = vld [vmem:[%s2 + $0x38] sm:$0xff]
      %v832 = vld [vmem:[%s2 + $0x40] sm:$0xff]
      %v833 = vld [vmem:[%s2 + $0x48] sm:$0xff]
      %v834 = vld [vmem:[%s2 + $0x50] sm:$0xff]
      %v835 = vld [vmem:[%s2 + $0x58] sm:$0xff]
      %v836 = vld [vmem:[%s2 + $0x60] sm:$0xff]
      %v837 = vld [vmem:[%s2 + $0x68] sm:$0xff]
      %v838 = vld [vmem:[%s2 + $0x70] sm:$0xff]
      %v839 = vld [vmem:[%s2 + $0x78] sm:$0xff]
      %v840 = vld [vmem:[%s2 + $0x80] sm:$0xff]
      %v841 = vld [vmem:[%s2 + $0x88] sm:$0xff]
      %v842 = vld [vmem:[%s2 + $0x90] sm:$0xff]
      %v843 = vld [vmem:[%s2 + $0x98] sm:$0xff]
      %v844 = vld [vmem:[%s2 + $0xa0] sm:$0xff]
      %v845 = vld [vmem:[%s2 + $0xa8] sm:$0xff]
      %v846 = vld [vmem:[%s2 + $0xb0] sm:$0xff]
      %v847 = vld [vmem:[%s2 + $0xb8] sm:$0xff]
      %v848 = vld [vmem:[%s2 + $0xc0] sm:$0xff]
      %v849 = vld [vmem:[%s2 + $0xc8] sm:$0xff]
      %v850 = vld [vmem:[%s2 + $0xd0] sm:$0xff]
      %v851 = vld [vmem:[%s2 + $0xd8] sm:$0xff]
      %v852 = vld [vmem:[%s2 + $0xe0] sm:$0xff]
      %v853 = vld [vmem:[%s2 + $0xe8] sm:$0xff]
      %v854 = vld [vmem:[%s2 + $0xf0] sm:$0xff]
      %v855 = vld [vmem:[%s2 + $0xf8] sm:$0xff]
      %v856 = vld [vmem:[%s2 + $0x100] sm:$0xff]
      %v857 = vld [vmem:[%s2 + $0x108] sm:$0xff]
      %v858 = vld [vmem:[%s2 + $0x110] sm:$0xff]
      %v859 = vld [vmem:[%s2 + $0x118] sm:$0xff]
      %v860 = vld [vmem:[%s2 + $0x120] sm:$0xff]
      %v861 = vld [vmem:[%s2 + $0x128] sm:$0xff]
      %v862 = vld [vmem:[%s2 + $0x130] sm:$0xff]
      %v863 = vld [vmem:[%s2 + $0x138] sm:$0xff]
      %v864 = vld [vmem:[%s2 + $0x140] sm:$0xff]
      %v865 = vld [vmem:[%s2 + $0x148] sm:$0xff]
      %v866 = vld [vmem:[%s2 + $0x150] sm:$0xff]
      %v867 = vld [vmem:[%s2 + $0x158] sm:$0xff]
      %v868 = vld [vmem:[%s2 + $0x160] sm:$0xff]
      %v869 = vld [vmem:[%s2 + $0x168] sm:$0xff]
      %v870 = vld [vmem:[%s2 + $0x170] sm:$0xff]
      %v871 = vld [vmem:[%s2 + $0x178] sm:$0xff]
      %872 = vmatprep.subr.mxu0 0.0
      %873 = vmatpush1.msra.mxu0 %v824
      %874 = vmatprep.subr.mxu0 0.0
      %875 = vmatpush1.msra.mxu0 %v825
      %876 = vmatprep.subr.mxu0 0.0
      %877 = vmatpush1.msra.mxu0 %v826
      %878 = vmatprep.subr.mxu0 0.0
      %879 = vmatpush1.msra.mxu0 %v827
      %880 = vmatprep.subr.mxu0 0.0
      %881 = vmatpush1.msra.mxu0 %v828
      %882 = vmatprep.subr.mxu0 0.0
      %883 = vmatpush1.msra.mxu0 %v829
      %884 = vmatprep.subr.mxu0 0.0
      %885 = vmatpush1.msra.mxu0 %v830
      %886 = vmatprep.subr.mxu0 0.0
      %887 = vmatpush1.msra.mxu0 %v831
      %888 = vmatprep.subr.mxu0 0.0
      %889 = vmatpush1.msra.mxu0 %v832
      %890 = vmatprep.subr.mxu0 0.0
      %891 = vmatpush1.msra.mxu0 %v833
      %892 = vmatprep.subr.mxu0 0.0
      %893 = vmatpush1.msra.mxu0 %v834
      %894 = vmatprep.subr.mxu0 0.0
      %895 = vmatpush1.msra.mxu0 %v835
      %896 = vmatprep.subr.mxu0 0.0
      %897 = vmatpush1.msra.mxu0 %v836
      %898 = vmatprep.subr.mxu0 0.0
      %899 = vmatpush1.msra.mxu0 %v837
      %900 = vmatprep.subr.mxu0 0.0
      %901 = vmatpush1.msra.mxu0 %v838
      %902 = vmatprep.subr.mxu0 0.0
      %903 = vmatpush1.msra.mxu0 %v839
      %904 = vmatprep.subr.mxu0 0.0
      %905 = vmatpush1.msra.mxu0 %v840
      %906 = vmatprep.subr.mxu0 0.0
      %907 = vmatpush1.msra.mxu0 %v841
      %908 = vmatprep.subr.mxu0 0.0
      %909 = vmatpush1.msra.mxu0 %v842
      %910 = vmatprep.subr.mxu0 0.0
      %911 = vmatpush1.msra.mxu0 %v843
      %912 = vmatprep.subr.mxu0 0.0
      %913 = vmatpush1.msra.mxu0 %v844
      %914 = vmatprep.subr.mxu0 0.0
      %915 = vmatpush1.msra.mxu0 %v845
      %916 = vmatprep.subr.mxu0 0.0
      %917 = vmatpush1.msra.mxu0 %v846
      %918 = vmatprep.subr.mxu0 0.0
      %919 = vmatpush1.msra.mxu0 %v847
      %920 = vmatprep.subr.mxu0 0.0
      %921 = vmatpush1.msra.mxu0 %v848
      %922 = vmatprep.subr.mxu0 0.0
      %923 = vmatpush1.msra.mxu0 %v849
      %924 = vmatprep.subr.mxu0 0.0
      %925 = vmatpush1.msra.mxu0 %v850
      %926 = vmatprep.subr.mxu0 0.0
      %927 = vmatpush1.msra.mxu0 %v851
      %928 = vmatprep.subr.mxu0 0.0
      %929 = vmatpush1.msra.mxu0 %v852
      %930 = vmatprep.subr.mxu0 0.0
      %931 = vmatpush1.msra.mxu0 %v853
      %932 = vmatprep.subr.mxu0 0.0
      %933 = vmatpush1.msra.mxu0 %v854
      %934 = vmatprep.subr.mxu0 0.0
      %935 = vmatpush1.msra.mxu0 %v855
      %936 = vmatprep.mubr.f32.mxu0 %v199
      %937 = vmatmul.mubr.f32.gmra.mrb[0].mxu0 %v198
      %v938 = vpop.f32.mrb[0].mxu0
      %v939 = vadd.f32 0.0, %v938
      %v940 = vpop.f32.mrb[0].mxu0
      %941 = vmatprep.mubr.f32.mxu0 %v202
      %942 = vmatmul.mubr.f32.gmra.mrb[0].mxu0 %v201
      %v943 = vpop.f32.mrb[0].mxu0
      %v944 = vadd.f32 0.0, %v943
      %v945 = vpop.f32.mrb[0].mxu0
      %946 = vmatprep.mubr.f32.mxu0 %v205
      %947 = vmatmul.mubr.f32.gmra.mrb[0].mxu0 %v204
      %v948 = vpop.f32.mrb[0].mxu0
      %v949 = vadd.f32 0.0, %v948
      %v950 = vpop.f32.mrb[0].mxu0
      %951 = vmatprep.mubr.f32.mxu0 %v208
      %952 = vmatmul.mubr.f32.gmra.mrb[0].mxu0 %v207
      %v953 = vpop.f32.mrb[0].mxu0
      %v954 = vadd.f32 0.0, %v953
      %v955 = vpop.f32.mrb[0].mxu0
      %956 = vmatprep.mubr.f32.mxu0 %v211
      %957 = vmatmul.mubr.f32.gmra.mrb[0].mxu0 %v210
      %v958 = vpop.f32.mrb[0].mxu0
      %v959 = vadd.f32 0.0, %v958
      %v960 = vpop.f32.mrb[0].mxu0
      %961 = vmatprep.mubr.f32.mxu0 %v214
      %962 = vmatmul.mubr.f32.gmra.mrb[0].mxu0 %v213
      %v963 = vpop.f32.mrb[0].mxu0
      %v964 = vadd.f32 0.0, %v963
      %v965 = vpop.f32.mrb[0].mxu0
      %966 = vmatprep.mubr.f32.mxu0 %v217
      %967 = vmatmul.mubr.f32.gmra.mrb[0].mxu0 %v216
      %v968 = vpop.f32.mrb[0].mxu0
      %v969 = vadd.f32 0.0, %v968
      %v970 = vpop.f32.mrb[0].mxu0
      %971 = vmatprep.mubr.f32.mxu0 %v220
      %972 = vmatmul.mubr.f32.gmra.mrb[0].mxu0 %v219
      %v973 = vpop.f32.mrb[0].mxu0
      %v974 = vadd.f32 0.0, %v973
      %v975 = vpop.f32.mrb[0].mxu0
      %976 = vmatprep.mubr.f32.mxu0 %v223
      %977 = vmatmul.mubr.f32.gmra.mrb[0].mxu0 %v222
      %v978 = vpop.f32.mrb[0].mxu0
      %v979 = vadd.f32 0.0, %v978
      %v980 = vpop.f32.mrb[0].mxu0
      %981 = vmatprep.mubr.f32.mxu0 %v226
      %982 = vmatmul.mubr.f32.gmra.mrb[0].mxu0 %v225
      %v983 = vpop.f32.mrb[0].mxu0
      %v984 = vadd.f32 0.0, %v983
      %v985 = vpop.f32.mrb[0].mxu0
      %986 = vmatprep.mubr.f32.mxu0 %v229
      %987 = vmatmul.mubr.f32.gmra.mrb[0].mxu0 %v228
      %v988 = vpop.f32.mrb[0].mxu0
      %v989 = vadd.f32 0.0, %v988
      %v990 = vpop.f32.mrb[0].mxu0
      %991 = vmatprep.mubr.f32.mxu0 %v232
      %992 = vmatmul.mubr.f32.gmra.mrb[0].mxu0 %v231
      %v993 = vpop.f32.mrb[0].mxu0
      %v994 = vadd.f32 0.0, %v993
      %v995 = vpop.f32.mrb[0].mxu0
      %996 = vmatprep.mubr.f32.mxu0 %v235
      %997 = vmatmul.mubr.f32.gmra.mrb[0].mxu0 %v234
      %v998 = vpop.f32.mrb[0].mxu0
      %v999 = vadd.f32 0.0, %v998
      %v1000 = vpop.f32.mrb[0].mxu0
      %1001 = vmatprep.mubr.f32.mxu0 %v238
      %1002 = vmatmul.mubr.f32.gmra.mrb[0].mxu0 %v237
      %v1003 = vpop.f32.mrb[0].mxu0
      %v1004 = vadd.f32 0.0, %v1003
      %v1005 = vpop.f32.mrb[0].mxu0
      %1006 = vmatprep.mubr.f32.mxu0 %v241
      %1007 = vmatmul.mubr.f32.gmra.mrb[0].mxu0 %v240
      %v1008 = vpop.f32.mrb[0].mxu0
      %v1009 = vadd.f32 0.0, %v1008
      %v1010 = vpop.f32.mrb[0].mxu0
      %1011 = vmatprep.mubr.f32.mxu0 %v244
      %1012 = vmatmul.mubr.f32.gmra.mrb[0].mxu0 %v243
      %v1013 = vpop.f32.mrb[0].mxu0
      %v1014 = vadd.f32 0.0, %v1013
      %v1015 = vpop.f32.mrb[0].mxu0
      %1016 = vmatprep.mubr.f32.mxu0 %v247
      %1017 = vmatmul.mubr.f32.gmra.mrb[0].mxu0 %v246
      %v1018 = vpop.f32.mrb[0].mxu0
      %v1019 = vadd.f32 0.0, %v1018
      %v1020 = vpop.f32.mrb[0].mxu0
      %1021 = vmatprep.mubr.f32.mxu0 %v250
      %1022 = vmatmul.mubr.f32.gmra.mrb[0].mxu0 %v249
      %v1023 = vpop.f32.mrb[0].mxu0
      %v1024 = vadd.f32 0.0, %v1023
      %v1025 = vpop.f32.mrb[0].mxu0
      %1026 = vmatprep.mubr.f32.mxu0 %v253
      %1027 = vmatmul.mubr.f32.gmra.mrb[0].mxu0 %v252
      %v1028 = vpop.f32.mrb[0].mxu0
      %v1029 = vadd.f32 0.0, %v1028
      %v1030 = vpop.f32.mrb[0].mxu0
      %1031 = vmatprep.mubr.f32.mxu0 %v256
      %1032 = vmatmul.mubr.f32.gmra.mrb[0].mxu0 %v255
      %v1033 = vpop.f32.mrb[0].mxu0
      %v1034 = vadd.f32 0.0, %v1033
      %v1035 = vpop.f32.mrb[0].mxu0
      %1036 = vmatprep.mubr.f32.mxu0 %v259
      %1037 = vmatmul.mubr.f32.gmra.mrb[0].mxu0 %v258
      %v1038 = vpop.f32.mrb[0].mxu0
      %v1039 = vadd.f32 0.0, %v1038
      %v1040 = vpop.f32.mrb[0].mxu0
      %1041 = vmatprep.mubr.f32.mxu0 %v262
      %1042 = vmatmul.mubr.f32.gmra.mrb[0].mxu0 %v261
      %v1043 = vpop.f32.mrb[0].mxu0
      %v1044 = vadd.f32 0.0, %v1043
      %v1045 = vpop.f32.mrb[0].mxu0
      %1046 = vmatprep.mubr.f32.mxu0 %v265
      %1047 = vmatmul.mubr.f32.gmra.mrb[0].mxu0 %v264
      %v1048 = vpop.f32.mrb[0].mxu0
      %v1049 = vadd.f32 0.0, %v1048
      %v1050 = vpop.f32.mrb[0].mxu0
      %1051 = vmatprep.mubr.f32.mxu0 %v268
      %1052 = vmatmul.mubr.f32.gmra.mrb[0].mxu0 %v267
      %v1053 = vpop.f32.mrb[0].mxu0
      %v1054 = vadd.f32 0.0, %v1053
      %v1055 = vpop.f32.mrb[0].mxu0
      %1056 = vmatprep.mubr.f32.mxu0 %v271
      %1057 = vmatmul.mubr.f32.gmra.mrb[0].mxu0 %v270
      %v1058 = vpop.f32.mrb[0].mxu0
      %v1059 = vadd.f32 0.0, %v1058
      %v1060 = vpop.f32.mrb[0].mxu0
      %1061 = vmatprep.mubr.f32.mxu0 %v274
      %1062 = vmatmul.mubr.f32.gmra.mrb[0].mxu0 %v273
      %v1063 = vpop.f32.mrb[0].mxu0
      %v1064 = vadd.f32 0.0, %v1063
      %v1065 = vpop.f32.mrb[0].mxu0
      %1066 = vmatprep.mubr.f32.mxu0 %v277
      %1067 = vmatmul.mubr.f32.gmra.mrb[0].mxu0 %v276
      %v1068 = vpop.f32.mrb[0].mxu0
      %v1069 = vadd.f32 0.0, %v1068
      %v1070 = vpop.f32.mrb[0].mxu0
      %1071 = vmatprep.mubr.f32.mxu0 %v280
      %1072 = vmatmul.mubr.f32.gmra.mrb[0].mxu0 %v279
      %v1073 = vpop.f32.mrb[0].mxu0
      %v1074 = vadd.f32 0.0, %v1073
      %v1075 = vpop.f32.mrb[0].mxu0
      %1076 = vmatprep.mubr.f32.mxu0 %v283
      %1077 = vmatmul.mubr.f32.gmra.mrb[0].mxu0 %v282
      %v1078 = vpop.f32.mrb[0].mxu0
      %v1079 = vadd.f32 0.0, %v1078
      %v1080 = vpop.f32.mrb[0].mxu0
      %1081 = vmatprep.mubr.f32.mxu0 %v286
      %1082 = vmatmul.mubr.f32.gmra.mrb[0].mxu0 %v285
      %v1083 = vpop.f32.mrb[0].mxu0
      %v1084 = vadd.f32 0.0, %v1083
      %v1085 = vpop.f32.mrb[0].mxu0
      %1086 = vmatprep.mubr.f32.mxu0 %v289
      %1087 = vmatmul.mubr.f32.gmra.mrb[0].mxu0 %v288
      %v1088 = vpop.f32.mrb[0].mxu0
      %v1089 = vadd.f32 0.0, %v1088
      %v1090 = vpop.f32.mrb[0].mxu0
      %1091 = vmatprep.mubr.f32.mxu0 %v292
      %1092 = vmatmul.mubr.f32.gmra.mrb[0].mxu0 %v291
      %v1093 = vpop.f32.mrb[0].mxu0
      %v1094 = vadd.f32 0.0, %v1093
      %v1095 = vpop.f32.mrb[0].mxu0
      %1096 = vdwg.mxu0
      %1097 = vmatprep.subr.mxu0 0.0
      %1098 = vmatpush1.msra.mxu0 %v856
      %1099 = vmatprep.subr.mxu0 0.0
      %1100 = vmatpush1.msra.mxu0 %v857
      %1101 = vmatprep.subr.mxu0 0.0
      %1102 = vmatpush1.msra.mxu0 %v858
      %1103 = vmatprep.subr.mxu0 0.0
      %1104 = vmatpush1.msra.mxu0 %v859
      %1105 = vmatprep.subr.mxu0 0.0
      %1106 = vmatpush1.msra.mxu0 %v860
      %1107 = vmatprep.subr.mxu0 0.0
      %1108 = vmatpush1.msra.mxu0 %v861
      %1109 = vmatprep.subr.mxu0 0.0
      %1110 = vmatpush1.msra.mxu0 %v862
      %1111 = vmatprep.subr.mxu0 0.0
      %1112 = vmatpush1.msra.mxu0 %v863
      %1113 = vmatprep.subr.mxu0 0.0
      %1114 = vmatpush1.msra.mxu0 %v864
      %1115 = vmatprep.subr.mxu0 0.0
      %1116 = vmatpush1.msra.mxu0 %v865
      %1117 = vmatprep.subr.mxu0 0.0
      %1118 = vmatpush1.msra.mxu0 %v866
      %1119 = vmatprep.subr.mxu0 0.0
      %1120 = vmatpush1.msra.mxu0 %v867
      %1121 = vmatprep.subr.mxu0 0.0
      %1122 = vmatpush1.msra.mxu0 %v868
      %1123 = vmatprep.subr.mxu0 0.0
      %1124 = vmatpush1.msra.mxu0 %v869
      %1125 = vmatprep.subr.mxu0 0.0
      %1126 = vmatpush1.msra.mxu0 %v870
      %1127 = vmatprep.subr.mxu0 0.0
      %1128 = vmatpush1.msra.mxu0 %v871
      %1129 = vmatprep.subr.mxu0 0.0
      %1130 = vmatpush1.msra.mxu0 0.0
      %1131 = vmatprep.subr.mxu0 0.0
      %1132 = vmatpush1.msra.mxu0 0.0
      %1133 = vmatprep.subr.mxu0 0.0
      %1134 = vmatpush1.msra.mxu0 0.0
      %1135 = vmatprep.subr.mxu0 0.0
      %1136 = vmatpush1.msra.mxu0 0.0
      %1137 = vmatprep.subr.mxu0 0.0
      %1138 = vmatpush1.msra.mxu0 0.0
      %1139 = vmatprep.subr.mxu0 0.0
      %1140 = vmatpush1.msra.mxu0 0.0
      %1141 = vmatprep.subr.mxu0 0.0
      %1142 = vmatpush1.msra.mxu0 0.0
      %1143 = vmatprep.subr.mxu0 0.0
      %1144 = vmatpush1.msra.mxu0 0.0
      %1145 = vmatprep.subr.mxu0 0.0
      %1146 = vmatpush1.msra.mxu0 0.0
      %1147 = vmatprep.subr.mxu0 0.0
      %1148 = vmatpush1.msra.mxu0 0.0
      %1149 = vmatprep.subr.mxu0 0.0
      %1150 = vmatpush1.msra.mxu0 0.0
      %1151 = vmatprep.subr.mxu0 0.0
      %1152 = vmatpush1.msra.mxu0 0.0
      %1153 = vmatprep.subr.mxu0 0.0
      %1154 = vmatpush1.msra.mxu0 0.0
      %1155 = vmatprep.subr.mxu0 0.0
      %1156 = vmatpush1.msra.mxu0 0.0
      %1157 = vmatprep.subr.mxu0 0.0
      %1158 = vmatpush1.msra.mxu0 0.0
      %1159 = vmatprep.subr.mxu0 0.0
      %1160 = vmatpush1.msra.mxu0 0.0
      %1161 = vmatprep.mubr.f32.mxu0 0.0
      %1162 = vmatmul.mubr.f32.gmra.mrb[0].mxu0 %v200
      %v1163 = vpop.f32.mrb[0].mxu0
      %v1164 = vadd.f32 %v939, %v1163
      %v1165 = vpop.f32.mrb[0].mxu0
      %1166 = vmatprep.mubr.f32.mxu0 0.0
      %1167 = vmatmul.mubr.f32.gmra.mrb[0].mxu0 %v203
      %v1168 = vpop.f32.mrb[0].mxu0
      %v1169 = vadd.f32 %v944, %v1168
      %v1170 = vpop.f32.mrb[0].mxu0
      %1171 = vmatprep.mubr.f32.mxu0 0.0
      %1172 = vmatmul.mubr.f32.gmra.mrb[0].mxu0 %v206
      %v1173 = vpop.f32.mrb[0].mxu0
      %v1174 = vadd.f32 %v949, %v1173
      %v1175 = vpop.f32.mrb[0].mxu0
      %1176 = vmatprep.mubr.f32.mxu0 0.0
      %1177 = vmatmul.mubr.f32.gmra.mrb[0].mxu0 %v209
      %v1178 = vpop.f32.mrb[0].mxu0
      %v1179 = vadd.f32 %v954, %v1178
      %v1180 = vpop.f32.mrb[0].mxu0
      %1181 = vmatprep.mubr.f32.mxu0 0.0
      %1182 = vmatmul.mubr.f32.gmra.mrb[0].mxu0 %v212
      %v1183 = vpop.f32.mrb[0].mxu0
      %v1184 = vadd.f32 %v959, %v1183
      %v1185 = vpop.f32.mrb[0].mxu0
      %1186 = vmatprep.mubr.f32.mxu0 0.0
      %1187 = vmatmul.mubr.f32.gmra.mrb[0].mxu0 %v215
      %v1188 = vpop.f32.mrb[0].mxu0
      %v1189 = vadd.f32 %v964, %v1188
      %v1190 = vpop.f32.mrb[0].mxu0
      %1191 = vmatprep.mubr.f32.mxu0 0.0
      %1192 = vmatmul.mubr.f32.gmra.mrb[0].mxu0 %v218
      %v1193 = vpop.f32.mrb[0].mxu0
      %v1194 = vadd.f32 %v969, %v1193
      %v1195 = vpop.f32.mrb[0].mxu0
      %1196 = vmatprep.mubr.f32.mxu0 0.0
      %1197 = vmatmul.mubr.f32.gmra.mrb[0].mxu0 %v221
      %v1198 = vpop.f32.mrb[0].mxu0
      %v1199 = vadd.f32 %v974, %v1198
      %v1200 = vpop.f32.mrb[0].mxu0
      %1201 = vmatprep.mubr.f32.mxu0 0.0
      %1202 = vmatmul.mubr.f32.gmra.mrb[0].mxu0 %v224
      %v1203 = vpop.f32.mrb[0].mxu0
      %v1204 = vadd.f32 %v979, %v1203
      %v1205 = vpop.f32.mrb[0].mxu0
      %1206 = vmatprep.mubr.f32.mxu0 0.0
      %1207 = vmatmul.mubr.f32.gmra.mrb[0].mxu0 %v227
      %v1208 = vpop.f32.mrb[0].mxu0
      %v1209 = vadd.f32 %v984, %v1208
      %v1210 = vpop.f32.mrb[0].mxu0
      %1211 = vmatprep.mubr.f32.mxu0 0.0
      %1212 = vmatmul.mubr.f32.gmra.mrb[0].mxu0 %v230
      %v1213 = vpop.f32.mrb[0].mxu0
      %v1214 = vadd.f32 %v989, %v1213
      %v1215 = vpop.f32.mrb[0].mxu0
      %1216 = vmatprep.mubr.f32.mxu0 0.0
      %1217 = vmatmul.mubr.f32.gmra.mrb[0].mxu0 %v233
      %v1218 = vpop.f32.mrb[0].mxu0
      %v1219 = vadd.f32 %v994, %v1218
      %v1220 = vpop.f32.mrb[0].mxu0
      %1221 = vmatprep.mubr.f32.mxu0 0.0
      %1222 = vmatmul.mubr.f32.gmra.mrb[0].mxu0 %v236
      %v1223 = vpop.f32.mrb[0].mxu0
      %v1224 = vadd.f32 %v999, %v1223
      %v1225 = vpop.f32.mrb[0].mxu0
      %1226 = vmatprep.mubr.f32.mxu0 0.0
      %1227 = vmatmul.mubr.f32.gmra.mrb[0].mxu0 %v239
      %v1228 = vpop.f32.mrb[0].mxu0
      %v1229 = vadd.f32 %v1004, %v1228
      %v1230 = vpop.f32.mrb[0].mxu0
      %1231 = vmatprep.mubr.f32.mxu0 0.0
      %1232 = vmatmul.mubr.f32.gmra.mrb[0].mxu0 %v242
      %v1233 = vpop.f32.mrb[0].mxu0
      %v1234 = vadd.f32 %v1009, %v1233
      %v1235 = vpop.f32.mrb[0].mxu0
      %1236 = vmatprep.mubr.f32.mxu0 0.0
      %1237 = vmatmul.mubr.f32.gmra.mrb[0].mxu0 %v245
      %v1238 = vpop.f32.mrb[0].mxu0
      %v1239 = vadd.f32 %v1014, %v1238
      %v1240 = vpop.f32.mrb[0].mxu0
      %1241 = vmatprep.mubr.f32.mxu0 0.0
      %1242 = vmatmul.mubr.f32.gmra.mrb[0].mxu0 %v248
      %v1243 = vpop.f32.mrb[0].mxu0
      %v1244 = vadd.f32 %v1019, %v1243
      %v1245 = vpop.f32.mrb[0].mxu0
      %1246 = vmatprep.mubr.f32.mxu0 0.0
      %1247 = vmatmul.mubr.f32.gmra.mrb[0].mxu0 %v251
      %v1248 = vpop.f32.mrb[0].mxu0
      %v1249 = vadd.f32 %v1024, %v1248
      %v1250 = vpop.f32.mrb[0].mxu0
      %1251 = vmatprep.mubr.f32.mxu0 0.0
      %1252 = vmatmul.mubr.f32.gmra.mrb[0].mxu0 %v254
      %v1253 = vpop.f32.mrb[0].mxu0
      %v1254 = vadd.f32 %v1029, %v1253
      %v1255 = vpop.f32.mrb[0].mxu0
      %1256 = vmatprep.mubr.f32.mxu0 0.0
      %1257 = vmatmul.mubr.f32.gmra.mrb[0].mxu0 %v257
      %v1258 = vpop.f32.mrb[0].mxu0
      %v1259 = vadd.f32 %v1034, %v1258
      %v1260 = vpop.f32.mrb[0].mxu0
      %1261 = vmatprep.mubr.f32.mxu0 0.0
      %1262 = vmatmul.mubr.f32.gmra.mrb[0].mxu0 %v260
      %v1263 = vpop.f32.mrb[0].mxu0
      %v1264 = vadd.f32 %v1039, %v1263
      %v1265 = vpop.f32.mrb[0].mxu0
      %1266 = vmatprep.mubr.f32.mxu0 0.0
      %1267 = vmatmul.mubr.f32.gmra.mrb[0].mxu0 %v263
      %v1268 = vpop.f32.mrb[0].mxu0
      %v1269 = vadd.f32 %v1044, %v1268
      %v1270 = vpop.f32.mrb[0].mxu0
      %1271 = vmatprep.mubr.f32.mxu0 0.0
      %1272 = vmatmul.mubr.f32.gmra.mrb[0].mxu0 %v266
      %v1273 = vpop.f32.mrb[0].mxu0
      %v1274 = vadd.f32 %v1049, %v1273
      %v1275 = vpop.f32.mrb[0].mxu0
      %1276 = vmatprep.mubr.f32.mxu0 0.0
      %1277 = vmatmul.mubr.f32.gmra.mrb[0].mxu0 %v269
      %v1278 = vpop.f32.mrb[0].mxu0
      %v1279 = vadd.f32 %v1054, %v1278
      %v1280 = vpop.f32.mrb[0].mxu0
      %1281 = vmatprep.mubr.f32.mxu0 0.0
      %1282 = vmatmul.mubr.f32.gmra.mrb[0].mxu0 %v272
      %v1283 = vpop.f32.mrb[0].mxu0
      %v1284 = vadd.f32 %v1059, %v1283
      %v1285 = vpop.f32.mrb[0].mxu0
      %1286 = vmatprep.mubr.f32.mxu0 0.0
      %1287 = vmatmul.mubr.f32.gmra.mrb[0].mxu0 %v275
      %v1288 = vpop.f32.mrb[0].mxu0
      %v1289 = vadd.f32 %v1064, %v1288
      %v1290 = vpop.f32.mrb[0].mxu0
      %1291 = vmatprep.mubr.f32.mxu0 0.0
      %1292 = vmatmul.mubr.f32.gmra.mrb[0].mxu0 %v278
      %v1293 = vpop.f32.mrb[0].mxu0
      %v1294 = vadd.f32 %v1069, %v1293
      %v1295 = vpop.f32.mrb[0].mxu0
      %1296 = vmatprep.mubr.f32.mxu0 0.0
      %1297 = vmatmul.mubr.f32.gmra.mrb[0].mxu0 %v281
      %v1298 = vpop.f32.mrb[0].mxu0
      %v1299 = vadd.f32 %v1074, %v1298
      %v1300 = vpop.f32.mrb[0].mxu0
      %1301 = vmatprep.mubr.f32.mxu0 0.0
      %1302 = vmatmul.mubr.f32.gmra.mrb[0].mxu0 %v284
      %v1303 = vpop.f32.mrb[0].mxu0
      %v1304 = vadd.f32 %v1079, %v1303
      %v1305 = vpop.f32.mrb[0].mxu0
      %1306 = vmatprep.mubr.f32.mxu0 0.0
      %1307 = vmatmul.mubr.f32.gmra.mrb[0].mxu0 %v287
      %v1308 = vpop.f32.mrb[0].mxu0
      %v1309 = vadd.f32 %v1084, %v1308
      %v1310 = vpop.f32.mrb[0].mxu0
      %1311 = vmatprep.mubr.f32.mxu0 0.0
      %1312 = vmatmul.mubr.f32.gmra.mrb[0].mxu0 %v290
      %v1313 = vpop.f32.mrb[0].mxu0
      %v1314 = vadd.f32 %v1089, %v1313
      %v1315 = vpop.f32.mrb[0].mxu0
      %1316 = vmatprep.mubr.f32.mxu0 0.0
      %1317 = vmatmul.mubr.f32.gmra.mrb[0].mxu0 %v293
      %v1318 = vpop.f32.mrb[0].mxu0
      %v1319 = vadd.f32 %v1094, %v1318
      %v1320 = vpop.f32.mrb[0].mxu0
      %1321 = vdwg.mxu0
      %v1322 = vld [vmem:[%s3] sm:$0xff]
      %v1323 = vld [vmem:[%s3 + $0x8] sm:$0xff]
      %v1324 = vld [vmem:[%s3 + $0x10] sm:$0xff]
      %v1325 = vld [vmem:[%s3 + $0x18] sm:$0xff]
      %v1326 = vld [vmem:[%s3 + $0x20] sm:$0xff]
      %v1327 = vld [vmem:[%s3 + $0x28] sm:$0xff]
      %v1328 = vld [vmem:[%s3 + $0x30] sm:$0xff]
      %v1329 = vld [vmem:[%s3 + $0x38] sm:$0xff]
      %v1330 = vld [vmem:[%s3 + $0x40] sm:$0xff]
      %v1331 = vld [vmem:[%s3 + $0x48] sm:$0xff]
      %v1332 = vld [vmem:[%s3 + $0x50] sm:$0xff]
      %v1333 = vld [vmem:[%s3 + $0x58] sm:$0xff]
      %v1334 = vld [vmem:[%s3 + $0x60] sm:$0xff]
      %v1335 = vld [vmem:[%s3 + $0x68] sm:$0xff]
      %v1336 = vld [vmem:[%s3 + $0x70] sm:$0xff]
      %v1337 = vld [vmem:[%s3 + $0x78] sm:$0xff]
      %v1338 = vld [vmem:[%s3 + $0x80] sm:$0xff]
      %v1339 = vld [vmem:[%s3 + $0x88] sm:$0xff]
      %v1340 = vld [vmem:[%s3 + $0x90] sm:$0xff]
      %v1341 = vld [vmem:[%s3 + $0x98] sm:$0xff]
      %v1342 = vld [vmem:[%s3 + $0xa0] sm:$0xff]
      %v1343 = vld [vmem:[%s3 + $0xa8] sm:$0xff]
      %v1344 = vld [vmem:[%s3 + $0xb0] sm:$0xff]
      %v1345 = vld [vmem:[%s3 + $0xb8] sm:$0xff]
      %v1346 = vld [vmem:[%s3 + $0xc0] sm:$0xff]
      %v1347 = vld [vmem:[%s3 + $0xc8] sm:$0xff]
      %v1348 = vld [vmem:[%s3 + $0xd0] sm:$0xff]
      %v1349 = vld [vmem:[%s3 + $0xd8] sm:$0xff]
      %v1350 = vld [vmem:[%s3 + $0xe0] sm:$0xff]
      %v1351 = vld [vmem:[%s3 + $0xe8] sm:$0xff]
      %v1352 = vld [vmem:[%s3 + $0xf0] sm:$0xff]
      %v1353 = vld [vmem:[%s3 + $0xf8] sm:$0xff]
      %v1354 = vld [vmem:[%s3 + $0x100] sm:$0xff]
      %v1355 = vld [vmem:[%s3 + $0x108] sm:$0xff]
      %v1356 = vld [vmem:[%s3 + $0x110] sm:$0xff]
      %v1357 = vld [vmem:[%s3 + $0x118] sm:$0xff]
      %v1358 = vld [vmem:[%s3 + $0x120] sm:$0xff]
      %v1359 = vld [vmem:[%s3 + $0x128] sm:$0xff]
      %v1360 = vld [vmem:[%s3 + $0x130] sm:$0xff]
      %v1361 = vld [vmem:[%s3 + $0x138] sm:$0xff]
      %v1362 = vld [vmem:[%s3 + $0x140] sm:$0xff]
      %v1363 = vld [vmem:[%s3 + $0x148] sm:$0xff]
      %v1364 = vld [vmem:[%s3 + $0x150] sm:$0xff]
      %v1365 = vld [vmem:[%s3 + $0x158] sm:$0xff]
      %v1366 = vld [vmem:[%s3 + $0x160] sm:$0xff]
      %v1367 = vld [vmem:[%s3 + $0x168] sm:$0xff]
      %v1368 = vld [vmem:[%s3 + $0x170] sm:$0xff]
      %v1369 = vld [vmem:[%s3 + $0x178] sm:$0xff]
      %1370 = vmatprep.subr.mxu0 0.0
      %1371 = vmatpush1.msra.mxu0 %v1322
      %1372 = vmatprep.subr.mxu0 0.0
      %1373 = vmatpush1.msra.mxu0 %v1323
      %1374 = vmatprep.subr.mxu0 0.0
      %1375 = vmatpush1.msra.mxu0 %v1324
      %1376 = vmatprep.subr.mxu0 0.0
      %1377 = vmatpush1.msra.mxu0 %v1325
      %1378 = vmatprep.subr.mxu0 0.0
      %1379 = vmatpush1.msra.mxu0 %v1326
      %1380 = vmatprep.subr.mxu0 0.0
      %1381 = vmatpush1.msra.mxu0 %v1327
      %1382 = vmatprep.subr.mxu0 0.0
      %1383 = vmatpush1.msra.mxu0 %v1328
      %1384 = vmatprep.subr.mxu0 0.0
      %1385 = vmatpush1.msra.mxu0 %v1329
      %1386 = vmatprep.subr.mxu0 0.0
      %1387 = vmatpush1.msra.mxu0 %v1330
      %1388 = vmatprep.subr.mxu0 0.0
      %1389 = vmatpush1.msra.mxu0 %v1331
      %1390 = vmatprep.subr.mxu0 0.0
      %1391 = vmatpush1.msra.mxu0 %v1332
      %1392 = vmatprep.subr.mxu0 0.0
      %1393 = vmatpush1.msra.mxu0 %v1333
      %1394 = vmatprep.subr.mxu0 0.0
      %1395 = vmatpush1.msra.mxu0 %v1334
      %1396 = vmatprep.subr.mxu0 0.0
      %1397 = vmatpush1.msra.mxu0 %v1335
      %1398 = vmatprep.subr.mxu0 0.0
      %1399 = vmatpush1.msra.mxu0 %v1336
      %1400 = vmatprep.subr.mxu0 0.0
      %1401 = vmatpush1.msra.mxu0 %v1337
      %1402 = vmatprep.subr.mxu0 0.0
      %1403 = vmatpush1.msra.mxu0 %v1338
      %1404 = vmatprep.subr.mxu0 0.0
      %1405 = vmatpush1.msra.mxu0 %v1339
      %1406 = vmatprep.subr.mxu0 0.0
      %1407 = vmatpush1.msra.mxu0 %v1340
      %1408 = vmatprep.subr.mxu0 0.0
      %1409 = vmatpush1.msra.mxu0 %v1341
      %1410 = vmatprep.subr.mxu0 0.0
      %1411 = vmatpush1.msra.mxu0 %v1342
      %1412 = vmatprep.subr.mxu0 0.0
      %1413 = vmatpush1.msra.mxu0 %v1343
      %1414 = vmatprep.subr.mxu0 0.0
      %1415 = vmatpush1.msra.mxu0 %v1344
      %1416 = vmatprep.subr.mxu0 0.0
      %1417 = vmatpush1.msra.mxu0 %v1345
      %1418 = vmatprep.subr.mxu0 0.0
      %1419 = vmatpush1.msra.mxu0 %v1346
      %1420 = vmatprep.subr.mxu0 0.0
      %1421 = vmatpush1.msra.mxu0 %v1347
      %1422 = vmatprep.subr.mxu0 0.0
      %1423 = vmatpush1.msra.mxu0 %v1348
      %1424 = vmatprep.subr.mxu0 0.0
      %1425 = vmatpush1.msra.mxu0 %v1349
      %1426 = vmatprep.subr.mxu0 0.0
      %1427 = vmatpush1.msra.mxu0 %v1350
      %1428 = vmatprep.subr.mxu0 0.0
      %1429 = vmatpush1.msra.mxu0 %v1351
      %1430 = vmatprep.subr.mxu0 0.0
      %1431 = vmatpush1.msra.mxu0 %v1352
      %1432 = vmatprep.subr.mxu0 0.0
      %1433 = vmatpush1.msra.mxu0 %v1353
      %1434 = vmatprep.mubr.f32.mxu0 %v199
      %1435 = vmatmul.mubr.f32.gmra.mrb[0].mxu0 %v198
      %v1436 = vpop.f32.mrb[0].mxu0
      %v1437 = vadd.f32 0.0, %v1436
      %v1438 = vpop.f32.mrb[0].mxu0
      %1439 = vmatprep.mubr.f32.mxu0 %v202
      %1440 = vmatmul.mubr.f32.gmra.mrb[0].mxu0 %v201
      %v1441 = vpop.f32.mrb[0].mxu0
      %v1442 = vadd.f32 0.0, %v1441
      %v1443 = vpop.f32.mrb[0].mxu0
      %1444 = vmatprep.mubr.f32.mxu0 %v205
      %1445 = vmatmul.mubr.f32.gmra.mrb[0].mxu0 %v204
      %v1446 = vpop.f32.mrb[0].mxu0
      %v1447 = vadd.f32 0.0, %v1446
      %v1448 = vpop.f32.mrb[0].mxu0
      %1449 = vmatprep.mubr.f32.mxu0 %v208
      %1450 = vmatmul.mubr.f32.gmra.mrb[0].mxu0 %v207
      %v1451 = vpop.f32.mrb[0].mxu0
      %v1452 = vadd.f32 0.0, %v1451
      %v1453 = vpop.f32.mrb[0].mxu0
      %1454 = vmatprep.mubr.f32.mxu0 %v211
      %1455 = vmatmul.mubr.f32.gmra.mrb[0].mxu0 %v210
      %v1456 = vpop.f32.mrb[0].mxu0
      %v1457 = vadd.f32 0.0, %v1456
      %v1458 = vpop.f32.mrb[0].mxu0
      %1459 = vmatprep.mubr.f32.mxu0 %v214
      %1460 = vmatmul.mubr.f32.gmra.mrb[0].mxu0 %v213
      %v1461 = vpop.f32.mrb[0].mxu0
      %v1462 = vadd.f32 0.0, %v1461
      %v1463 = vpop.f32.mrb[0].mxu0
      %1464 = vmatprep.mubr.f32.mxu0 %v217
      %1465 = vmatmul.mubr.f32.gmra.mrb[0].mxu0 %v216
      %v1466 = vpop.f32.mrb[0].mxu0
      %v1467 = vadd.f32 0.0, %v1466
      %v1468 = vpop.f32.mrb[0].mxu0
      %1469 = vmatprep.mubr.f32.mxu0 %v220
      %1470 = vmatmul.mubr.f32.gmra.mrb[0].mxu0 %v219
      %v1471 = vpop.f32.mrb[0].mxu0
      %v1472 = vadd.f32 0.0, %v1471
      %v1473 = vpop.f32.mrb[0].mxu0
      %1474 = vmatprep.mubr.f32.mxu0 %v223
      %1475 = vmatmul.mubr.f32.gmra.mrb[0].mxu0 %v222
      %v1476 = vpop.f32.mrb[0].mxu0
      %v1477 = vadd.f32 0.0, %v1476
      %v1478 = vpop.f32.mrb[0].mxu0
      %1479 = vmatprep.mubr.f32.mxu0 %v226
      %1480 = vmatmul.mubr.f32.gmra.mrb[0].mxu0 %v225
      %v1481 = vpop.f32.mrb[0].mxu0
      %v1482 = vadd.f32 0.0, %v1481
      %v1483 = vpop.f32.mrb[0].mxu0
      %1484 = vmatprep.mubr.f32.mxu0 %v229
      %1485 = vmatmul.mubr.f32.gmra.mrb[0].mxu0 %v228
      %v1486 = vpop.f32.mrb[0].mxu0
      %v1487 = vadd.f32 0.0, %v1486
      %v1488 = vpop.f32.mrb[0].mxu0
      %1489 = vmatprep.mubr.f32.mxu0 %v232
      %1490 = vmatmul.mubr.f32.gmra.mrb[0].mxu0 %v231
      %v1491 = vpop.f32.mrb[0].mxu0
      %v1492 = vadd.f32 0.0, %v1491
      %v1493 = vpop.f32.mrb[0].mxu0
      %1494 = vmatprep.mubr.f32.mxu0 %v235
      %1495 = vmatmul.mubr.f32.gmra.mrb[0].mxu0 %v234
      %v1496 = vpop.f32.mrb[0].mxu0
      %v1497 = vadd.f32 0.0, %v1496
      %v1498 = vpop.f32.mrb[0].mxu0
      %1499 = vmatprep.mubr.f32.mxu0 %v238
      %1500 = vmatmul.mubr.f32.gmra.mrb[0].mxu0 %v237
      %v1501 = vpop.f32.mrb[0].mxu0
      %v1502 = vadd.f32 0.0, %v1501
      %v1503 = vpop.f32.mrb[0].mxu0
      %1504 = vmatprep.mubr.f32.mxu0 %v241
      %1505 = vmatmul.mubr.f32.gmra.mrb[0].mxu0 %v240
      %v1506 = vpop.f32.mrb[0].mxu0
      %v1507 = vadd.f32 0.0, %v1506
      %v1508 = vpop.f32.mrb[0].mxu0
      %1509 = vmatprep.mubr.f32.mxu0 %v244
      %1510 = vmatmul.mubr.f32.gmra.mrb[0].mxu0 %v243
      %v1511 = vpop.f32.mrb[0].mxu0
      %v1512 = vadd.f32 0.0, %v1511
      %v1513 = vpop.f32.mrb[0].mxu0
      %1514 = vmatprep.mubr.f32.mxu0 %v247
      %1515 = vmatmul.mubr.f32.gmra.mrb[0].mxu0 %v246
      %v1516 = vpop.f32.mrb[0].mxu0
      %v1517 = vadd.f32 0.0, %v1516
      %v1518 = vpop.f32.mrb[0].mxu0
      %1519 = vmatprep.mubr.f32.mxu0 %v250
      %1520 = vmatmul.mubr.f32.gmra.mrb[0].mxu0 %v249
      %v1521 = vpop.f32.mrb[0].mxu0
      %v1522 = vadd.f32 0.0, %v1521
      %v1523 = vpop.f32.mrb[0].mxu0
      %1524 = vmatprep.mubr.f32.mxu0 %v253
      %1525 = vmatmul.mubr.f32.gmra.mrb[0].mxu0 %v252
      %v1526 = vpop.f32.mrb[0].mxu0
      %v1527 = vadd.f32 0.0, %v1526
      %v1528 = vpop.f32.mrb[0].mxu0
      %1529 = vmatprep.mubr.f32.mxu0 %v256
      %1530 = vmatmul.mubr.f32.gmra.mrb[0].mxu0 %v255
      %v1531 = vpop.f32.mrb[0].mxu0
      %v1532 = vadd.f32 0.0, %v1531
      %v1533 = vpop.f32.mrb[0].mxu0
      %1534 = vmatprep.mubr.f32.mxu0 %v259
      %1535 = vmatmul.mubr.f32.gmra.mrb[0].mxu0 %v258
      %v1536 = vpop.f32.mrb[0].mxu0
      %v1537 = vadd.f32 0.0, %v1536
      %v1538 = vpop.f32.mrb[0].mxu0
      %1539 = vmatprep.mubr.f32.mxu0 %v262
      %1540 = vmatmul.mubr.f32.gmra.mrb[0].mxu0 %v261
      %v1541 = vpop.f32.mrb[0].mxu0
      %v1542 = vadd.f32 0.0, %v1541
      %v1543 = vpop.f32.mrb[0].mxu0
      %1544 = vmatprep.mubr.f32.mxu0 %v265
      %1545 = vmatmul.mubr.f32.gmra.mrb[0].mxu0 %v264
      %v1546 = vpop.f32.mrb[0].mxu0
      %v1547 = vadd.f32 0.0, %v1546
      %v1548 = vpop.f32.mrb[0].mxu0
      %1549 = vmatprep.mubr.f32.mxu0 %v268
      %1550 = vmatmul.mubr.f32.gmra.mrb[0].mxu0 %v267
      %v1551 = vpop.f32.mrb[0].mxu0
      %v1552 = vadd.f32 0.0, %v1551
      %v1553 = vpop.f32.mrb[0].mxu0
      %1554 = vmatprep.mubr.f32.mxu0 %v271
      %1555 = vmatmul.mubr.f32.gmra.mrb[0].mxu0 %v270
      %v1556 = vpop.f32.mrb[0].mxu0
      %v1557 = vadd.f32 0.0, %v1556
      %v1558 = vpop.f32.mrb[0].mxu0
      %1559 = vmatprep.mubr.f32.mxu0 %v274
      %1560 = vmatmul.mubr.f32.gmra.mrb[0].mxu0 %v273
      %v1561 = vpop.f32.mrb[0].mxu0
      %v1562 = vadd.f32 0.0, %v1561
      %v1563 = vpop.f32.mrb[0].mxu0
      %1564 = vmatprep.mubr.f32.mxu0 %v277
      %1565 = vmatmul.mubr.f32.gmra.mrb[0].mxu0 %v276
      %v1566 = vpop.f32.mrb[0].mxu0
      %v1567 = vadd.f32 0.0, %v1566
      %v1568 = vpop.f32.mrb[0].mxu0
      %1569 = vmatprep.mubr.f32.mxu0 %v280
      %1570 = vmatmul.mubr.f32.gmra.mrb[0].mxu0 %v279
      %v1571 = vpop.f32.mrb[0].mxu0
      %v1572 = vadd.f32 0.0, %v1571
      %v1573 = vpop.f32.mrb[0].mxu0
      %1574 = vmatprep.mubr.f32.mxu0 %v283
      %1575 = vmatmul.mubr.f32.gmra.mrb[0].mxu0 %v282
      %v1576 = vpop.f32.mrb[0].mxu0
      %v1577 = vadd.f32 0.0, %v1576
      %v1578 = vpop.f32.mrb[0].mxu0
      %1579 = vmatprep.mubr.f32.mxu0 %v286
      %1580 = vmatmul.mubr.f32.gmra.mrb[0].mxu0 %v285
      %v1581 = vpop.f32.mrb[0].mxu0
      %v1582 = vadd.f32 0.0, %v1581
      %v1583 = vpop.f32.mrb[0].mxu0
      %1584 = vmatprep.mubr.f32.mxu0 %v289
      %1585 = vmatmul.mubr.f32.gmra.mrb[0].mxu0 %v288
      %v1586 = vpop.f32.mrb[0].mxu0
      %v1587 = vadd.f32 0.0, %v1586
      %v1588 = vpop.f32.mrb[0].mxu0
      %1589 = vmatprep.mubr.f32.mxu0 %v292
      %1590 = vmatmul.mubr.f32.gmra.mrb[0].mxu0 %v291
      %v1591 = vpop.f32.mrb[0].mxu0
      %v1592 = vadd.f32 0.0, %v1591
      %v1593 = vpop.f32.mrb[0].mxu0
      %1594 = vdwg.mxu0
      %1595 = vmatprep.subr.mxu0 0.0
      %1596 = vmatpush1.msra.mxu0 %v1354
      %1597 = vmatprep.subr.mxu0 0.0
      %1598 = vmatpush1.msra.mxu0 %v1355
      %1599 = vmatprep.subr.mxu0 0.0
      %1600 = vmatpush1.msra.mxu0 %v1356
      %1601 = vmatprep.subr.mxu0 0.0
      %1602 = vmatpush1.msra.mxu0 %v1357
      %1603 = vmatprep.subr.mxu0 0.0
      %1604 = vmatpush1.msra.mxu0 %v1358
      %1605 = vmatprep.subr.mxu0 0.0
      %1606 = vmatpush1.msra.mxu0 %v1359
      %1607 = vmatprep.subr.mxu0 0.0
      %1608 = vmatpush1.msra.mxu0 %v1360
      %1609 = vmatprep.subr.mxu0 0.0
      %1610 = vmatpush1.msra.mxu0 %v1361
      %1611 = vmatprep.subr.mxu0 0.0
      %1612 = vmatpush1.msra.mxu0 %v1362
      %1613 = vmatprep.subr.mxu0 0.0
      %1614 = vmatpush1.msra.mxu0 %v1363
      %1615 = vmatprep.subr.mxu0 0.0
      %1616 = vmatpush1.msra.mxu0 %v1364
      %1617 = vmatprep.subr.mxu0 0.0
      %1618 = vmatpush1.msra.mxu0 %v1365
      %1619 = vmatprep.subr.mxu0 0.0
      %1620 = vmatpush1.msra.mxu0 %v1366
      %1621 = vmatprep.subr.mxu0 0.0
      %1622 = vmatpush1.msra.mxu0 %v1367
      %1623 = vmatprep.subr.mxu0 0.0
      %1624 = vmatpush1.msra.mxu0 %v1368
      %1625 = vmatprep.subr.mxu0 0.0
      %1626 = vmatpush1.msra.mxu0 %v1369
      %1627 = vmatprep.subr.mxu0 0.0
      %1628 = vmatpush1.msra.mxu0 0.0
      %1629 = vmatprep.subr.mxu0 0.0
      %1630 = vmatpush1.msra.mxu0 0.0
      %1631 = vmatprep.subr.mxu0 0.0
      %1632 = vmatpush1.msra.mxu0 0.0
      %1633 = vmatprep.subr.mxu0 0.0
      %1634 = vmatpush1.msra.mxu0 0.0
      %1635 = vmatprep.subr.mxu0 0.0
      %1636 = vmatpush1.msra.mxu0 0.0
      %1637 = vmatprep.subr.mxu0 0.0
      %1638 = vmatpush1.msra.mxu0 0.0
      %1639 = vmatprep.subr.mxu0 0.0
      %1640 = vmatpush1.msra.mxu0 0.0
      %1641 = vmatprep.subr.mxu0 0.0
      %1642 = vmatpush1.msra.mxu0 0.0
      %1643 = vmatprep.subr.mxu0 0.0
      %1644 = vmatpush1.msra.mxu0 0.0
      %1645 = vmatprep.subr.mxu0 0.0
      %1646 = vmatpush1.msra.mxu0 0.0
      %1647 = vmatprep.subr.mxu0 0.0
      %1648 = vmatpush1.msra.mxu0 0.0
      %1649 = vmatprep.subr.mxu0 0.0
      %1650 = vmatpush1.msra.mxu0 0.0
      %1651 = vmatprep.subr.mxu0 0.0
      %1652 = vmatpush1.msra.mxu0 0.0
      %1653 = vmatprep.subr.mxu0 0.0
      %1654 = vmatpush1.msra.mxu0 0.0
      %1655 = vmatprep.subr.mxu0 0.0
      %1656 = vmatpush1.msra.mxu0 0.0
      %1657 = vmatprep.subr.mxu0 0.0
      %1658 = vmatpush1.msra.mxu0 0.0
      %1659 = vmatprep.mubr.f32.mxu0 0.0
      %1660 = vmatmul.mubr.f32.gmra.mrb[0].mxu0 %v200
      %v1661 = vpop.f32.mrb[0].mxu0
      %v1662 = vadd.f32 %v1437, %v1661
      %v1663 = vpop.f32.mrb[0].mxu0
      %1664 = vmatprep.mubr.f32.mxu0 0.0
      %1665 = vmatmul.mubr.f32.gmra.mrb[0].mxu0 %v203
      %v1666 = vpop.f32.mrb[0].mxu0
      %v1667 = vadd.f32 %v1442, %v1666
      %v1668 = vpop.f32.mrb[0].mxu0
      %1669 = vmatprep.mubr.f32.mxu0 0.0
      %1670 = vmatmul.mubr.f32.gmra.mrb[0].mxu0 %v206
      %v1671 = vpop.f32.mrb[0].mxu0
      %v1672 = vadd.f32 %v1447, %v1671
      %v1673 = vpop.f32.mrb[0].mxu0
      %1674 = vmatprep.mubr.f32.mxu0 0.0
      %1675 = vmatmul.mubr.f32.gmra.mrb[0].mxu0 %v209
      %v1676 = vpop.f32.mrb[0].mxu0
      %v1677 = vadd.f32 %v1452, %v1676
      %v1678 = vpop.f32.mrb[0].mxu0
      %1679 = vmatprep.mubr.f32.mxu0 0.0
      %1680 = vmatmul.mubr.f32.gmra.mrb[0].mxu0 %v212
      %v1681 = vpop.f32.mrb[0].mxu0
      %v1682 = vadd.f32 %v1457, %v1681
      %v1683 = vpop.f32.mrb[0].mxu0
      %1684 = vmatprep.mubr.f32.mxu0 0.0
      %1685 = vmatmul.mubr.f32.gmra.mrb[0].mxu0 %v215
      %v1686 = vpop.f32.mrb[0].mxu0
      %v1687 = vadd.f32 %v1462, %v1686
      %v1688 = vpop.f32.mrb[0].mxu0
      %1689 = vmatprep.mubr.f32.mxu0 0.0
      %1690 = vmatmul.mubr.f32.gmra.mrb[0].mxu0 %v218
      %v1691 = vpop.f32.mrb[0].mxu0
      %v1692 = vadd.f32 %v1467, %v1691
      %v1693 = vpop.f32.mrb[0].mxu0
      %1694 = vmatprep.mubr.f32.mxu0 0.0
      %1695 = vmatmul.mubr.f32.gmra.mrb[0].mxu0 %v221
      %v1696 = vpop.f32.mrb[0].mxu0
      %v1697 = vadd.f32 %v1472, %v1696
      %v1698 = vpop.f32.mrb[0].mxu0
      %1699 = vmatprep.mubr.f32.mxu0 0.0
      %1700 = vmatmul.mubr.f32.gmra.mrb[0].mxu0 %v224
      %v1701 = vpop.f32.mrb[0].mxu0
      %v1702 = vadd.f32 %v1477, %v1701
      %v1703 = vpop.f32.mrb[0].mxu0
      %1704 = vmatprep.mubr.f32.mxu0 0.0
      %1705 = vmatmul.mubr.f32.gmra.mrb[0].mxu0 %v227
      %v1706 = vpop.f32.mrb[0].mxu0
      %v1707 = vadd.f32 %v1482, %v1706
      %v1708 = vpop.f32.mrb[0].mxu0
      %1709 = vmatprep.mubr.f32.mxu0 0.0
      %1710 = vmatmul.mubr.f32.gmra.mrb[0].mxu0 %v230
      %v1711 = vpop.f32.mrb[0].mxu0
      %v1712 = vadd.f32 %v1487, %v1711
      %v1713 = vpop.f32.mrb[0].mxu0
      %1714 = vmatprep.mubr.f32.mxu0 0.0
      %1715 = vmatmul.mubr.f32.gmra.mrb[0].mxu0 %v233
      %v1716 = vpop.f32.mrb[0].mxu0
      %v1717 = vadd.f32 %v1492, %v1716
      %v1718 = vpop.f32.mrb[0].mxu0
      %1719 = vmatprep.mubr.f32.mxu0 0.0
      %1720 = vmatmul.mubr.f32.gmra.mrb[0].mxu0 %v236
      %v1721 = vpop.f32.mrb[0].mxu0
      %v1722 = vadd.f32 %v1497, %v1721
      %v1723 = vpop.f32.mrb[0].mxu0
      %1724 = vmatprep.mubr.f32.mxu0 0.0
      %1725 = vmatmul.mubr.f32.gmra.mrb[0].mxu0 %v239
      %v1726 = vpop.f32.mrb[0].mxu0
      %v1727 = vadd.f32 %v1502, %v1726
      %v1728 = vpop.f32.mrb[0].mxu0
      %1729 = vmatprep.mubr.f32.mxu0 0.0
      %1730 = vmatmul.mubr.f32.gmra.mrb[0].mxu0 %v242
      %v1731 = vpop.f32.mrb[0].mxu0
      %v1732 = vadd.f32 %v1507, %v1731
      %v1733 = vpop.f32.mrb[0].mxu0
      %1734 = vmatprep.mubr.f32.mxu0 0.0
      %1735 = vmatmul.mubr.f32.gmra.mrb[0].mxu0 %v245
      %v1736 = vpop.f32.mrb[0].mxu0
      %v1737 = vadd.f32 %v1512, %v1736
      %v1738 = vpop.f32.mrb[0].mxu0
      %1739 = vmatprep.mubr.f32.mxu0 0.0
      %1740 = vmatmul.mubr.f32.gmra.mrb[0].mxu0 %v248
      %v1741 = vpop.f32.mrb[0].mxu0
      %v1742 = vadd.f32 %v1517, %v1741
      %v1743 = vpop.f32.mrb[0].mxu0
      %1744 = vmatprep.mubr.f32.mxu0 0.0
      %1745 = vmatmul.mubr.f32.gmra.mrb[0].mxu0 %v251
      %v1746 = vpop.f32.mrb[0].mxu0
      %v1747 = vadd.f32 %v1522, %v1746
      %v1748 = vpop.f32.mrb[0].mxu0
      %1749 = vmatprep.mubr.f32.mxu0 0.0
      %1750 = vmatmul.mubr.f32.gmra.mrb[0].mxu0 %v254
      %v1751 = vpop.f32.mrb[0].mxu0
      %v1752 = vadd.f32 %v1527, %v1751
      %v1753 = vpop.f32.mrb[0].mxu0
      %1754 = vmatprep.mubr.f32.mxu0 0.0
      %1755 = vmatmul.mubr.f32.gmra.mrb[0].mxu0 %v257
      %v1756 = vpop.f32.mrb[0].mxu0
      %v1757 = vadd.f32 %v1532, %v1756
      %v1758 = vpop.f32.mrb[0].mxu0
      %1759 = vmatprep.mubr.f32.mxu0 0.0
      %1760 = vmatmul.mubr.f32.gmra.mrb[0].mxu0 %v260
      %v1761 = vpop.f32.mrb[0].mxu0
      %v1762 = vadd.f32 %v1537, %v1761
      %v1763 = vpop.f32.mrb[0].mxu0
      %1764 = vmatprep.mubr.f32.mxu0 0.0
      %1765 = vmatmul.mubr.f32.gmra.mrb[0].mxu0 %v263
      %v1766 = vpop.f32.mrb[0].mxu0
      %v1767 = vadd.f32 %v1542, %v1766
      %v1768 = vpop.f32.mrb[0].mxu0
      %1769 = vmatprep.mubr.f32.mxu0 0.0
      %1770 = vmatmul.mubr.f32.gmra.mrb[0].mxu0 %v266
      %v1771 = vpop.f32.mrb[0].mxu0
      %v1772 = vadd.f32 %v1547, %v1771
      %v1773 = vpop.f32.mrb[0].mxu0
      %1774 = vmatprep.mubr.f32.mxu0 0.0
      %1775 = vmatmul.mubr.f32.gmra.mrb[0].mxu0 %v269
      %v1776 = vpop.f32.mrb[0].mxu0
      %v1777 = vadd.f32 %v1552, %v1776
      %v1778 = vpop.f32.mrb[0].mxu0
      %1779 = vmatprep.mubr.f32.mxu0 0.0
      %1780 = vmatmul.mubr.f32.gmra.mrb[0].mxu0 %v272
      %v1781 = vpop.f32.mrb[0].mxu0
      %v1782 = vadd.f32 %v1557, %v1781
      %v1783 = vpop.f32.mrb[0].mxu0
      %1784 = vmatprep.mubr.f32.mxu0 0.0
      %1785 = vmatmul.mubr.f32.gmra.mrb[0].mxu0 %v275
      %v1786 = vpop.f32.mrb[0].mxu0
      %v1787 = vadd.f32 %v1562, %v1786
      %v1788 = vpop.f32.mrb[0].mxu0
      %1789 = vmatprep.mubr.f32.mxu0 0.0
      %1790 = vmatmul.mubr.f32.gmra.mrb[0].mxu0 %v278
      %v1791 = vpop.f32.mrb[0].mxu0
      %v1792 = vadd.f32 %v1567, %v1791
      %v1793 = vpop.f32.mrb[0].mxu0
      %1794 = vmatprep.mubr.f32.mxu0 0.0
      %1795 = vmatmul.mubr.f32.gmra.mrb[0].mxu0 %v281
      %v1796 = vpop.f32.mrb[0].mxu0
      %v1797 = vadd.f32 %v1572, %v1796
      %v1798 = vpop.f32.mrb[0].mxu0
      %1799 = vmatprep.mubr.f32.mxu0 0.0
      %1800 = vmatmul.mubr.f32.gmra.mrb[0].mxu0 %v284
      %v1801 = vpop.f32.mrb[0].mxu0
      %v1802 = vadd.f32 %v1577, %v1801
      %v1803 = vpop.f32.mrb[0].mxu0
      %1804 = vmatprep.mubr.f32.mxu0 0.0
      %1805 = vmatmul.mubr.f32.gmra.mrb[0].mxu0 %v287
      %v1806 = vpop.f32.mrb[0].mxu0
      %v1807 = vadd.f32 %v1582, %v1806
      %v1808 = vpop.f32.mrb[0].mxu0
      %1809 = vmatprep.mubr.f32.mxu0 0.0
      %1810 = vmatmul.mubr.f32.gmra.mrb[0].mxu0 %v290
      %v1811 = vpop.f32.mrb[0].mxu0
      %v1812 = vadd.f32 %v1587, %v1811
      %v1813 = vpop.f32.mrb[0].mxu0
      %1814 = vmatprep.mubr.f32.mxu0 0.0
      %1815 = vmatmul.mubr.f32.gmra.mrb[0].mxu0 %v293
      %v1816 = vpop.f32.mrb[0].mxu0
      %v1817 = vadd.f32 %v1592, %v1816
      %v1818 = vpop.f32.mrb[0].mxu0
      %1819 = vdwg.mxu0
      %vm1820 = vcmask 523264
      %v1822 = vsel %vm1820, %v792, 0
      %v1825 = vsel %vm1820, %v793, 0
      %v1828 = vsel %vm1820, %v794, 0
      %v1831 = vsel %vm1820, %v795, 0
      %v1834 = vsel %vm1820, %v796, 0
      %v1837 = vsel %vm1820, %v797, 0
      %v1840 = vsel %vm1820, %v798, 0
      %v1843 = vsel %vm1820, %v799, 0
      %v1846 = vsel %vm1820, %v800, 0
      %v1849 = vsel %vm1820, %v801, 0
      %v1852 = vsel %vm1820, %v802, 0
      %v1855 = vsel %vm1820, %v803, 0
      %v1858 = vsel %vm1820, %v804, 0
      %v1861 = vsel %vm1820, %v805, 0
      %v1864 = vsel %vm1820, %v806, 0
      %v1867 = vsel %vm1820, %v807, 0
      %v1870 = vsel %vm1820, %v808, 0
      %v1873 = vsel %vm1820, %v809, 0
      %v1876 = vsel %vm1820, %v810, 0
      %v1879 = vsel %vm1820, %v811, 0
      %v1882 = vsel %vm1820, %v812, 0
      %v1885 = vsel %vm1820, %v813, 0
      %v1888 = vsel %vm1820, %v814, 0
      %v1891 = vsel %vm1820, %v815, 0
      %v1894 = vsel %vm1820, %v816, 0
      %v1897 = vsel %vm1820, %v817, 0
      %v1900 = vsel %vm1820, %v818, 0
      %v1903 = vsel %vm1820, %v819, 0
      %v1906 = vsel %vm1820, %v820, 0
      %v1909 = vsel %vm1820, %v821, 0
      %v1912 = vsel %vm1820, %v822, 0
      %v1915 = vsel %vm1820, %v823, 0
      %v1918 = vsel %vm1820, %v1164, 0
      %v1921 = vsel %vm1820, %v1169, 0
      %v1924 = vsel %vm1820, %v1174, 0
      %v1927 = vsel %vm1820, %v1179, 0
      %v1930 = vsel %vm1820, %v1184, 0
      %v1933 = vsel %vm1820, %v1189, 0
      %v1936 = vsel %vm1820, %v1194, 0
      %v1939 = vsel %vm1820, %v1199, 0
      %v1942 = vsel %vm1820, %v1204, 0
      %v1945 = vsel %vm1820, %v1209, 0
      %v1948 = vsel %vm1820, %v1214, 0
      %v1951 = vsel %vm1820, %v1219, 0
      %v1954 = vsel %vm1820, %v1224, 0
      %v1957 = vsel %vm1820, %v1229, 0
      %v1960 = vsel %vm1820, %v1234, 0
      %v1963 = vsel %vm1820, %v1239, 0
      %v1966 = vsel %vm1820, %v1244, 0
      %v1969 = vsel %vm1820, %v1249, 0
      %v1972 = vsel %vm1820, %v1254, 0
      %v1975 = vsel %vm1820, %v1259, 0
      %v1978 = vsel %vm1820, %v1264, 0
      %v1981 = vsel %vm1820, %v1269, 0
      %v1984 = vsel %vm1820, %v1274, 0
      %v1987 = vsel %vm1820, %v1279, 0
      %v1990 = vsel %vm1820, %v1284, 0
      %v1993 = vsel %vm1820, %v1289, 0
      %v1996 = vsel %vm1820, %v1294, 0
      %v1999 = vsel %vm1820, %v1299, 0
      %v2002 = vsel %vm1820, %v1304, 0
      %v2005 = vsel %vm1820, %v1309, 0
      %v2008 = vsel %vm1820, %v1314, 0
      %v2011 = vsel %vm1820, %v1319, 0
      %2013 = vmatprep.subr.mxu0 0.0
      %2014 = vmatpush1.xpose.msra.mxu0 %v1918
      %2015 = vmatprep.subr.mxu0 0.0
      %2016 = vmatpush1.xpose.msra.mxu0 %v1921
      %2017 = vmatprep.subr.mxu0 0.0
      %2018 = vmatpush1.xpose.msra.mxu0 %v1924
      %2019 = vmatprep.subr.mxu0 0.0
      %2020 = vmatpush1.xpose.msra.mxu0 %v1927
      %2021 = vmatprep.subr.mxu0 0.0
      %2022 = vmatpush1.xpose.msra.mxu0 %v1930
      %2023 = vmatprep.subr.mxu0 0.0
      %2024 = vmatpush1.xpose.msra.mxu0 %v1933
      %2025 = vmatprep.subr.mxu0 0.0
      %2026 = vmatpush1.xpose.msra.mxu0 %v1936
      %2027 = vmatprep.subr.mxu0 0.0
      %2028 = vmatpush1.xpose.msra.mxu0 %v1939
      %2029 = vmatprep.subr.mxu0 0.0
      %2030 = vmatpush1.xpose.msra.mxu0 %v1942
      %2031 = vmatprep.subr.mxu0 0.0
      %2032 = vmatpush1.xpose.msra.mxu0 %v1945
      %2033 = vmatprep.subr.mxu0 0.0
      %2034 = vmatpush1.xpose.msra.mxu0 %v1948
      %2035 = vmatprep.subr.mxu0 0.0
      %2036 = vmatpush1.xpose.msra.mxu0 %v1951
      %2037 = vmatprep.subr.mxu0 0.0
      %2038 = vmatpush1.xpose.msra.mxu0 %v1954
      %2039 = vmatprep.subr.mxu0 0.0
      %2040 = vmatpush1.xpose.msra.mxu0 %v1957
      %2041 = vmatprep.subr.mxu0 0.0
      %2042 = vmatpush1.xpose.msra.mxu0 %v1960
      %2043 = vmatprep.subr.mxu0 0.0
      %2044 = vmatpush1.xpose.msra.mxu0 %v1963
      %2045 = vmatprep.subr.mxu0 0.0
      %2046 = vmatpush1.xpose.msra.mxu0 %v1966
      %2047 = vmatprep.subr.mxu0 0.0
      %2048 = vmatpush1.xpose.msra.mxu0 %v1969
      %2049 = vmatprep.subr.mxu0 0.0
      %2050 = vmatpush1.xpose.msra.mxu0 %v1972
      %2051 = vmatprep.subr.mxu0 0.0
      %2052 = vmatpush1.xpose.msra.mxu0 %v1975
      %2053 = vmatprep.subr.mxu0 0.0
      %2054 = vmatpush1.xpose.msra.mxu0 %v1978
      %2055 = vmatprep.subr.mxu0 0.0
      %2056 = vmatpush1.xpose.msra.mxu0 %v1981
      %2057 = vmatprep.subr.mxu0 0.0
      %2058 = vmatpush1.xpose.msra.mxu0 %v1984
      %2059 = vmatprep.subr.mxu0 0.0
      %2060 = vmatpush1.xpose.msra.mxu0 %v1987
      %2061 = vmatprep.subr.mxu0 0.0
      %2062 = vmatpush1.xpose.msra.mxu0 %v1990
      %2063 = vmatprep.subr.mxu0 0.0
      %2064 = vmatpush1.xpose.msra.mxu0 %v1993
      %2065 = vmatprep.subr.mxu0 0.0
      %2066 = vmatpush1.xpose.msra.mxu0 %v1996
      %2067 = vmatprep.subr.mxu0 0.0
      %2068 = vmatpush1.xpose.msra.mxu0 %v1999
      %2069 = vmatprep.subr.mxu0 0.0
      %2070 = vmatpush1.xpose.msra.mxu0 %v2002
      %2071 = vmatprep.subr.mxu0 0.0
      %2072 = vmatpush1.xpose.msra.mxu0 %v2005
      %2073 = vmatprep.subr.mxu0 0.0
      %2074 = vmatpush1.xpose.msra.mxu0 %v2008
      %2075 = vmatprep.subr.mxu0 0.0
      %2076 = vmatpush1.xpose.msra.mxu0 %v2011
      %2077 = vmatprep.mubr.f32.mxu0 0.0
      %2078 = vmatmul.mubr.f32.gmra.mrb[0].mxu0 %v1822
      %v2079 = vpop.f32.mrb[0].mxu0
      %v2080 = vadd.f32 0.0, %v2079
      %v2081 = vpop.f32.mrb[0].mxu0
      %v2082 = vadd.f32 0.0, %v2081
      %2083 = vmatprep.mubr.f32.mxu0 0.0
      %2084 = vmatmul.mubr.f32.gmra.mrb[0].mxu0 %v1825
      %v2085 = vpop.f32.mrb[0].mxu0
      %v2086 = vadd.f32 0.0, %v2085
      %v2087 = vpop.f32.mrb[0].mxu0
      %v2088 = vadd.f32 0.0, %v2087
      %2089 = vmatprep.mubr.f32.mxu0 0.0
      %2090 = vmatmul.mubr.f32.gmra.mrb[0].mxu0 %v1828
      %v2091 = vpop.f32.mrb[0].mxu0
      %v2092 = vadd.f32 0.0, %v2091
      %v2093 = vpop.f32.mrb[0].mxu0
      %v2094 = vadd.f32 0.0, %v2093
      %2095 = vmatprep.mubr.f32.mxu0 0.0
      %2096 = vmatmul.mubr.f32.gmra.mrb[0].mxu0 %v1831
      %v2097 = vpop.f32.mrb[0].mxu0
      %v2098 = vadd.f32 0.0, %v2097
      %v2099 = vpop.f32.mrb[0].mxu0
      %v2100 = vadd.f32 0.0, %v2099
      %2101 = vmatprep.mubr.f32.mxu0 0.0
      %2102 = vmatmul.mubr.f32.gmra.mrb[0].mxu0 %v1834
      %v2103 = vpop.f32.mrb[0].mxu0
      %v2104 = vadd.f32 0.0, %v2103
      %v2105 = vpop.f32.mrb[0].mxu0
      %v2106 = vadd.f32 0.0, %v2105
      %2107 = vmatprep.mubr.f32.mxu0 0.0
      %2108 = vmatmul.mubr.f32.gmra.mrb[0].mxu0 %v1837
      %v2109 = vpop.f32.mrb[0].mxu0
      %v2110 = vadd.f32 0.0, %v2109
      %v2111 = vpop.f32.mrb[0].mxu0
      %v2112 = vadd.f32 0.0, %v2111
      %2113 = vmatprep.mubr.f32.mxu0 0.0
      %2114 = vmatmul.mubr.f32.gmra.mrb[0].mxu0 %v1840
      %v2115 = vpop.f32.mrb[0].mxu0
      %v2116 = vadd.f32 0.0, %v2115
      %v2117 = vpop.f32.mrb[0].mxu0
      %v2118 = vadd.f32 0.0, %v2117
      %2119 = vmatprep.mubr.f32.mxu0 0.0
      %2120 = vmatmul.mubr.f32.gmra.mrb[0].mxu0 %v1843
      %v2121 = vpop.f32.mrb[0].mxu0
      %v2122 = vadd.f32 0.0, %v2121
      %v2123 = vpop.f32.mrb[0].mxu0
      %v2124 = vadd.f32 0.0, %v2123
      %2125 = vmatprep.mubr.f32.mxu0 0.0
      %2126 = vmatmul.mubr.f32.gmra.mrb[0].mxu0 %v1846
      %v2127 = vpop.f32.mrb[0].mxu0
      %v2128 = vadd.f32 0.0, %v2127
      %v2129 = vpop.f32.mrb[0].mxu0
      %v2130 = vadd.f32 0.0, %v2129
      %2131 = vmatprep.mubr.f32.mxu0 0.0
      %2132 = vmatmul.mubr.f32.gmra.mrb[0].mxu0 %v1849
      %v2133 = vpop.f32.mrb[0].mxu0
      %v2134 = vadd.f32 0.0, %v2133
      %v2135 = vpop.f32.mrb[0].mxu0
      %v2136 = vadd.f32 0.0, %v2135
      %2137 = vmatprep.mubr.f32.mxu0 0.0
      %2138 = vmatmul.mubr.f32.gmra.mrb[0].mxu0 %v1852
      %v2139 = vpop.f32.mrb[0].mxu0
      %v2140 = vadd.f32 0.0, %v2139
      %v2141 = vpop.f32.mrb[0].mxu0
      %v2142 = vadd.f32 0.0, %v2141
      %2143 = vmatprep.mubr.f32.mxu0 0.0
      %2144 = vmatmul.mubr.f32.gmra.mrb[0].mxu0 %v1855
      %v2145 = vpop.f32.mrb[0].mxu0
      %v2146 = vadd.f32 0.0, %v2145
      %v2147 = vpop.f32.mrb[0].mxu0
      %v2148 = vadd.f32 0.0, %v2147
      %2149 = vmatprep.mubr.f32.mxu0 0.0
      %2150 = vmatmul.mubr.f32.gmra.mrb[0].mxu0 %v1858
      %v2151 = vpop.f32.mrb[0].mxu0
      %v2152 = vadd.f32 0.0, %v2151
      %v2153 = vpop.f32.mrb[0].mxu0
      %v2154 = vadd.f32 0.0, %v2153
      %2155 = vmatprep.mubr.f32.mxu0 0.0
      %2156 = vmatmul.mubr.f32.gmra.mrb[0].mxu0 %v1861
      %v2157 = vpop.f32.mrb[0].mxu0
      %v2158 = vadd.f32 0.0, %v2157
      %v2159 = vpop.f32.mrb[0].mxu0
      %v2160 = vadd.f32 0.0, %v2159
      %2161 = vmatprep.mubr.f32.mxu0 0.0
      %2162 = vmatmul.mubr.f32.gmra.mrb[0].mxu0 %v1864
      %v2163 = vpop.f32.mrb[0].mxu0
      %v2164 = vadd.f32 0.0, %v2163
      %v2165 = vpop.f32.mrb[0].mxu0
      %v2166 = vadd.f32 0.0, %v2165
      %2167 = vmatprep.mubr.f32.mxu0 0.0
      %2168 = vmatmul.mubr.f32.gmra.mrb[0].mxu0 %v1867
      %v2169 = vpop.f32.mrb[0].mxu0
      %v2170 = vadd.f32 0.0, %v2169
      %v2171 = vpop.f32.mrb[0].mxu0
      %v2172 = vadd.f32 0.0, %v2171
      %2173 = vmatprep.mubr.f32.mxu0 0.0
      %2174 = vmatmul.mubr.f32.gmra.mrb[0].mxu0 %v1870
      %v2175 = vpop.f32.mrb[0].mxu0
      %v2176 = vadd.f32 0.0, %v2175
      %v2177 = vpop.f32.mrb[0].mxu0
      %v2178 = vadd.f32 0.0, %v2177
      %2179 = vmatprep.mubr.f32.mxu0 0.0
      %2180 = vmatmul.mubr.f32.gmra.mrb[0].mxu0 %v1873
      %v2181 = vpop.f32.mrb[0].mxu0
      %v2182 = vadd.f32 0.0, %v2181
      %v2183 = vpop.f32.mrb[0].mxu0
      %v2184 = vadd.f32 0.0, %v2183
      %2185 = vmatprep.mubr.f32.mxu0 0.0
      %2186 = vmatmul.mubr.f32.gmra.mrb[0].mxu0 %v1876
      %v2187 = vpop.f32.mrb[0].mxu0
      %v2188 = vadd.f32 0.0, %v2187
      %v2189 = vpop.f32.mrb[0].mxu0
      %v2190 = vadd.f32 0.0, %v2189
      %2191 = vmatprep.mubr.f32.mxu0 0.0
      %2192 = vmatmul.mubr.f32.gmra.mrb[0].mxu0 %v1879
      %v2193 = vpop.f32.mrb[0].mxu0
      %v2194 = vadd.f32 0.0, %v2193
      %v2195 = vpop.f32.mrb[0].mxu0
      %v2196 = vadd.f32 0.0, %v2195
      %2197 = vmatprep.mubr.f32.mxu0 0.0
      %2198 = vmatmul.mubr.f32.gmra.mrb[0].mxu0 %v1882
      %v2199 = vpop.f32.mrb[0].mxu0
      %v2200 = vadd.f32 0.0, %v2199
      %v2201 = vpop.f32.mrb[0].mxu0
      %v2202 = vadd.f32 0.0, %v2201
      %2203 = vmatprep.mubr.f32.mxu0 0.0
      %2204 = vmatmul.mubr.f32.gmra.mrb[0].mxu0 %v1885
      %v2205 = vpop.f32.mrb[0].mxu0
      %v2206 = vadd.f32 0.0, %v2205
      %v2207 = vpop.f32.mrb[0].mxu0
      %v2208 = vadd.f32 0.0, %v2207
      %2209 = vmatprep.mubr.f32.mxu0 0.0
      %2210 = vmatmul.mubr.f32.gmra.mrb[0].mxu0 %v1888
      %v2211 = vpop.f32.mrb[0].mxu0
      %v2212 = vadd.f32 0.0, %v2211
      %v2213 = vpop.f32.mrb[0].mxu0
      %v2214 = vadd.f32 0.0, %v2213
      %2215 = vmatprep.mubr.f32.mxu0 0.0
      %2216 = vmatmul.mubr.f32.gmra.mrb[0].mxu0 %v1891
      %v2217 = vpop.f32.mrb[0].mxu0
      %v2218 = vadd.f32 0.0, %v2217
      %v2219 = vpop.f32.mrb[0].mxu0
      %v2220 = vadd.f32 0.0, %v2219
      %2221 = vmatprep.mubr.f32.mxu0 0.0
      %2222 = vmatmul.mubr.f32.gmra.mrb[0].mxu0 %v1894
      %v2223 = vpop.f32.mrb[0].mxu0
      %v2224 = vadd.f32 0.0, %v2223
      %v2225 = vpop.f32.mrb[0].mxu0
      %v2226 = vadd.f32 0.0, %v2225
      %2227 = vmatprep.mubr.f32.mxu0 0.0
      %2228 = vmatmul.mubr.f32.gmra.mrb[0].mxu0 %v1897
      %v2229 = vpop.f32.mrb[0].mxu0
      %v2230 = vadd.f32 0.0, %v2229
      %v2231 = vpop.f32.mrb[0].mxu0
      %v2232 = vadd.f32 0.0, %v2231
      %2233 = vmatprep.mubr.f32.mxu0 0.0
      %2234 = vmatmul.mubr.f32.gmra.mrb[0].mxu0 %v1900
      %v2235 = vpop.f32.mrb[0].mxu0
      %v2236 = vadd.f32 0.0, %v2235
      %v2237 = vpop.f32.mrb[0].mxu0
      %v2238 = vadd.f32 0.0, %v2237
      %2239 = vmatprep.mubr.f32.mxu0 0.0
      %2240 = vmatmul.mubr.f32.gmra.mrb[0].mxu0 %v1903
      %v2241 = vpop.f32.mrb[0].mxu0
      %v2242 = vadd.f32 0.0, %v2241
      %v2243 = vpop.f32.mrb[0].mxu0
      %v2244 = vadd.f32 0.0, %v2243
      %2245 = vmatprep.mubr.f32.mxu0 0.0
      %2246 = vmatmul.mubr.f32.gmra.mrb[0].mxu0 %v1906
      %v2247 = vpop.f32.mrb[0].mxu0
      %v2248 = vadd.f32 0.0, %v2247
      %v2249 = vpop.f32.mrb[0].mxu0
      %v2250 = vadd.f32 0.0, %v2249
      %2251 = vmatprep.mubr.f32.mxu0 0.0
      %2252 = vmatmul.mubr.f32.gmra.mrb[0].mxu0 %v1909
      %v2253 = vpop.f32.mrb[0].mxu0
      %v2254 = vadd.f32 0.0, %v2253
      %v2255 = vpop.f32.mrb[0].mxu0
      %v2256 = vadd.f32 0.0, %v2255
      %2257 = vmatprep.mubr.f32.mxu0 0.0
      %2258 = vmatmul.mubr.f32.gmra.mrb[0].mxu0 %v1912
      %v2259 = vpop.f32.mrb[0].mxu0
      %v2260 = vadd.f32 0.0, %v2259
      %v2261 = vpop.f32.mrb[0].mxu0
      %v2262 = vadd.f32 0.0, %v2261
      %2263 = vmatprep.mubr.f32.mxu0 0.0
      %2264 = vmatmul.mubr.f32.gmra.mrb[0].mxu0 %v1915
      %v2265 = vpop.f32.mrb[0].mxu0
      %v2266 = vadd.f32 0.0, %v2265
      %v2267 = vpop.f32.mrb[0].mxu0
      %v2268 = vadd.f32 0.0, %v2267
      %2269 = vdwg.mxu0
      %v2270 = vlaneseq
      %v2271 = vshrl.u32 %v2270, 7
      %v2272 = vadd.s32 %v2271, 8
      %v2273 = vadd.s32 %v2271, 16
      %v2274 = vadd.s32 %v2271, 24
      %v2275 = vadd.s32 %v2271, 32
      %v2276 = vadd.s32 %v2271, 40
      %v2277 = vadd.s32 %v2271, 48
      %v2278 = vadd.s32 %v2271, 56
      %v2279 = vadd.s32 %v2271, 64
      %v2280 = vadd.s32 %v2271, 72
      %v2281 = vadd.s32 %v2271, 80
      %v2282 = vadd.s32 %v2271, 88
      %v2283 = vadd.s32 %v2271, 96
      %v2284 = vadd.s32 %v2271, 104
      %v2285 = vadd.s32 %v2271, 112
      %v2286 = vadd.s32 %v2271, 120
      %v2287 = vadd.s32 %v2271, 128
      %v2288 = vadd.s32 %v2271, 136
      %v2289 = vadd.s32 %v2271, 144
      %v2290 = vadd.s32 %v2271, 152
      %v2291 = vadd.s32 %v2271, 160
      %v2292 = vadd.s32 %v2271, 168
      %v2293 = vadd.s32 %v2271, 176
      %v2294 = vadd.s32 %v2271, 184
      %v2295 = vadd.s32 %v2271, 192
      %v2296 = vadd.s32 %v2271, 200
      %v2297 = vadd.s32 %v2271, 208
      %v2298 = vadd.s32 %v2271, 216
      %v2299 = vadd.s32 %v2271, 224
      %v2300 = vadd.s32 %v2271, 232
      %v2301 = vadd.s32 %v2271, 240
      %v2302 = vadd.s32 %v2271, 248
      %v2303 = vlaneseq
      %v2304 = vand.u32 %v2303, 127
      %v2305 = vadd.s32 %v2304, 128
      %vm2306 = vcmp.le.s32.totalorder %v2304, %v2271
      %vm2307 = vcmp.le.s32.totalorder %v2305, %v2271
      %vm2308 = vcmp.le.s32.totalorder %v2304, %v2272
      %vm2309 = vcmp.le.s32.totalorder %v2305, %v2272
      %vm2310 = vcmp.le.s32.totalorder %v2304, %v2273
      %vm2311 = vcmp.le.s32.totalorder %v2305, %v2273
      %vm2312 = vcmp.le.s32.totalorder %v2304, %v2274
      %vm2313 = vcmp.le.s32.totalorder %v2305, %v2274
      %vm2314 = vcmp.le.s32.totalorder %v2304, %v2275
      %vm2315 = vcmp.le.s32.totalorder %v2305, %v2275
      %vm2316 = vcmp.le.s32.totalorder %v2304, %v2276
      %vm2317 = vcmp.le.s32.totalorder %v2305, %v2276
      %vm2318 = vcmp.le.s32.totalorder %v2304, %v2277
      %vm2319 = vcmp.le.s32.totalorder %v2305, %v2277
      %vm2320 = vcmp.le.s32.totalorder %v2304, %v2278
      %vm2321 = vcmp.le.s32.totalorder %v2305, %v2278
      %vm2322 = vcmp.le.s32.totalorder %v2304, %v2279
      %vm2323 = vcmp.le.s32.totalorder %v2305, %v2279
      %vm2324 = vcmp.le.s32.totalorder %v2304, %v2280
      %vm2325 = vcmp.le.s32.totalorder %v2305, %v2280
      %vm2326 = vcmp.le.s32.totalorder %v2304, %v2281
      %vm2327 = vcmp.le.s32.totalorder %v2305, %v2281
      %vm2328 = vcmp.le.s32.totalorder %v2304, %v2282
      %vm2329 = vcmp.le.s32.totalorder %v2305, %v2282
      %vm2330 = vcmp.le.s32.totalorder %v2304, %v2283
      %vm2331 = vcmp.le.s32.totalorder %v2305, %v2283
      %vm2332 = vcmp.le.s32.totalorder %v2304, %v2284
      %vm2333 = vcmp.le.s32.totalorder %v2305, %v2284
      %vm2334 = vcmp.le.s32.totalorder %v2304, %v2285
      %vm2335 = vcmp.le.s32.totalorder %v2305, %v2285
      %vm2336 = vcmp.le.s32.totalorder %v2304, %v2286
      %vm2337 = vcmp.le.s32.totalorder %v2305, %v2286
      %vm2338 = vcmp.le.s32.totalorder %v2304, %v2287
      %vm2339 = vcmp.le.s32.totalorder %v2305, %v2287
      %vm2340 = vcmp.le.s32.totalorder %v2304, %v2288
      %vm2341 = vcmp.le.s32.totalorder %v2305, %v2288
      %vm2342 = vcmp.le.s32.totalorder %v2304, %v2289
      %vm2343 = vcmp.le.s32.totalorder %v2305, %v2289
      %vm2344 = vcmp.le.s32.totalorder %v2304, %v2290
      %vm2345 = vcmp.le.s32.totalorder %v2305, %v2290
      %vm2346 = vcmp.le.s32.totalorder %v2304, %v2291
      %vm2347 = vcmp.le.s32.totalorder %v2305, %v2291
      %vm2348 = vcmp.le.s32.totalorder %v2304, %v2292
      %vm2349 = vcmp.le.s32.totalorder %v2305, %v2292
      %vm2350 = vcmp.le.s32.totalorder %v2304, %v2293
      %vm2351 = vcmp.le.s32.totalorder %v2305, %v2293
      %vm2352 = vcmp.le.s32.totalorder %v2304, %v2294
      %vm2353 = vcmp.le.s32.totalorder %v2305, %v2294
      %vm2354 = vcmp.le.s32.totalorder %v2304, %v2295
      %vm2355 = vcmp.le.s32.totalorder %v2305, %v2295
      %vm2356 = vcmp.le.s32.totalorder %v2304, %v2296
      %vm2357 = vcmp.le.s32.totalorder %v2305, %v2296
      %vm2358 = vcmp.le.s32.totalorder %v2304, %v2297
      %vm2359 = vcmp.le.s32.totalorder %v2305, %v2297
      %vm2360 = vcmp.le.s32.totalorder %v2304, %v2298
      %vm2361 = vcmp.le.s32.totalorder %v2305, %v2298
      %vm2362 = vcmp.le.s32.totalorder %v2304, %v2299
      %vm2363 = vcmp.le.s32.totalorder %v2305, %v2299
      %vm2364 = vcmp.le.s32.totalorder %v2304, %v2300
      %vm2365 = vcmp.le.s32.totalorder %v2305, %v2300
      %vm2366 = vcmp.le.s32.totalorder %v2304, %v2301
      %vm2367 = vcmp.le.s32.totalorder %v2305, %v2301
      %vm2368 = vcmp.le.s32.totalorder %v2304, %v2302
      %vm2369 = vcmp.le.s32.totalorder %v2305, %v2302
      %v2370 = vsel %vm2306, %v2080, -inf
      %v2371 = vsel %vm2307, %v2082, -inf
      %v2372 = vsel %vm2308, %v2086, -inf
      %v2373 = vsel %vm2309, %v2088, -inf
      %v2374 = vsel %vm2310, %v2092, -inf
      %v2375 = vsel %vm2311, %v2094, -inf
      %v2376 = vsel %vm2312, %v2098, -inf
      %v2377 = vsel %vm2313, %v2100, -inf
      %v2378 = vsel %vm2314, %v2104, -inf
      %v2379 = vsel %vm2315, %v2106, -inf
      %v2380 = vsel %vm2316, %v2110, -inf
      %v2381 = vsel %vm2317, %v2112, -inf
      %v2382 = vsel %vm2318, %v2116, -inf
      %v2383 = vsel %vm2319, %v2118, -inf
      %v2384 = vsel %vm2320, %v2122, -inf
      %v2385 = vsel %vm2321, %v2124, -inf
      %v2386 = vsel %vm2322, %v2128, -inf
      %v2387 = vsel %vm2323, %v2130, -inf
      %v2388 = vsel %vm2324, %v2134, -inf
      %v2389 = vsel %vm2325, %v2136, -inf
      %v2390 = vsel %vm2326, %v2140, -inf
      %v2391 = vsel %vm2327, %v2142, -inf
      %v2392 = vsel %vm2328, %v2146, -inf
      %v2393 = vsel %vm2329, %v2148, -inf
      %v2394 = vsel %vm2330, %v2152, -inf
      %v2395 = vsel %vm2331, %v2154, -inf
      %v2396 = vsel %vm2332, %v2158, -inf
      %v2397 = vsel %vm2333, %v2160, -inf
      %v2398 = vsel %vm2334, %v2164, -inf
      %v2399 = vsel %vm2335, %v2166, -inf
      %v2400 = vsel %vm2336, %v2170, -inf
      %v2401 = vsel %vm2337, %v2172, -inf
      %v2402 = vsel %vm2338, %v2176, -inf
      %v2403 = vsel %vm2339, %v2178, -inf
      %v2404 = vsel %vm2340, %v2182, -inf
      %v2405 = vsel %vm2341, %v2184, -inf
      %v2406 = vsel %vm2342, %v2188, -inf
      %v2407 = vsel %vm2343, %v2190, -inf
      %v2408 = vsel %vm2344, %v2194, -inf
      %v2409 = vsel %vm2345, %v2196, -inf
      %v2410 = vsel %vm2346, %v2200, -inf
      %v2411 = vsel %vm2347, %v2202, -inf
      %v2412 = vsel %vm2348, %v2206, -inf
      %v2413 = vsel %vm2349, %v2208, -inf
      %v2414 = vsel %vm2350, %v2212, -inf
      %v2415 = vsel %vm2351, %v2214, -inf
      %v2416 = vsel %vm2352, %v2218, -inf
      %v2417 = vsel %vm2353, %v2220, -inf
      %v2418 = vsel %vm2354, %v2224, -inf
      %v2419 = vsel %vm2355, %v2226, -inf
      %v2420 = vsel %vm2356, %v2230, -inf
      %v2421 = vsel %vm2357, %v2232, -inf
      %v2422 = vsel %vm2358, %v2236, -inf
      %v2423 = vsel %vm2359, %v2238, -inf
      %v2424 = vsel %vm2360, %v2242, -inf
      %v2425 = vsel %vm2361, %v2244, -inf
      %v2426 = vsel %vm2362, %v2248, -inf
      %v2427 = vsel %vm2363, %v2250, -inf
      %v2428 = vsel %vm2364, %v2254, -inf
      %v2429 = vsel %vm2365, %v2256, -inf
      %v2430 = vsel %vm2366, %v2260, -inf
      %v2431 = vsel %vm2367, %v2262, -inf
      %v2432 = vsel %vm2368, %v2266, -inf
      %v2433 = vsel %vm2369, %v2268, -inf
      %v2434 = vmax.f32 %v2370, %v2371
      %2435 = vmax.xlane.f32.xlu0 %v2434
      %v2436 = vpop.xlane.xlu0 %2435
      %v2437 = vmax.f32 %v2372, %v2373
      %2438 = vmax.xlane.f32.xlu0 %v2437
      %v2439 = vpop.xlane.xlu0 %2438
      %v2440 = vmax.f32 %v2374, %v2375
      %2441 = vmax.xlane.f32.xlu0 %v2440
      %v2442 = vpop.xlane.xlu0 %2441
      %v2443 = vmax.f32 %v2376, %v2377
      %2444 = vmax.xlane.f32.xlu0 %v2443
      %v2445 = vpop.xlane.xlu0 %2444
      %v2446 = vmax.f32 %v2378, %v2379
      %2447 = vmax.xlane.f32.xlu0 %v2446
      %v2448 = vpop.xlane.xlu0 %2447
      %v2449 = vmax.f32 %v2380, %v2381
      %2450 = vmax.xlane.f32.xlu0 %v2449
      %v2451 = vpop.xlane.xlu0 %2450
      %v2452 = vmax.f32 %v2382, %v2383
      %2453 = vmax.xlane.f32.xlu0 %v2452
      %v2454 = vpop.xlane.xlu0 %2453
      %v2455 = vmax.f32 %v2384, %v2385
      %2456 = vmax.xlane.f32.xlu0 %v2455
      %v2457 = vpop.xlane.xlu0 %2456
      %v2458 = vmax.f32 %v2386, %v2387
      %2459 = vmax.xlane.f32.xlu0 %v2458
      %v2460 = vpop.xlane.xlu0 %2459
      %v2461 = vmax.f32 %v2388, %v2389
      %2462 = vmax.xlane.f32.xlu0 %v2461
      %v2463 = vpop.xlane.xlu0 %2462
      %v2464 = vmax.f32 %v2390, %v2391
      %2465 = vmax.xlane.f32.xlu0 %v2464
      %v2466 = vpop.xlane.xlu0 %2465
      %v2467 = vmax.f32 %v2392, %v2393
      %2468 = vmax.xlane.f32.xlu0 %v2467
      %v2469 = vpop.xlane.xlu0 %2468
      %v2470 = vmax.f32 %v2394, %v2395
      %2471 = vmax.xlane.f32.xlu0 %v2470
      %v2472 = vpop.xlane.xlu0 %2471
      %v2473 = vmax.f32 %v2396, %v2397
      %2474 = vmax.xlane.f32.xlu0 %v2473
      %v2475 = vpop.xlane.xlu0 %2474
      %v2476 = vmax.f32 %v2398, %v2399
      %2477 = vmax.xlane.f32.xlu0 %v2476
      %v2478 = vpop.xlane.xlu0 %2477
      %v2479 = vmax.f32 %v2400, %v2401
      %2480 = vmax.xlane.f32.xlu0 %v2479
      %v2481 = vpop.xlane.xlu0 %2480
      %v2482 = vmax.f32 %v2402, %v2403
      %2483 = vmax.xlane.f32.xlu0 %v2482
      %v2484 = vpop.xlane.xlu0 %2483
      %v2485 = vmax.f32 %v2404, %v2405
      %2486 = vmax.xlane.f32.xlu0 %v2485
      %v2487 = vpop.xlane.xlu0 %2486
      %v2488 = vmax.f32 %v2406, %v2407
      %2489 = vmax.xlane.f32.xlu0 %v2488
      %v2490 = vpop.xlane.xlu0 %2489
      %v2491 = vmax.f32 %v2408, %v2409
      %2492 = vmax.xlane.f32.xlu0 %v2491
      %v2493 = vpop.xlane.xlu0 %2492
      %v2494 = vmax.f32 %v2410, %v2411
      %2495 = vmax.xlane.f32.xlu0 %v2494
      %v2496 = vpop.xlane.xlu0 %2495
      %v2497 = vmax.f32 %v2412, %v2413
      %2498 = vmax.xlane.f32.xlu0 %v2497
      %v2499 = vpop.xlane.xlu0 %2498
      %v2500 = vmax.f32 %v2414, %v2415
      %2501 = vmax.xlane.f32.xlu0 %v2500
      %v2502 = vpop.xlane.xlu0 %2501
      %v2503 = vmax.f32 %v2416, %v2417
      %2504 = vmax.xlane.f32.xlu0 %v2503
      %v2505 = vpop.xlane.xlu0 %2504
      %v2506 = vmax.f32 %v2418, %v2419
      %2507 = vmax.xlane.f32.xlu0 %v2506
      %v2508 = vpop.xlane.xlu0 %2507
      %v2509 = vmax.f32 %v2420, %v2421
      %2510 = vmax.xlane.f32.xlu0 %v2509
      %v2511 = vpop.xlane.xlu0 %2510
      %v2512 = vmax.f32 %v2422, %v2423
      %2513 = vmax.xlane.f32.xlu0 %v2512
      %v2514 = vpop.xlane.xlu0 %2513
      %v2515 = vmax.f32 %v2424, %v2425
      %2516 = vmax.xlane.f32.xlu0 %v2515
      %v2517 = vpop.xlane.xlu0 %2516
      %v2518 = vmax.f32 %v2426, %v2427
      %2519 = vmax.xlane.f32.xlu0 %v2518
      %v2520 = vpop.xlane.xlu0 %2519
      %v2521 = vmax.f32 %v2428, %v2429
      %2522 = vmax.xlane.f32.xlu0 %v2521
      %v2523 = vpop.xlane.xlu0 %2522
      %v2524 = vmax.f32 %v2430, %v2431
      %2525 = vmax.xlane.f32.xlu0 %v2524
      %v2526 = vpop.xlane.xlu0 %2525
      %v2527 = vmax.f32 %v2432, %v2433
      %2528 = vmax.xlane.f32.xlu0 %v2527
      %v2529 = vpop.xlane.xlu0 %2528
      %v2530 = vsub.f32 %v2370, %v2436
      %v2531 = vsub.f32 %v2371, %v2436
      %v2532 = vsub.f32 %v2372, %v2439
      %v2533 = vsub.f32 %v2373, %v2439
      %v2534 = vsub.f32 %v2374, %v2442
      %v2535 = vsub.f32 %v2375, %v2442
      %v2536 = vsub.f32 %v2376, %v2445
      %v2537 = vsub.f32 %v2377, %v2445
      %v2538 = vsub.f32 %v2378, %v2448
      %v2539 = vsub.f32 %v2379, %v2448
      %v2540 = vsub.f32 %v2380, %v2451
      %v2541 = vsub.f32 %v2381, %v2451
      %v2542 = vsub.f32 %v2382, %v2454
      %v2543 = vsub.f32 %v2383, %v2454
      %v2544 = vsub.f32 %v2384, %v2457
      %v2545 = vsub.f32 %v2385, %v2457
      %v2546 = vsub.f32 %v2386, %v2460
      %v2547 = vsub.f32 %v2387, %v2460
      %v2548 = vsub.f32 %v2388, %v2463
      %v2549 = vsub.f32 %v2389, %v2463
      %v2550 = vsub.f32 %v2390, %v2466
      %v2551 = vsub.f32 %v2391, %v2466
      %v2552 = vsub.f32 %v2392, %v2469
      %v2553 = vsub.f32 %v2393, %v2469
      %v2554 = vsub.f32 %v2394, %v2472
      %v2555 = vsub.f32 %v2395, %v2472
      %v2556 = vsub.f32 %v2396, %v2475
      %v2557 = vsub.f32 %v2397, %v2475
      %v2558 = vsub.f32 %v2398, %v2478
      %v2559 = vsub.f32 %v2399, %v2478
      %v2560 = vsub.f32 %v2400, %v2481
      %v2561 = vsub.f32 %v2401, %v2481
      %v2562 = vsub.f32 %v2402, %v2484
      %v2563 = vsub.f32 %v2403, %v2484
      %v2564 = vsub.f32 %v2404, %v2487
      %v2565 = vsub.f32 %v2405, %v2487
      %v2566 = vsub.f32 %v2406, %v2490
      %v2567 = vsub.f32 %v2407, %v2490
      %v2568 = vsub.f32 %v2408, %v2493
      %v2569 = vsub.f32 %v2409, %v2493
      %v2570 = vsub.f32 %v2410, %v2496
      %v2571 = vsub.f32 %v2411, %v2496
      %v2572 = vsub.f32 %v2412, %v2499
      %v2573 = vsub.f32 %v2413, %v2499
      %v2574 = vsub.f32 %v2414, %v2502
      %v2575 = vsub.f32 %v2415, %v2502
      %v2576 = vsub.f32 %v2416, %v2505
      %v2577 = vsub.f32 %v2417, %v2505
      %v2578 = vsub.f32 %v2418, %v2508
      %v2579 = vsub.f32 %v2419, %v2508
      %v2580 = vsub.f32 %v2420, %v2511
      %v2581 = vsub.f32 %v2421, %v2511
      %v2582 = vsub.f32 %v2422, %v2514
      %v2583 = vsub.f32 %v2423, %v2514
      %v2584 = vsub.f32 %v2424, %v2517
      %v2585 = vsub.f32 %v2425, %v2517
      %v2586 = vsub.f32 %v2426, %v2520
      %v2587 = vsub.f32 %v2427, %v2520
      %v2588 = vsub.f32 %v2428, %v2523
      %v2589 = vsub.f32 %v2429, %v2523
      %v2590 = vsub.f32 %v2430, %v2526
      %v2591 = vsub.f32 %v2431, %v2526
      %v2592 = vsub.f32 %v2432, %v2529
      %v2593 = vsub.f32 %v2433, %v2529
      %v2594 = vmul.f32 %v2530, 1.442695
      %v2595 = vpow.pop %v2594
      %v2596 = vmul.f32 %v2531, 1.442695
      %v2597 = vpow.pop %v2596
      %v2598 = vmul.f32 %v2532, 1.442695
      %v2599 = vpow.pop %v2598
      %v2600 = vmul.f32 %v2533, 1.442695
      %v2601 = vpow.pop %v2600
      %v2602 = vmul.f32 %v2534, 1.442695
      %v2603 = vpow.pop %v2602
      %v2604 = vmul.f32 %v2535, 1.442695
      %v2605 = vpow.pop %v2604
      %v2606 = vmul.f32 %v2536, 1.442695
      %v2607 = vpow.pop %v2606
      %v2608 = vmul.f32 %v2537, 1.442695
      %v2609 = vpow.pop %v2608
      %v2610 = vmul.f32 %v2538, 1.442695
      %v2611 = vpow.pop %v2610
      %v2612 = vmul.f32 %v2539, 1.442695
      %v2613 = vpow.pop %v2612
      %v2614 = vmul.f32 %v2540, 1.442695
      %v2615 = vpow.pop %v2614
      %v2616 = vmul.f32 %v2541, 1.442695
      %v2617 = vpow.pop %v2616
      %v2618 = vmul.f32 %v2542, 1.442695
      %v2619 = vpow.pop %v2618
      %v2620 = vmul.f32 %v2543, 1.442695
      %v2621 = vpow.pop %v2620
      %v2622 = vmul.f32 %v2544, 1.442695
      %v2623 = vpow.pop %v2622
      %v2624 = vmul.f32 %v2545, 1.442695
      %v2625 = vpow.pop %v2624
      %v2626 = vmul.f32 %v2546, 1.442695
      %v2627 = vpow.pop %v2626
      %v2628 = vmul.f32 %v2547, 1.442695
      %v2629 = vpow.pop %v2628
      %v2630 = vmul.f32 %v2548, 1.442695
      %v2631 = vpow.pop %v2630
      %v2632 = vmul.f32 %v2549, 1.442695
      %v2633 = vpow.pop %v2632
      %v2634 = vmul.f32 %v2550, 1.442695
      %v2635 = vpow.pop %v2634
      %v2636 = vmul.f32 %v2551, 1.442695
      %v2637 = vpow.pop %v2636
      %v2638 = vmul.f32 %v2552, 1.442695
      %v2639 = vpow.pop %v2638
      %v2640 = vmul.f32 %v2553, 1.442695
      %v2641 = vpow.pop %v2640
      %v2642 = vmul.f32 %v2554, 1.442695
      %v2643 = vpow.pop %v2642
      %v2644 = vmul.f32 %v2555, 1.442695
      %v2645 = vpow.pop %v2644
      %v2646 = vmul.f32 %v2556, 1.442695
      %v2647 = vpow.pop %v2646
      %v2648 = vmul.f32 %v2557, 1.442695
      %v2649 = vpow.pop %v2648
      %v2650 = vmul.f32 %v2558, 1.442695
      %v2651 = vpow.pop %v2650
      %v2652 = vmul.f32 %v2559, 1.442695
      %v2653 = vpow.pop %v2652
      %v2654 = vmul.f32 %v2560, 1.442695
      %v2655 = vpow.pop %v2654
      %v2656 = vmul.f32 %v2561, 1.442695
      %v2657 = vpow.pop %v2656
      %v2658 = vmul.f32 %v2562, 1.442695
      %v2659 = vpow.pop %v2658
      %v2660 = vmul.f32 %v2563, 1.442695
      %v2661 = vpow.pop %v2660
      %v2662 = vmul.f32 %v2564, 1.442695
      %v2663 = vpow.pop %v2662
      %v2664 = vmul.f32 %v2565, 1.442695
      %v2665 = vpow.pop %v2664
      %v2666 = vmul.f32 %v2566, 1.442695
      %v2667 = vpow.pop %v2666
      %v2668 = vmul.f32 %v2567, 1.442695
      %v2669 = vpow.pop %v2668
      %v2670 = vmul.f32 %v2568, 1.442695
      %v2671 = vpow.pop %v2670
      %v2672 = vmul.f32 %v2569, 1.442695
      %v2673 = vpow.pop %v2672
      %v2674 = vmul.f32 %v2570, 1.442695
      %v2675 = vpow.pop %v2674
      %v2676 = vmul.f32 %v2571, 1.442695
      %v2677 = vpow.pop %v2676
      %v2678 = vmul.f32 %v2572, 1.442695
      %v2679 = vpow.pop %v2678
      %v2680 = vmul.f32 %v2573, 1.442695
      %v2681 = vpow.pop %v2680
      %v2682 = vmul.f32 %v2574, 1.442695
      %v2683 = vpow.pop %v2682
      %v2684 = vmul.f32 %v2575, 1.442695
      %v2685 = vpow.pop %v2684
      %v2686 = vmul.f32 %v2576, 1.442695
      %v2687 = vpow.pop %v2686
      %v2688 = vmul.f32 %v2577, 1.442695
      %v2689 = vpow.pop %v2688
      %v2690 = vmul.f32 %v2578, 1.442695
      %v2691 = vpow.pop %v2690
      %v2692 = vmul.f32 %v2579, 1.442695
      %v2693 = vpow.pop %v2692
      %v2694 = vmul.f32 %v2580, 1.442695
      %v2695 = vpow.pop %v2694
      %v2696 = vmul.f32 %v2581, 1.442695
      %v2697 = vpow.pop %v2696
      %v2698 = vmul.f32 %v2582, 1.442695
      %v2699 = vpow.pop %v2698
      %v2700 = vmul.f32 %v2583, 1.442695
      %v2701 = vpow.pop %v2700
      %v2702 = vmul.f32 %v2584, 1.442695
      %v2703 = vpow.pop %v2702
      %v2704 = vmul.f32 %v2585, 1.442695
      %v2705 = vpow.pop %v2704
      %v2706 = vmul.f32 %v2586, 1.442695
      %v2707 = vpow.pop %v2706
      %v2708 = vmul.f32 %v2587, 1.442695
      %v2709 = vpow.pop %v2708
      %v2710 = vmul.f32 %v2588, 1.442695
      %v2711 = vpow.pop %v2710
      %v2712 = vmul.f32 %v2589, 1.442695
      %v2713 = vpow.pop %v2712
      %v2714 = vmul.f32 %v2590, 1.442695
      %v2715 = vpow.pop %v2714
      %v2716 = vmul.f32 %v2591, 1.442695
      %v2717 = vpow.pop %v2716
      %v2718 = vmul.f32 %v2592, 1.442695
      %v2719 = vpow.pop %v2718
      %v2720 = vmul.f32 %v2593, 1.442695
      %v2721 = vpow.pop %v2720
      %v2722 = vadd.f32 %v2595, %v2597
      %2723 = vadd.xlane.f32.xlu0 %v2722
      %v2724 = vpop.xlane.xlu0 %2723
      %v2725 = vadd.f32 %v2599, %v2601
      %2726 = vadd.xlane.f32.xlu0 %v2725
      %v2727 = vpop.xlane.xlu0 %2726
      %v2728 = vadd.f32 %v2603, %v2605
      %2729 = vadd.xlane.f32.xlu0 %v2728
      %v2730 = vpop.xlane.xlu0 %2729
      %v2731 = vadd.f32 %v2607, %v2609
      %2732 = vadd.xlane.f32.xlu0 %v2731
      %v2733 = vpop.xlane.xlu0 %2732
      %v2734 = vadd.f32 %v2611, %v2613
      %2735 = vadd.xlane.f32.xlu0 %v2734
      %v2736 = vpop.xlane.xlu0 %2735
      %v2737 = vadd.f32 %v2615, %v2617
      %2738 = vadd.xlane.f32.xlu0 %v2737
      %v2739 = vpop.xlane.xlu0 %2738
      %v2740 = vadd.f32 %v2619, %v2621
      %2741 = vadd.xlane.f32.xlu0 %v2740
      %v2742 = vpop.xlane.xlu0 %2741
      %v2743 = vadd.f32 %v2623, %v2625
      %2744 = vadd.xlane.f32.xlu0 %v2743
      %v2745 = vpop.xlane.xlu0 %2744
      %v2746 = vadd.f32 %v2627, %v2629
      %2747 = vadd.xlane.f32.xlu0 %v2746
      %v2748 = vpop.xlane.xlu0 %2747
      %v2749 = vadd.f32 %v2631, %v2633
      %2750 = vadd.xlane.f32.xlu0 %v2749
      %v2751 = vpop.xlane.xlu0 %2750
      %v2752 = vadd.f32 %v2635, %v2637
      %2753 = vadd.xlane.f32.xlu0 %v2752
      %v2754 = vpop.xlane.xlu0 %2753
      %v2755 = vadd.f32 %v2639, %v2641
      %2756 = vadd.xlane.f32.xlu0 %v2755
      %v2757 = vpop.xlane.xlu0 %2756
      %v2758 = vadd.f32 %v2643, %v2645
      %2759 = vadd.xlane.f32.xlu0 %v2758
      %v2760 = vpop.xlane.xlu0 %2759
      %v2761 = vadd.f32 %v2647, %v2649
      %2762 = vadd.xlane.f32.xlu0 %v2761
      %v2763 = vpop.xlane.xlu0 %2762
      %v2764 = vadd.f32 %v2651, %v2653
      %2765 = vadd.xlane.f32.xlu0 %v2764
      %v2766 = vpop.xlane.xlu0 %2765
      %v2767 = vadd.f32 %v2655, %v2657
      %2768 = vadd.xlane.f32.xlu0 %v2767
      %v2769 = vpop.xlane.xlu0 %2768
      %v2770 = vadd.f32 %v2659, %v2661
      %2771 = vadd.xlane.f32.xlu0 %v2770
      %v2772 = vpop.xlane.xlu0 %2771
      %v2773 = vadd.f32 %v2663, %v2665
      %2774 = vadd.xlane.f32.xlu0 %v2773
      %v2775 = vpop.xlane.xlu0 %2774
      %v2776 = vadd.f32 %v2667, %v2669
      %2777 = vadd.xlane.f32.xlu0 %v2776
      %v2778 = vpop.xlane.xlu0 %2777
      %v2779 = vadd.f32 %v2671, %v2673
      %2780 = vadd.xlane.f32.xlu0 %v2779
      %v2781 = vpop.xlane.xlu0 %2780
      %v2782 = vadd.f32 %v2675, %v2677
      %2783 = vadd.xlane.f32.xlu0 %v2782
      %v2784 = vpop.xlane.xlu0 %2783
      %v2785 = vadd.f32 %v2679, %v2681
      %2786 = vadd.xlane.f32.xlu0 %v2785
      %v2787 = vpop.xlane.xlu0 %2786
      %v2788 = vadd.f32 %v2683, %v2685
      %2789 = vadd.xlane.f32.xlu0 %v2788
      %v2790 = vpop.xlane.xlu0 %2789
      %v2791 = vadd.f32 %v2687, %v2689
      %2792 = vadd.xlane.f32.xlu0 %v2791
      %v2793 = vpop.xlane.xlu0 %2792
      %v2794 = vadd.f32 %v2691, %v2693
      %2795 = vadd.xlane.f32.xlu0 %v2794
      %v2796 = vpop.xlane.xlu0 %2795
      %v2797 = vadd.f32 %v2695, %v2697
      %2798 = vadd.xlane.f32.xlu0 %v2797
      %v2799 = vpop.xlane.xlu0 %2798
      %v2800 = vadd.f32 %v2699, %v2701
      %2801 = vadd.xlane.f32.xlu0 %v2800
      %v2802 = vpop.xlane.xlu0 %2801
      %v2803 = vadd.f32 %v2703, %v2705
      %2804 = vadd.xlane.f32.xlu0 %v2803
      %v2805 = vpop.xlane.xlu0 %2804
      %v2806 = vadd.f32 %v2707, %v2709
      %2807 = vadd.xlane.f32.xlu0 %v2806
      %v2808 = vpop.xlane.xlu0 %2807
      %v2809 = vadd.f32 %v2711, %v2713
      %2810 = vadd.xlane.f32.xlu0 %v2809
      %v2811 = vpop.xlane.xlu0 %2810
      %v2812 = vadd.f32 %v2715, %v2717
      %2813 = vadd.xlane.f32.xlu0 %v2812
      %v2814 = vpop.xlane.xlu0 %2813
      %v2815 = vadd.f32 %v2719, %v2721
      %2816 = vadd.xlane.f32.xlu0 %v2815
      %v2817 = vpop.xlane.xlu0 %2816
      %2818 = vmatprep.subr.mxu0 0.0
      %2819 = vmatpush1.msra.mxu0 %v1662
      %2820 = vmatprep.subr.mxu0 0.0
      %2821 = vmatpush1.msra.mxu0 %v1667
      %2822 = vmatprep.subr.mxu0 0.0
      %2823 = vmatpush1.msra.mxu0 %v1672
      %2824 = vmatprep.subr.mxu0 0.0
      %2825 = vmatpush1.msra.mxu0 %v1677
      %2826 = vmatprep.subr.mxu0 0.0
      %2827 = vmatpush1.msra.mxu0 %v1682
      %2828 = vmatprep.subr.mxu0 0.0
      %2829 = vmatpush1.msra.mxu0 %v1687
      %2830 = vmatprep.subr.mxu0 0.0
      %2831 = vmatpush1.msra.mxu0 %v1692
      %2832 = vmatprep.subr.mxu0 0.0
      %2833 = vmatpush1.msra.mxu0 %v1697
      %2834 = vmatprep.subr.mxu0 0.0
      %2835 = vmatpush1.msra.mxu0 %v1702
      %2836 = vmatprep.subr.mxu0 0.0
      %2837 = vmatpush1.msra.mxu0 %v1707
      %2838 = vmatprep.subr.mxu0 0.0
      %2839 = vmatpush1.msra.mxu0 %v1712
      %2840 = vmatprep.subr.mxu0 0.0
      %2841 = vmatpush1.msra.mxu0 %v1717
      %2842 = vmatprep.subr.mxu0 0.0
      %2843 = vmatpush1.msra.mxu0 %v1722
      %2844 = vmatprep.subr.mxu0 0.0
      %2845 = vmatpush1.msra.mxu0 %v1727
      %2846 = vmatprep.subr.mxu0 0.0
      %2847 = vmatpush1.msra.mxu0 %v1732
      %2848 = vmatprep.subr.mxu0 0.0
      %2849 = vmatpush1.msra.mxu0 %v1737
      %2850 = vmatprep.subr.mxu0 0.0
      %2851 = vmatpush1.msra.mxu0 %v1742
      %2852 = vmatprep.subr.mxu0 0.0
      %2853 = vmatpush1.msra.mxu0 %v1747
      %2854 = vmatprep.subr.mxu0 0.0
      %2855 = vmatpush1.msra.mxu0 %v1752
      %2856 = vmatprep.subr.mxu0 0.0
      %2857 = vmatpush1.msra.mxu0 %v1757
      %2858 = vmatprep.subr.mxu0 0.0
      %2859 = vmatpush1.msra.mxu0 %v1762
      %2860 = vmatprep.subr.mxu0 0.0
      %2861 = vmatpush1.msra.mxu0 %v1767
      %2862 = vmatprep.subr.mxu0 0.0
      %2863 = vmatpush1.msra.mxu0 %v1772
      %2864 = vmatprep.subr.mxu0 0.0
      %2865 = vmatpush1.msra.mxu0 %v1777
      %2866 = vmatprep.subr.mxu0 0.0
      %2867 = vmatpush1.msra.mxu0 %v1782
      %2868 = vmatprep.subr.mxu0 0.0
      %2869 = vmatpush1.msra.mxu0 %v1787
      %2870 = vmatprep.subr.mxu0 0.0
      %2871 = vmatpush1.msra.mxu0 %v1792
      %2872 = vmatprep.subr.mxu0 0.0
      %2873 = vmatpush1.msra.mxu0 %v1797
      %2874 = vmatprep.subr.mxu0 0.0
      %2875 = vmatpush1.msra.mxu0 %v1802
      %2876 = vmatprep.subr.mxu0 0.0
      %2877 = vmatpush1.msra.mxu0 %v1807
      %2878 = vmatprep.subr.mxu0 0.0
      %2879 = vmatpush1.msra.mxu0 %v1812
      %2880 = vmatprep.subr.mxu0 0.0
      %2881 = vmatpush1.msra.mxu0 %v1817
      %2882 = vmatprep.mubr.f32.mxu0 %v2597
      %2883 = vmatmul.mubr.f32.gmra.mrb[0].mxu0 %v2595
      %v2884 = vpop.f32.mrb[0].mxu0
      %v2885 = vadd.f32 0.0, %v2884
      %v2886 = vpop.f32.mrb[0].mxu0
      %2887 = vmatprep.mubr.f32.mxu0 %v2601
      %2888 = vmatmul.mubr.f32.gmra.mrb[0].mxu0 %v2599
      %v2889 = vpop.f32.mrb[0].mxu0
      %v2890 = vadd.f32 0.0, %v2889
      %v2891 = vpop.f32.mrb[0].mxu0
      %2892 = vmatprep.mubr.f32.mxu0 %v2605
      %2893 = vmatmul.mubr.f32.gmra.mrb[0].mxu0 %v2603
      %v2894 = vpop.f32.mrb[0].mxu0
      %v2895 = vadd.f32 0.0, %v2894
      %v2896 = vpop.f32.mrb[0].mxu0
      %2897 = vmatprep.mubr.f32.mxu0 %v2609
      %2898 = vmatmul.mubr.f32.gmra.mrb[0].mxu0 %v2607
      %v2899 = vpop.f32.mrb[0].mxu0
      %v2900 = vadd.f32 0.0, %v2899
      %v2901 = vpop.f32.mrb[0].mxu0
      %2902 = vmatprep.mubr.f32.mxu0 %v2613
      %2903 = vmatmul.mubr.f32.gmra.mrb[0].mxu0 %v2611
      %v2904 = vpop.f32.mrb[0].mxu0
      %v2905 = vadd.f32 0.0, %v2904
      %v2906 = vpop.f32.mrb[0].mxu0
      %2907 = vmatprep.mubr.f32.mxu0 %v2617
      %2908 = vmatmul.mubr.f32.gmra.mrb[0].mxu0 %v2615
      %v2909 = vpop.f32.mrb[0].mxu0
      %v2910 = vadd.f32 0.0, %v2909
      %v2911 = vpop.f32.mrb[0].mxu0
      %2912 = vmatprep.mubr.f32.mxu0 %v2621
      %2913 = vmatmul.mubr.f32.gmra.mrb[0].mxu0 %v2619
      %v2914 = vpop.f32.mrb[0].mxu0
      %v2915 = vadd.f32 0.0, %v2914
      %v2916 = vpop.f32.mrb[0].mxu0
      %2917 = vmatprep.mubr.f32.mxu0 %v2625
      %2918 = vmatmul.mubr.f32.gmra.mrb[0].mxu0 %v2623
      %v2919 = vpop.f32.mrb[0].mxu0
      %v2920 = vadd.f32 0.0, %v2919
      %v2921 = vpop.f32.mrb[0].mxu0
      %2922 = vmatprep.mubr.f32.mxu0 %v2629
      %2923 = vmatmul.mubr.f32.gmra.mrb[0].mxu0 %v2627
      %v2924 = vpop.f32.mrb[0].mxu0
      %v2925 = vadd.f32 0.0, %v2924
      %v2926 = vpop.f32.mrb[0].mxu0
      %2927 = vmatprep.mubr.f32.mxu0 %v2633
      %2928 = vmatmul.mubr.f32.gmra.mrb[0].mxu0 %v2631
      %v2929 = vpop.f32.mrb[0].mxu0
      %v2930 = vadd.f32 0.0, %v2929
      %v2931 = vpop.f32.mrb[0].mxu0
      %2932 = vmatprep.mubr.f32.mxu0 %v2637
      %2933 = vmatmul.mubr.f32.gmra.mrb[0].mxu0 %v2635
      %v2934 = vpop.f32.mrb[0].mxu0
      %v2935 = vadd.f32 0.0, %v2934
      %v2936 = vpop.f32.mrb[0].mxu0
      %2937 = vmatprep.mubr.f32.mxu0 %v2641
      %2938 = vmatmul.mubr.f32.gmra.mrb[0].mxu0 %v2639
      %v2939 = vpop.f32.mrb[0].mxu0
      %v2940 = vadd.f32 0.0, %v2939
      %v2941 = vpop.f32.mrb[0].mxu0
      %2942 = vmatprep.mubr.f32.mxu0 %v2645
      %2943 = vmatmul.mubr.f32.gmra.mrb[0].mxu0 %v2643
      %v2944 = vpop.f32.mrb[0].mxu0
      %v2945 = vadd.f32 0.0, %v2944
      %v2946 = vpop.f32.mrb[0].mxu0
      %2947 = vmatprep.mubr.f32.mxu0 %v2649
      %2948 = vmatmul.mubr.f32.gmra.mrb[0].mxu0 %v2647
      %v2949 = vpop.f32.mrb[0].mxu0
      %v2950 = vadd.f32 0.0, %v2949
      %v2951 = vpop.f32.mrb[0].mxu0
      %2952 = vmatprep.mubr.f32.mxu0 %v2653
      %2953 = vmatmul.mubr.f32.gmra.mrb[0].mxu0 %v2651
      %v2954 = vpop.f32.mrb[0].mxu0
      %v2955 = vadd.f32 0.0, %v2954
      %v2956 = vpop.f32.mrb[0].mxu0
      %2957 = vmatprep.mubr.f32.mxu0 %v2657
      %2958 = vmatmul.mubr.f32.gmra.mrb[0].mxu0 %v2655
      %v2959 = vpop.f32.mrb[0].mxu0
      %v2960 = vadd.f32 0.0, %v2959
      %v2961 = vpop.f32.mrb[0].mxu0
      %2962 = vmatprep.mubr.f32.mxu0 %v2661
      %2963 = vmatmul.mubr.f32.gmra.mrb[0].mxu0 %v2659
      %v2964 = vpop.f32.mrb[0].mxu0
      %v2965 = vadd.f32 0.0, %v2964
      %v2966 = vpop.f32.mrb[0].mxu0
      %2967 = vmatprep.mubr.f32.mxu0 %v2665
      %2968 = vmatmul.mubr.f32.gmra.mrb[0].mxu0 %v2663
      %v2969 = vpop.f32.mrb[0].mxu0
      %v2970 = vadd.f32 0.0, %v2969
      %v2971 = vpop.f32.mrb[0].mxu0
      %2972 = vmatprep.mubr.f32.mxu0 %v2669
      %2973 = vmatmul.mubr.f32.gmra.mrb[0].mxu0 %v2667
      %v2974 = vpop.f32.mrb[0].mxu0
      %v2975 = vadd.f32 0.0, %v2974
      %v2976 = vpop.f32.mrb[0].mxu0
      %2977 = vmatprep.mubr.f32.mxu0 %v2673
      %2978 = vmatmul.mubr.f32.gmra.mrb[0].mxu0 %v2671
      %v2979 = vpop.f32.mrb[0].mxu0
      %v2980 = vadd.f32 0.0, %v2979
      %v2981 = vpop.f32.mrb[0].mxu0
      %2982 = vmatprep.mubr.f32.mxu0 %v2677
      %2983 = vmatmul.mubr.f32.gmra.mrb[0].mxu0 %v2675
      %v2984 = vpop.f32.mrb[0].mxu0
      %v2985 = vadd.f32 0.0, %v2984
      %v2986 = vpop.f32.mrb[0].mxu0
      %2987 = vmatprep.mubr.f32.mxu0 %v2681
      %2988 = vmatmul.mubr.f32.gmra.mrb[0].mxu0 %v2679
      %v2989 = vpop.f32.mrb[0].mxu0
      %v2990 = vadd.f32 0.0, %v2989
      %v2991 = vpop.f32.mrb[0].mxu0
      %2992 = vmatprep.mubr.f32.mxu0 %v2685
      %2993 = vmatmul.mubr.f32.gmra.mrb[0].mxu0 %v2683
      %v2994 = vpop.f32.mrb[0].mxu0
      %v2995 = vadd.f32 0.0, %v2994
      %v2996 = vpop.f32.mrb[0].mxu0
      %2997 = vmatprep.mubr.f32.mxu0 %v2689
      %2998 = vmatmul.mubr.f32.gmra.mrb[0].mxu0 %v2687
      %v2999 = vpop.f32.mrb[0].mxu0
      %v3000 = vadd.f32 0.0, %v2999
      %v3001 = vpop.f32.mrb[0].mxu0
      %3002 = vmatprep.mubr.f32.mxu0 %v2693
      %3003 = vmatmul.mubr.f32.gmra.mrb[0].mxu0 %v2691
      %v3004 = vpop.f32.mrb[0].mxu0
      %v3005 = vadd.f32 0.0, %v3004
      %v3006 = vpop.f32.mrb[0].mxu0
      %3007 = vmatprep.mubr.f32.mxu0 %v2697
      %3008 = vmatmul.mubr.f32.gmra.mrb[0].mxu0 %v2695
      %v3009 = vpop.f32.mrb[0].mxu0
      %v3010 = vadd.f32 0.0, %v3009
      %v3011 = vpop.f32.mrb[0].mxu0
      %3012 = vmatprep.mubr.f32.mxu0 %v2701
      %3013 = vmatmul.mubr.f32.gmra.mrb[0].mxu0 %v2699
      %v3014 = vpop.f32.mrb[0].mxu0
      %v3015 = vadd.f32 0.0, %v3014
      %v3016 = vpop.f32.mrb[0].mxu0
      %3017 = vmatprep.mubr.f32.mxu0 %v2705
      %3018 = vmatmul.mubr.f32.gmra.mrb[0].mxu0 %v2703
      %v3019 = vpop.f32.mrb[0].mxu0
      %v3020 = vadd.f32 0.0, %v3019
      %v3021 = vpop.f32.mrb[0].mxu0
      %3022 = vmatprep.mubr.f32.mxu0 %v2709
      %3023 = vmatmul.mubr.f32.gmra.mrb[0].mxu0 %v2707
      %v3024 = vpop.f32.mrb[0].mxu0
      %v3025 = vadd.f32 0.0, %v3024
      %v3026 = vpop.f32.mrb[0].mxu0
      %3027 = vmatprep.mubr.f32.mxu0 %v2713
      %3028 = vmatmul.mubr.f32.gmra.mrb[0].mxu0 %v2711
      %v3029 = vpop.f32.mrb[0].mxu0
      %v3030 = vadd.f32 0.0, %v3029
      %v3031 = vpop.f32.mrb[0].mxu0
      %3032 = vmatprep.mubr.f32.mxu0 %v2717
      %3033 = vmatmul.mubr.f32.gmra.mrb[0].mxu0 %v2715
      %v3034 = vpop.f32.mrb[0].mxu0
      %v3035 = vadd.f32 0.0, %v3034
      %v3036 = vpop.f32.mrb[0].mxu0
      %3037 = vmatprep.mubr.f32.mxu0 %v2721
      %3038 = vmatmul.mubr.f32.gmra.mrb[0].mxu0 %v2719
      %v3039 = vpop.f32.mrb[0].mxu0
      %v3040 = vadd.f32 0.0, %v3039
      %v3041 = vpop.f32.mrb[0].mxu0
      %3042 = vdwg.mxu0
      %v3043 = vrcp.pop %v2724
      %v3044 = vrcp.pop %v2727
      %v3045 = vrcp.pop %v2730
      %v3046 = vrcp.pop %v2733
      %v3047 = vrcp.pop %v2736
      %v3048 = vrcp.pop %v2739
      %v3049 = vrcp.pop %v2742
      %v3050 = vrcp.pop %v2745
      %v3051 = vrcp.pop %v2748
      %v3052 = vrcp.pop %v2751
      %v3053 = vrcp.pop %v2754
      %v3054 = vrcp.pop %v2757
      %v3055 = vrcp.pop %v2760
      %v3056 = vrcp.pop %v2763
      %v3057 = vrcp.pop %v2766
      %v3058 = vrcp.pop %v2769
      %v3059 = vrcp.pop %v2772
      %v3060 = vrcp.pop %v2775
      %v3061 = vrcp.pop %v2778
      %v3062 = vrcp.pop %v2781
      %v3063 = vrcp.pop %v2784
      %v3064 = vrcp.pop %v2787
      %v3065 = vrcp.pop %v2790
      %v3066 = vrcp.pop %v2793
      %v3067 = vrcp.pop %v2796
      %v3068 = vrcp.pop %v2799
      %v3069 = vrcp.pop %v2802
      %v3070 = vrcp.pop %v2805
      %v3071 = vrcp.pop %v2808
      %v3072 = vrcp.pop %v2811
      %v3073 = vrcp.pop %v2814
      %v3074 = vrcp.pop %v2817
      %v3075 = vmul.f32 %v2724, %v3043
      %v3076 = vmul.f32 %v2727, %v3044
      %v3077 = vmul.f32 %v2730, %v3045
      %v3078 = vmul.f32 %v2733, %v3046
      %v3079 = vmul.f32 %v2736, %v3047
      %v3080 = vmul.f32 %v2739, %v3048
      %v3081 = vmul.f32 %v2742, %v3049
      %v3082 = vmul.f32 %v2745, %v3050
      %v3083 = vmul.f32 %v2748, %v3051
      %v3084 = vmul.f32 %v2751, %v3052
      %v3085 = vmul.f32 %v2754, %v3053
      %v3086 = vmul.f32 %v2757, %v3054
      %v3087 = vmul.f32 %v2760, %v3055
      %v3088 = vmul.f32 %v2763, %v3056
      %v3089 = vmul.f32 %v2766, %v3057
      %v3090 = vmul.f32 %v2769, %v3058
      %v3091 = vmul.f32 %v2772, %v3059
      %v3092 = vmul.f32 %v2775, %v3060
      %v3093 = vmul.f32 %v2778, %v3061
      %v3094 = vmul.f32 %v2781, %v3062
      %v3095 = vmul.f32 %v2784, %v3063
      %v3096 = vmul.f32 %v2787, %v3064
      %v3097 = vmul.f32 %v2790, %v3065
      %v3098 = vmul.f32 %v2793, %v3066
      %v3099 = vmul.f32 %v2796, %v3067
      %v3100 = vmul.f32 %v2799, %v3068
      %v3101 = vmul.f32 %v2802, %v3069
      %v3102 = vmul.f32 %v2805, %v3070
      %v3103 = vmul.f32 %v2808, %v3071
      %v3104 = vmul.f32 %v2811, %v3072
      %v3105 = vmul.f32 %v2814, %v3073
      %v3106 = vmul.f32 %v2817, %v3074
      %v3107 = vsub.f32 2.0, %v3075
      %v3108 = vsub.f32 2.0, %v3076
      %v3109 = vsub.f32 2.0, %v3077
      %v3110 = vsub.f32 2.0, %v3078
      %v3111 = vsub.f32 2.0, %v3079
      %v3112 = vsub.f32 2.0, %v3080
      %v3113 = vsub.f32 2.0, %v3081
      %v3114 = vsub.f32 2.0, %v3082
      %v3115 = vsub.f32 2.0, %v3083
      %v3116 = vsub.f32 2.0, %v3084
      %v3117 = vsub.f32 2.0, %v3085
      %v3118 = vsub.f32 2.0, %v3086
      %v3119 = vsub.f32 2.0, %v3087
      %v3120 = vsub.f32 2.0, %v3088
      %v3121 = vsub.f32 2.0, %v3089
      %v3122 = vsub.f32 2.0, %v3090
      %v3123 = vsub.f32 2.0, %v3091
      %v3124 = vsub.f32 2.0, %v3092
      %v3125 = vsub.f32 2.0, %v3093
      %v3126 = vsub.f32 2.0, %v3094
      %v3127 = vsub.f32 2.0, %v3095
      %v3128 = vsub.f32 2.0, %v3096
      %v3129 = vsub.f32 2.0, %v3097
      %v3130 = vsub.f32 2.0, %v3098
      %v3131 = vsub.f32 2.0, %v3099
      %v3132 = vsub.f32 2.0, %v3100
      %v3133 = vsub.f32 2.0, %v3101
      %v3134 = vsub.f32 2.0, %v3102
      %v3135 = vsub.f32 2.0, %v3103
      %v3136 = vsub.f32 2.0, %v3104
      %v3137 = vsub.f32 2.0, %v3105
      %v3138 = vsub.f32 2.0, %v3106
      %v3139 = vmul.f32 %v3043, %v3107
      %v3140 = vmul.f32 %v3044, %v3108
      %v3141 = vmul.f32 %v3045, %v3109
      %v3142 = vmul.f32 %v3046, %v3110
      %v3143 = vmul.f32 %v3047, %v3111
      %v3144 = vmul.f32 %v3048, %v3112
      %v3145 = vmul.f32 %v3049, %v3113
      %v3146 = vmul.f32 %v3050, %v3114
      %v3147 = vmul.f32 %v3051, %v3115
      %v3148 = vmul.f32 %v3052, %v3116
      %v3149 = vmul.f32 %v3053, %v3117
      %v3150 = vmul.f32 %v3054, %v3118
      %v3151 = vmul.f32 %v3055, %v3119
      %v3152 = vmul.f32 %v3056, %v3120
      %v3153 = vmul.f32 %v3057, %v3121
      %v3154 = vmul.f32 %v3058, %v3122
      %v3155 = vmul.f32 %v3059, %v3123
      %v3156 = vmul.f32 %v3060, %v3124
      %v3157 = vmul.f32 %v3061, %v3125
      %v3158 = vmul.f32 %v3062, %v3126
      %v3159 = vmul.f32 %v3063, %v3127
      %v3160 = vmul.f32 %v3064, %v3128
      %v3161 = vmul.f32 %v3065, %v3129
      %v3162 = vmul.f32 %v3066, %v3130
      %v3163 = vmul.f32 %v3067, %v3131
      %v3164 = vmul.f32 %v3068, %v3132
      %v3165 = vmul.f32 %v3069, %v3133
      %v3166 = vmul.f32 %v3070, %v3134
      %v3167 = vmul.f32 %v3071, %v3135
      %v3168 = vmul.f32 %v3072, %v3136
      %v3169 = vmul.f32 %v3073, %v3137
      %v3170 = vmul.f32 %v3074, %v3138
      %v3171 = vmul.f32 %v2885, %v3139
      %v3172 = vmul.f32 %v2890, %v3140
      %v3173 = vmul.f32 %v2895, %v3141
      %v3174 = vmul.f32 %v2900, %v3142
      %v3175 = vmul.f32 %v2905, %v3143
      %v3176 = vmul.f32 %v2910, %v3144
      %v3177 = vmul.f32 %v2915, %v3145
      %v3178 = vmul.f32 %v2920, %v3146
      %v3179 = vmul.f32 %v2925, %v3147
      %v3180 = vmul.f32 %v2930, %v3148
      %v3181 = vmul.f32 %v2935, %v3149
      %v3182 = vmul.f32 %v2940, %v3150
      %v3183 = vmul.f32 %v2945, %v3151
      %v3184 = vmul.f32 %v2950, %v3152
      %v3185 = vmul.f32 %v2955, %v3153
      %v3186 = vmul.f32 %v2960, %v3154
      %v3187 = vmul.f32 %v2965, %v3155
      %v3188 = vmul.f32 %v2970, %v3156
      %v3189 = vmul.f32 %v2975, %v3157
      %v3190 = vmul.f32 %v2980, %v3158
      %v3191 = vmul.f32 %v2985, %v3159
      %v3192 = vmul.f32 %v2990, %v3160
      %v3193 = vmul.f32 %v2995, %v3161
      %v3194 = vmul.f32 %v3000, %v3162
      %v3195 = vmul.f32 %v3005, %v3163
      %v3196 = vmul.f32 %v3010, %v3164
      %v3197 = vmul.f32 %v3015, %v3165
      %v3198 = vmul.f32 %v3020, %v3166
      %v3199 = vmul.f32 %v3025, %v3167
      %v3200 = vmul.f32 %v3030, %v3168
      %v3201 = vmul.f32 %v3035, %v3169
      %v3202 = vmul.f32 %v3040, %v3170
      %3203 = vst.msk [vmem:[%s197] sm:$0xff] %vm1820, %v3171
      %3204 = vst.msk [vmem:[%s197 + $0x8] sm:$0xff] %vm1820, %v3172
      %3205 = vst.msk [vmem:[%s197 + $0x10] sm:$0xff] %vm1820, %v3173
      %3206 = vst.msk [vmem:[%s197 + $0x18] sm:$0xff] %vm1820, %v3174
      %3207 = vst.msk [vmem:[%s197 + $0x20] sm:$0xff] %vm1820, %v3175
      %3208 = vst.msk [vmem:[%s197 + $0x28] sm:$0xff] %vm1820, %v3176
      %3209 = vst.msk [vmem:[%s197 + $0x30] sm:$0xff] %vm1820, %v3177
      %3210 = vst.msk [vmem:[%s197 + $0x38] sm:$0xff] %vm1820, %v3178
      %3211 = vst.msk [vmem:[%s197 + $0x40] sm:$0xff] %vm1820, %v3179
      %3212 = vst.msk [vmem:[%s197 + $0x48] sm:$0xff] %vm1820, %v3180
      %3213 = vst.msk [vmem:[%s197 + $0x50] sm:$0xff] %vm1820, %v3181
      %3214 = vst.msk [vmem:[%s197 + $0x58] sm:$0xff] %vm1820, %v3182
      %3215 = vst.msk [vmem:[%s197 + $0x60] sm:$0xff] %vm1820, %v3183
      %3216 = vst.msk [vmem:[%s197 + $0x68] sm:$0xff] %vm1820, %v3184
      %3217 = vst.msk [vmem:[%s197 + $0x70] sm:$0xff] %vm1820, %v3185
      %3218 = vst.msk [vmem:[%s197 + $0x78] sm:$0xff] %vm1820, %v3186
      %3219 = vst.msk [vmem:[%s197 + $0x80] sm:$0xff] %vm1820, %v3187
      %3220 = vst.msk [vmem:[%s197 + $0x88] sm:$0xff] %vm1820, %v3188
      %3221 = vst.msk [vmem:[%s197 + $0x90] sm:$0xff] %vm1820, %v3189
      %3222 = vst.msk [vmem:[%s197 + $0x98] sm:$0xff] %vm1820, %v3190
      %3223 = vst.msk [vmem:[%s197 + $0xa0] sm:$0xff] %vm1820, %v3191
      %3224 = vst.msk [vmem:[%s197 + $0xa8] sm:$0xff] %vm1820, %v3192
      %3225 = vst.msk [vmem:[%s197 + $0xb0] sm:$0xff] %vm1820, %v3193
      %3226 = vst.msk [vmem:[%s197 + $0xb8] sm:$0xff] %vm1820, %v3194
      %3227 = vst.msk [vmem:[%s197 + $0xc0] sm:$0xff] %vm1820, %v3195
      %3228 = vst.msk [vmem:[%s197 + $0xc8] sm:$0xff] %vm1820, %v3196
      %3229 = vst.msk [vmem:[%s197 + $0xd0] sm:$0xff] %vm1820, %v3197
      %3230 = vst.msk [vmem:[%s197 + $0xd8] sm:$0xff] %vm1820, %v3198
      %3231 = vst.msk [vmem:[%s197 + $0xe0] sm:$0xff] %vm1820, %v3199
      %3232 = vst.msk [vmem:[%s197 + $0xe8] sm:$0xff] %vm1820, %v3200
      %3233 = vst.msk [vmem:[%s197 + $0xf0] sm:$0xff] %vm1820, %v3201
      %3234 = vst.msk [vmem:[%s197 + $0xf8] sm:$0xff] %vm1820, %v3202
      %p3235 = scmp.lt.s32.totalorder %s15, 1
      %s3236 = scalar_select %p3235, %s15, 1
      %s3237 = smul.addr %s3236, 32
      %s3238 = smul.addr %s3237, 8
      %s3239 = scalar_lea.vmem %s4, %s3238
      // Predicated region
      $region37: #{tpu_custom_call.1} parent=35 // pred_check
        %p3240 = pneg %p122
      $region38: #{tpu_custom_call.1} parent=35 // pred_check_branch
        %3242 = sbr.rel (%p3240) target = $region40
      $region39: #{tpu_custom_call.1} parent=35 // pred_region
        _
      $region40: #{tpu_custom_call.1} parent=35 // pred_fallthru
        _
    $region36: #{tpu_custom_call.1} parent=5 // pred_fallthru
      _
    %p3243 = scmp.le.s32.totalorder 2, %s10
    // Predicated region
    $region41: #{tpu_custom_call.1} parent=5 // pred_check
      %p3244 = pneg %p3243
    $region42: #{tpu_custom_call.1} parent=5 // pred_check_branch
      %3246 = sbr.rel (%p3244) target = $region44
    $region43: #{tpu_custom_call.1} parent=5 // pred_region
      %s3247 = ssub.s32 %s10, 2
      // Predicated region
      $region45: #{tpu_custom_call.1} parent=43 // pred_check
        %p3248 = pneg %p128
      $region46: #{tpu_custom_call.1} parent=43 // pred_check_branch
        %3250 = sbr.rel (%p3248) target = $region48
      $region47: #{tpu_custom_call.1} parent=43 // pred_region
        %p3251 = scmp.lt.s32.totalorder %s16, 1
        %s3252 = scalar_select %p3251, %s16, 1
        %s3253 = smul.addr %s3252, 32
        %s3254 = smul.addr %s3253, 8
        %s3255 = scalar_lea.vmem %s4, %s3254
      $region48: #{tpu_custom_call.1} parent=43 // pred_fallthru
        _
    $region44: #{tpu_custom_call.1} parent=5 // pred_fallthru
      _
  $region6: #{tpu_custom_call.1} parent=0 // loop_footer
    %s14 = sadd.s32 1, %s10
  $region7: #{tpu_custom_call.1} parent=0 // loop_footer_branch
    %9 = sbr.rel target = $region3
  $region8: #{tpu_custom_call.1} parent=0 // loop_exit
    _

</llo_original>
